<compile_context>
chip_gen: v5e
topology: v5e:2x2
jax: 0.10.0
libtpu: 0.0.40
codegen_flags: <defaults>
</compile_context>

<pallas_src>
import functools

import numpy as np
import jax
import jax.numpy as jnp
from jax.experimental import pallas as pl
from jax.experimental.pallas import tpu as pltpu


_VMEM_BIG = 64 * 1024 * 1024   # kNN / QKV kernels (tiny real footprint)
_VMEM_ATTN = 32 * 1024 * 1024  # attention kernel: conservative (v7x = 64 MiB part)


def _round_up(n, m):
    return ((n + m - 1) // m) * m


def _choose_tiles(n, k_knn, da_max):
    """Pick (n_pad, t_knn, t_qkv, t_attn); every tile divides n_pad exactly."""
    n8 = _round_up(max(n, 8), 8)
    if n8 <= 128:
        # tiny problem: one aligned tile per batch for every kernel
        return n8, n8, n8, n8
    n_pad = _round_up(n, 128)

    def pick(cands):
        for c in cands:
            if c <= n_pad and n_pad % c == 0:
                return c
        return 128

    # memory-bound projection kernel: big tiles amortize per-step overhead
    t_qkv = pick((1024, 768, 640, 512, 384, 256, 128))

    # kNN: whole padded candidate row resident; bound the (t_knn, n_pad) f32
    # selection intermediates (v7x: 64 MiB VMEM).
    t_knn = 128
    while t_knn > 16 and t_knn * n_pad * 4 * 6 > (24 << 20):
        t_knn //= 2

    # attention: bound the (t_attn * K, Da) f32 MLP intermediates.
    t_attn = 128
    while t_attn > 16 and t_attn * k_knn * da_max * 4 * 6 > (24 << 20):
        t_attn //= 2

    return n_pad, t_knn, t_qkv, t_attn


# ---------------------------------------------------------------------------
# Kernel 1: fused pairwise-distance + streaming top-K neighbour selection.
# Emits only (B, N_pad, K) int32 indices -- no O(N^2) HBM writeback.
# ---------------------------------------------------------------------------
def _knn_kernel(pr_ref, pc_ref, idx_ref, *, k, n_valid, n_pad):
    a = pr_ref[0]                                            # (TM, 3)  f32
    b = pc_ref[0]                                            # (Np, 3)  f32 (resident per batch)
    tm = a.shape[0]

    a2 = jnp.sum(a * a, axis=-1, keepdims=True)              # (TM, 1)
    # row vector of ||b_j||^2 via a tiny matmul (avoids a (Np,1)->(1,Np) relayout)
    b2_row = jax.lax.dot_general(
        jnp.ones((1, 3), jnp.float32), b * b,
        (((1,), (1,)), ((), ())), preferred_element_type=jnp.float32)  # (1, Np)
    ab = jax.lax.dot_general(a, b, (((1,), (1,)), ((), ())),
                             preferred_element_type=jnp.float32)        # (TM, Np)
    d = a2 + b2_row - 2.0 * ab                                           # (TM, Np)

    col = jax.lax.broadcasted_iota(jnp.int32, (tm, n_pad), 1)
    if n_valid < n_pad:                                      # mask padded candidates
        d = jnp.where(col < n_valid, d, jnp.inf)

    # K-pass streaming selection (smallest distance first, ties -> lowest index)
    lane = jax.lax.broadcasted_iota(jnp.int32, (tm, k), 1)
    out = jnp.zeros((tm, k), jnp.int32)
    for kk in range(k):
        m = jnp.min(d, axis=-1, keepdims=True)                           # (TM, 1)
        p = jnp.min(jnp.where(d == m, col, n_pad), axis=-1, keepdims=True)
        out = jnp.where(lane == kk, p, out)
        d = jnp.where(col == p, jnp.inf, d)
    idx_ref[0] = out


def knn_pallas(pos_nc, k, n_valid, *, tile_rows):
    B, Np, C = pos_nc.shape
    grid = (B, Np // tile_rows)
    kernel = functools.partial(_knn_kernel, k=k, n_valid=n_valid, n_pad=Np)
    return pl.pallas_call(
        kernel,
        out_shape=jax.ShapeDtypeStruct((B, Np, k), jnp.int32),
        grid=grid,
        in_specs=[pl.BlockSpec((1, tile_rows, C), lambda b, i: (b, i, 0)),
                  pl.BlockSpec((1, Np, C), lambda b, i: (b, 0, 0))],
        out_specs=pl.BlockSpec((1, tile_rows, k), lambda b, i: (b, i, 0)),
        compiler_params=pltpu.CompilerParams(
            dimension_semantics=("parallel", "parallel"),
            vmem_limit_bytes=_VMEM_BIG),
    )(pos_nc, pos_nc)


# ---------------------------------------------------------------------------
# Kernel 2: fused linear_start + Q/K/V projection (single (D, 3D) QKV weight),
# bf16 output to halve the (B, N, 3D) HBM intermediate.
# ---------------------------------------------------------------------------
def _qkv_kernel(x_ref, ws_ref, wqkv_ref, bvec_ref, qkv_ref, *, offs):
    f32, bf16 = jnp.float32, jnp.bfloat16
    o, s = offs["b_start"]
    b_start = bvec_ref[:, o:o + s]                           # (1, D)   f32
    o, s = offs["b_qkv"]
    b_qkv = bvec_ref[:, o:o + s]                             # (1, 3D)  f32

    x = x_ref[0]                                             # (TT, Cin) f32
    xs = jnp.dot(x.astype(bf16), ws_ref[...],
                 preferred_element_type=f32) + b_start       # (TT, D)
    qkv = jnp.dot(xs.astype(bf16), wqkv_ref[...],
                  preferred_element_type=f32) + b_qkv        # (TT, 3D)
    qkv_ref[0] = qkv.astype(qkv_ref.dtype)                   # bf16 store


def qkv_project_pallas(x_nc, w_start, w_qkv, bvec, offs, *, tile):
    B, Np, Cin = x_nc.shape
    D3 = w_qkv.shape[1]
    grid = (B, Np // tile)
    kernel = functools.partial(_qkv_kernel, offs=offs)
    return pl.pallas_call(
        kernel,
        out_shape=jax.ShapeDtypeStruct((B, Np, D3), jnp.bfloat16),
        grid=grid,
        in_specs=[pl.BlockSpec((1, tile, Cin), lambda b, t: (b, t, 0)),
                  pl.BlockSpec(w_start.shape, lambda b, t: (0, 0)),
                  pl.BlockSpec(w_qkv.shape, lambda b, t: (0, 0)),
                  pl.BlockSpec(bvec.shape, lambda b, t: (0, 0))],
        out_specs=pl.BlockSpec((1, tile, D3), lambda b, t: (b, t, 0)),
        compiler_params=pltpu.CompilerParams(
            dimension_semantics=("parallel", "parallel"),
            vmem_limit_bytes=_VMEM_BIG),
    )(x_nc, w_start, w_qkv, bvec)


# ---------------------------------------------------------------------------
# Kernel 3: per-(batch, N-tile) attention block
#   pos_mlp + attn_mlp (BN scales folded into weights) + softmax over K
#   + aggregation + linear_end + residual
# ---------------------------------------------------------------------------
def _attn_kernel(x_ref, q_ref, v_ref, pos_ref, kg_ref, pg_ref,
                 wp1_ref, wp2_ref, wa1_ref, wa2_ref, we_ref, pvec_ref,
                 out_ref, *, offs):
    f32, bf16 = jnp.float32, jnp.bfloat16

    def seg(name):                                           # packed (1, C) vecs
        o, s = offs[name]
        return pvec_ref[:, o:o + s]

    def mxu(a, w_ref):                                       # bf16 MXU, f32 acc
        return jnp.dot(a.astype(bf16), w_ref[...], preferred_element_type=f32)

    x = x_ref[0]                                             # (TT, Cin) f32
    q = q_ref[0].astype(f32)                                 # (TT, D)
    v = v_ref[0].astype(f32)                                 # (TT, D)
    pos = pos_ref[0]                                         # (TT, 3)   f32
    k_g = kg_ref[0].astype(f32)                              # (TT, K, D)
    pos_g = pg_ref[0]                                        # (TT, K, 3) f32
    TT, K, D = k_g.shape
    R = TT * K

    qk_rel = (q[:, None, :] - k_g).reshape(R, D)             # (R, D)
    pos_rel = (pos[:, None, :] - pos_g).reshape(R, 3)        # (R, 3)

    # pos_mlp: Conv2d(3,Ph,1) -> BN (scale folded into weight, bias into shift)
    #          -> ReLU -> Conv2d(Ph,D,1)
    ph = jnp.maximum(mxu(pos_rel, wp1_ref) + seg("t_p1"), 0.0)
    pos_emb = mxu(ph, wp2_ref) + seg("b_p2")                 # (R, D)

    # attn_mlp: Conv2d(D,Da,1) -> BN (folded) -> ReLU -> Conv2d(Da,D,1)
    ah = jnp.maximum(mxu(qk_rel + pos_emb, wa1_ref) + seg("t_a1"), 0.0)
    attn = mxu(ah, wa2_ref) + seg("b_a2")                    # (R, D)

    # softmax over the K-neighbour axis (f32)
    attn3 = attn.reshape(TT, K, D)
    attn3 = attn3 - jnp.max(attn3, axis=1, keepdims=True)
    e = jnp.exp(attn3)
    attn3 = e * pl.reciprocal(jnp.sum(e, axis=1, keepdims=True), approx=True)

    # weighted aggregation of (value + positional embedding)
    val3 = v[:, None, :] + pos_emb.reshape(TT, K, D)
    agg = jnp.sum(attn3 * val3, axis=1)                      # (TT, D)

    # linear_end + residual (f32)
    out_ref[0] = mxu(agg, we_ref) + seg("b_end") + x         # (TT, Cin)


def attention_pallas(x_nc, q, v, pos_nc, k_g, pos_g, w, pvec, offs, *, tile):
    B, Np, Cin = x_nc.shape
    D = q.shape[-1]
    K = k_g.shape[2]
    grid = (B, Np // tile)
    kernel = functools.partial(_attn_kernel, offs=offs)

    def wspec(arr):
        return pl.BlockSpec(arr.shape, lambda b, t: (0, 0))

    return pl.pallas_call(
        kernel,
        out_shape=jax.ShapeDtypeStruct((B, Np, Cin), jnp.float32),
        grid=grid,
        in_specs=[
            pl.BlockSpec((1, tile, Cin), lambda b, t: (b, t, 0)),
            pl.BlockSpec((1, tile, D), lambda b, t: (b, t, 0)),
            pl.BlockSpec((1, tile, D), lambda b, t: (b, t, 0)),
            pl.BlockSpec((1, tile, 3), lambda b, t: (b, t, 0)),
            pl.BlockSpec((1, tile, K, D), lambda b, t: (b, t, 0, 0)),
            pl.BlockSpec((1, tile, K, 3), lambda b, t: (b, t, 0, 0)),
            wspec(w["w_p1"]), wspec(w["w_p2"]), wspec(w["w_a1"]),
            wspec(w["w_a2"]), wspec(w["w_end"]), wspec(pvec),
        ],
        out_specs=pl.BlockSpec((1, tile, Cin), lambda b, t: (b, t, 0)),
        compiler_params=pltpu.CompilerParams(
            dimension_semantics=("parallel", "parallel"),
            vmem_limit_bytes=_VMEM_ATTN),
    )(x_nc, q, v, pos_nc, k_g, pos_g,
      w["w_p1"], w["w_p2"], w["w_a1"], w["w_a2"], w["w_end"], pvec)


# ---------------------------------------------------------------------------
# Parameter packing / preparation (bf16 weights, folded BN, packed biases)
# ---------------------------------------------------------------------------
def _pack_vectors(named_vecs):
    """Pack small per-channel vectors into one (1, P) f32 array with
    128-lane-aligned segment starts.  Returns (packed, {name: (offset, size)})."""
    offs = {}
    parts = []
    cur = 0
    for name, v in named_vecs:
        v = jnp.reshape(v, (-1,)).astype(jnp.float32)
        size = int(v.shape[0])
        segment = max(128, ((size + 127) // 128) * 128)
        parts.append(jnp.pad(v, (0, segment - size)))
        offs[name] = (cur, size)
        cur += segment
    return jnp.concatenate(parts).reshape(1, cur), offs


def _prepare_params(params):
    bf16 = jnp.bfloat16
    # inference-mode BN: fold scale into the preceding conv weight, fold the
    # conv bias into the BN shift (keeps only additive vectors in the kernels)
    w_p1 = params["w_p1"] * params["s_p1"]
    w_a1 = params["w_a1"] * params["s_a1"]
    w = {
        "w_start": params["w_start"].astype(bf16),
        "w_qkv": jnp.concatenate(
            [params["w_q"], params["w_k"], params["w_v"]], axis=1).astype(bf16),
        "w_p1": w_p1.astype(bf16),
        "w_p2": params["w_p2"].astype(bf16),
        "w_a1": w_a1.astype(bf16),
        "w_a2": params["w_a2"].astype(bf16),
        "w_end": params["w_end"].astype(bf16),
    }
    b_qkv = jnp.concatenate([params["b_q"], params["b_k"], params["b_v"]], axis=1)
    bvec_qkv, offs_qkv = _pack_vectors(
        [("b_start", params["b_start"]), ("b_qkv", b_qkv)])

    t_p1 = params["s_p1"] * params["b_p1"] + params["t_p1"]
    t_a1 = params["s_a1"] * params["b_a1"] + params["t_a1"]
    pvec, offs_p = _pack_vectors([
        ("t_p1", t_p1), ("b_p2", params["b_p2"]),
        ("t_a1", t_a1), ("b_a2", params["b_a2"]), ("b_end", params["b_end"]),
    ])
    return w, bvec_qkv, offs_qkv, pvec, offs_p


# ---------------------------------------------------------------------------
# Public forward pass (PyTorch layout: x (B, in_channel, n), pos (B, 3, n))
# ---------------------------------------------------------------------------
def transformer_apply(params, x_bcn, pos_b3n, n_knn):
    B, Cin, N = x_bcn.shape
    D = params["w_q"].shape[0]
    Da = params["w_a1"].shape[1]
    assert n_knn <= N, "n_knn must not exceed the number of points"

    x_nc = jnp.transpose(x_bcn, (0, 2, 1)).astype(jnp.float32)      # (B, N, Cin)
    pos_nc = jnp.transpose(pos_b3n, (0, 2, 1)).astype(jnp.float32)  # (B, N, 3)

    n_pad, t_knn, t_qkv, t_attn = _choose_tiles(N, n_knn, max(Da, 3 * D))
    if n_pad != N:
        pad = n_pad - N
        x_nc = jnp.pad(x_nc, ((0, 0), (0, pad), (0, 0)))
        pos_nc = jnp.pad(pos_nc, ((0, 0), (0, pad), (0, 0)))

    # fused kNN: only (B, N_pad, K) indices hit HBM (padded candidates masked)
    idx_knn = knn_pallas(pos_nc, n_knn, N, tile_rows=t_knn)          # int32

    w, bvec_qkv, offs_qkv, pvec, offs_p = _prepare_params(params)

    # fused linear_start + Q/K/V projection, bf16 intermediate
    qkv = qkv_project_pallas(x_nc, w["w_start"], w["w_qkv"], bvec_qkv,
                             offs_qkv, tile=t_qkv)                   # (B,Np,3D) bf16
    q = qkv[..., :D]
    k = qkv[..., D:2 * D]
    v = qkv[..., 2 * D:]

    # kNN neighbour gather of the bf16 keys (XLA gather; see TODO at top).
    gather = jax.vmap(lambda a, i: a[i])
    k_g = gather(k, idx_knn)                                         # (B,Np,K,D) bf16
    pos_g = gather(pos_nc, idx_knn)                                  # (B,Np,K,3) f32

    y_nc = attention_pallas(x_nc, q, v, pos_nc, k_g, pos_g,
                            w, pvec, offs_p, tile=t_attn)            # (B,Np,Cin)
    y_nc = y_nc[:, :N, :]
    return jnp.transpose(y_nc, (0, 2, 1)), idx_knn[:, :N, :]


# ---------------------------------------------------------------------------
# Deterministic parameter initialization (shapes from Transformer.__init__)
# ---------------------------------------------------------------------------
def init_params(key, in_channel, dim, pos_hidden_dim, attn_hidden_multiplier):
    da = dim * attn_hidden_multiplier
    eps = 1e-5
    keys = list(jax.random.split(key, 32))
    it = iter(keys)

    def w(shape):
        return (jax.random.normal(next(it), shape, jnp.float32)
                / np.sqrt(shape[0]))

    def bias(c):
        return 0.1 * jax.random.normal(next(it), (1, c), jnp.float32)

    def bn(c):
        gamma = 1.0 + 0.1 * jax.random.normal(next(it), (1, c), jnp.float32)
        beta = 0.1 * jax.random.normal(next(it), (1, c), jnp.float32)
        mean = 0.05 * jax.random.normal(next(it), (1, c), jnp.float32)
        var = 1.0 + 0.1 * jnp.abs(jax.random.normal(next(it), (1, c), jnp.float32))
        scale = gamma / jnp.sqrt(var + eps)
        shift = beta - mean * scale
        return scale, shift

    p = {}
    p["w_start"], p["b_start"] = w((in_channel, dim)), bias(dim)
    p["w_q"], p["b_q"] = w((dim, dim)), bias(dim)
    p["w_k"], p["b_k"] = w((dim, dim)), bias(dim)
    p["w_v"], p["b_v"] = w((dim, dim)), bias(dim)
    p["w_p1"], p["b_p1"] = w((3, pos_hidden_dim)), bias(pos_hidden_dim)
    p["s_p1"], p["t_p1"] = bn(pos_hidden_dim)
    p["w_p2"], p["b_p2"] = w((pos_hidden_dim, dim)), bias(dim)
    p["w_a1"], p["b_a1"] = w((dim, da)), bias(da)
    p["s_a1"], p["t_a1"] = bn(da)
    p["w_a2"], p["b_a2"] = w((da, dim)), bias(dim)
    p["w_end"], p["b_end"] = w((dim, in_channel)), bias(in_channel)
    return p


# ---------------------------------------------------------------------------
# Pure-JAX reference (same math / kNN indices, bf16 matmuls and bf16-stored qkv
# to mirror the kernels' precision; BN left in its unfused inference form)
# ---------------------------------------------------------------------------
def reference_forward(params, x_bcn, pos_b3n, idx_knn):
    f32, bf16 = jnp.float32, jnp.bfloat16
    x_nc = jnp.transpose(x_bcn, (0, 2, 1)).astype(f32)
    pos_nc = jnp.transpose(pos_b3n, (0, 2, 1)).astype(f32)

    def lin(a, wt, b):  # bf16 operands, f32 accumulation (mirrors the kernels)
        return jnp.einsum("...c,cd->...d", a.astype(bf16), wt.astype(bf16),
                          preferred_element_type=f32) + b

    xs = lin(x_nc, params["w_start"], params["b_start"])
    q = lin(xs, params["w_q"], params["b_q"]).astype(bf16).astype(f32)
    k = lin(xs, params["w_k"], params["b_k"]).astype(bf16).astype(f32)
    v = lin(xs, params["w_v"], params["b_v"]).astype(bf16).astype(f32)

    gather = jax.vmap(lambda arr, ids: arr[ids])          # (N,C),(N,K)->(N,K,C)
    k_g = gather(k, idx_knn)                              # (B, N, K, D)
    pos_g = gather(pos_nc, idx_knn)                       # (B, N, K, 3)

    qk_rel = q[:, :, None, :] - k_g
    pos_rel = pos_nc[:, :, None, :] - pos_g

    ph = lin(pos_rel, params["w_p1"], params["b_p1"])
    ph = jnp.maximum(ph * params["s_p1"] + params["t_p1"], 0.0)
    pos_emb = lin(ph, params["w_p2"], params["b_p2"])

    ah = lin(qk_rel + pos_emb, params["w_a1"], params["b_a1"])
    ah = jnp.maximum(ah * params["s_a1"] + params["t_a1"], 0.0)
    attn = lin(ah, params["w_a2"], params["b_a2"])
    attn = jax.nn.softmax(attn, axis=2)                   # softmax over K

    val = v[:, :, None, :] + pos_emb
    agg = jnp.sum(attn * val, axis=2)                     # (B, N, D)
    y = lin(agg, params["w_end"], params["b_end"]) + x_nc
    return jnp.transpose(y, (0, 2, 1))


if __name__ == "__main__":
    B, Cin, N = 2, 16, 16
    dim, n_knn, pos_hidden, attn_mult = 32, 8, 16, 4

    key = jax.random.PRNGKey(0)
    kx, kp, kw = jax.random.split(key, 3)
    x = jax.random.normal(kx, (B, Cin, N), jnp.float32)
    pos = jax.random.normal(kp, (B, 3, N), jnp.float32)
    params = init_params(kw, Cin, dim, pos_hidden, attn_mult)

    apply_fn = jax.jit(transformer_apply, static_argnums=(3,))
    y, idx_knn = apply_fn(params, x, pos, n_knn)
    y = jax.block_until_ready(y)
    idx_knn = jax.block_until_ready(idx_knn)

    # Check the fused-kNN neighbour sets against an XLA top_k reference.
    pos_nc = jnp.transpose(pos, (0, 2, 1))
    sq = jnp.sum(pos_nc * pos_nc, axis=-1)
    d_ref = (sq[:, :, None] + sq[:, None, :]
             - 2.0 * jnp.einsum("bnc,bmc->bnm", pos_nc, pos_nc))
    _, idx_ref = jax.lax.top_k(-d_ref, n_knn)
    np.testing.assert_array_equal(np.sort(np.asarray(idx_knn), axis=-1),
                                  np.sort(np.asarray(idx_ref), axis=-1))

    # Check the full transformer block output against the pure-JAX reference.
    y_ref = reference_forward(params, x, pos, idx_knn)
    np.testing.assert_allclose(np.asarray(y), np.asarray(y_ref),
                               rtol=3e-2, atol=3e-2)
    print("KERNEL_OK")
</pallas_src>

<mosaic_0001>
module attributes {stable_mosaic.version = 11 : i64} {
  func.func @_qkv_kernel(%arg0: i32, %arg1: i32, %arg2: memref<1x16x16xf32, #tpu.memory_space<vmem>>, %arg3: memref<16x32xbf16, #tpu.memory_space<vmem>>, %arg4: memref<32x96xbf16, #tpu.memory_space<vmem>>, %arg5: memref<1x256xf32, #tpu.memory_space<vmem>>, %arg6: memref<1x16x96xbf16, #tpu.memory_space<vmem>>) attributes {dimension_semantics = [#tpu.dimension_semantics<parallel>, #tpu.dimension_semantics<parallel>], iteration_bounds = array<i64: 2, 1>, scalar_prefetch = 0 : i64, scratch_operands = 0 : i64, tpu.core_type = #tpu.core_type<tc>, window_params = [{transform_indices = @transform_0, window_bounds = array<i64: 1, 16, 16>}, {pipeline_mode = #tpu.pipeline_mode<synchronous>, transform_indices = @transform_1, window_bounds = array<i64: 16, 32>}, {pipeline_mode = #tpu.pipeline_mode<synchronous>, transform_indices = @transform_2, window_bounds = array<i64: 32, 96>}, {pipeline_mode = #tpu.pipeline_mode<synchronous>, transform_indices = @transform_3, window_bounds = array<i64: 1, 256>}, {transform_indices = @transform_4, window_bounds = array<i64: 1, 16, 96>}]} {
    %c0 = arith.constant 0 : index
    %c0_0 = arith.constant 0 : index
    %0 = vector.load %arg5[%c0, %c0_0] : memref<1x256xf32, #tpu.memory_space<vmem>>, vector<1x32xf32>
    %c0_1 = arith.constant 0 : index
    %c128 = arith.constant 128 : index
    %1 = vector.load %arg5[%c0_1, %c128] : memref<1x256xf32, #tpu.memory_space<vmem>>, vector<1x96xf32>
    %c0_2 = arith.constant 0 : index
    %c0_3 = arith.constant 0 : index
    %c0_4 = arith.constant 0 : index
    %2 = vector.load %arg2[%c0_2, %c0_3, %c0_4] : memref<1x16x16xf32, #tpu.memory_space<vmem>>, vector<1x16x16xf32>
    %3 = vector.shape_cast %2 : vector<1x16x16xf32> to vector<16x16xf32>
    %4 = arith.truncf %3 : vector<16x16xf32> to vector<16x16xbf16>
    %c0_5 = arith.constant 0 : index
    %c0_6 = arith.constant 0 : index
    %5 = vector.load %arg3[%c0_5, %c0_6] : memref<16x32xbf16, #tpu.memory_space<vmem>>, vector<16x32xbf16>
    %cst = arith.constant dense<0.000000e+00> : vector<16x32xf32>
    %6 = tpu.matmul %4, %5, %cst {dimension_numbers = #tpu.dot_dimension_numbers<[1], [0], [0], [1], [0, 0, 1, 1], [], []>} : vector<16x16xbf16>, vector<16x32xbf16>, vector<16x32xf32> -> vector<16x32xf32>
    %7 = vector.broadcast %0 : vector<1x32xf32> to vector<16x32xf32>
    %8 = arith.addf %6, %7 : vector<16x32xf32>
    %9 = arith.truncf %8 : vector<16x32xf32> to vector<16x32xbf16>
    %c0_7 = arith.constant 0 : index
    %c0_8 = arith.constant 0 : index
    %10 = vector.load %arg4[%c0_7, %c0_8] : memref<32x96xbf16, #tpu.memory_space<vmem>>, vector<32x96xbf16>
    %cst_9 = arith.constant dense<0.000000e+00> : vector<16x96xf32>
    %11 = tpu.matmul %9, %10, %cst_9 {dimension_numbers = #tpu.dot_dimension_numbers<[1], [0], [0], [1], [0, 0, 1, 1], [], []>} : vector<16x32xbf16>, vector<32x96xbf16>, vector<16x96xf32> -> vector<16x96xf32>
    %12 = vector.broadcast %1 : vector<1x96xf32> to vector<16x96xf32>
    %13 = arith.addf %11, %12 : vector<16x96xf32>
    %14 = arith.truncf %13 : vector<16x96xf32> to vector<16x96xbf16>
    %c0_10 = arith.constant 0 : index
    %c0_11 = arith.constant 0 : index
    %c0_12 = arith.constant 0 : index
    %15 = vector.load %arg6[%c0_10, %c0_11, %c0_12] : memref<1x16x96xbf16, #tpu.memory_space<vmem>>, vector<1x16x96xbf16>
    %16 = vector.shape_cast %15 : vector<1x16x96xbf16> to vector<16x96xbf16>
    %17 = vector.shape_cast %14 : vector<16x96xbf16> to vector<1x16x96xbf16>
    tpu.vector_store %arg6[%c0_10, %c0_11, %c0_12], %17 {strides = array<i32>} : memref<1x16x96xbf16, #tpu.memory_space<vmem>>, vector<1x16x96xbf16>,
    return
  }
  func.func @transform_0(%arg0: i32, %arg1: i32) -> (i32, i32, i32) {
    %c0_i32 = arith.constant 0 : i32
    %c0_i32_0 = arith.constant 0 : i32
    return %arg0, %arg1, %c0_i32 : i32, i32, i32
  }
  func.func @transform_1(%arg0: i32, %arg1: i32) -> (i32, i32) {
    %c0_i32 = arith.constant 0 : i32
    %c0_i32_0 = arith.constant 0 : i32
    %c0_i32_1 = arith.constant 0 : i32
    return %c0_i32, %c0_i32_0 : i32, i32
  }
  func.func @transform_2(%arg0: i32, %arg1: i32) -> (i32, i32) {
    %c0_i32 = arith.constant 0 : i32
    %c0_i32_0 = arith.constant 0 : i32
    %c0_i32_1 = arith.constant 0 : i32
    return %c0_i32, %c0_i32_0 : i32, i32
  }
  func.func @transform_3(%arg0: i32, %arg1: i32) -> (i32, i32) {
    %c0_i32 = arith.constant 0 : i32
    %c0_i32_0 = arith.constant 0 : i32
    %c0_i32_1 = arith.constant 0 : i32
    return %c0_i32, %c0_i32_0 : i32, i32
  }
  func.func @transform_4(%arg0: i32, %arg1: i32) -> (i32, i32, i32) {
    %c0_i32 = arith.constant 0 : i32
    %c0_i32_0 = arith.constant 0 : i32
    return %arg0, %arg1, %c0_i32 : i32, i32, i32
  }
}

module attributes {stable_mosaic.version = 11 : i64} {
  func.func @_knn_kernel(%arg0: i32, %arg1: i32, %arg2: memref<1x16x3xf32, #tpu.memory_space<vmem>>, %arg3: memref<1x16x3xf32, #tpu.memory_space<vmem>>, %arg4: memref<1x16x8xi32, #tpu.memory_space<vmem>>) attributes {dimension_semantics = [#tpu.dimension_semantics<parallel>, #tpu.dimension_semantics<parallel>], iteration_bounds = array<i64: 2, 1>, scalar_prefetch = 0 : i64, scratch_operands = 0 : i64, tpu.core_type = #tpu.core_type<tc>, window_params = [{transform_indices = @transform_0, window_bounds = array<i64: 1, 16, 3>}, {transform_indices = @transform_1, window_bounds = array<i64: 1, 16, 3>}, {transform_indices = @transform_2, window_bounds = array<i64: 1, 16, 8>}]} {
    %c0 = arith.constant 0 : index
    %c0_0 = arith.constant 0 : index
    %c0_1 = arith.constant 0 : index
    %0 = vector.load %arg2[%c0, %c0_0, %c0_1] : memref<1x16x3xf32, #tpu.memory_space<vmem>>, vector<1x16x3xf32>
    %1 = vector.shape_cast %0 : vector<1x16x3xf32> to vector<16x3xf32>
    %c0_2 = arith.constant 0 : index
    %c0_3 = arith.constant 0 : index
    %c0_4 = arith.constant 0 : index
    %2 = vector.load %arg3[%c0_2, %c0_3, %c0_4] : memref<1x16x3xf32, #tpu.memory_space<vmem>>, vector<1x16x3xf32>
    %3 = vector.shape_cast %2 : vector<1x16x3xf32> to vector<16x3xf32>
    %4 = arith.mulf %1, %1 : vector<16x3xf32>
    %cst = arith.constant dense<0.000000e+00> : vector<16xf32>
    %5 = vector.multi_reduction <add>, %4, %cst [1] : vector<16x3xf32> to vector<16xf32>
    %6 = vector.shape_cast %5 : vector<16xf32> to vector<16x1xf32>
    %cst_5 = arith.constant 1.000000e+00 : f32
    %7 = vector.broadcast %cst_5 : f32 to vector<1x3xf32>
    %8 = arith.mulf %3, %3 : vector<16x3xf32>
    %cst_6 = arith.constant dense<0.000000e+00> : vector<1x16xf32>
    %9 = tpu.matmul %7, %8, %cst_6 {dimension_numbers = #tpu.dot_dimension_numbers<[1], [1], [0], [0], [0, 0, 1, 0], [], []>} : vector<1x3xf32>, vector<16x3xf32>, vector<1x16xf32> -> vector<1x16xf32>
    %cst_7 = arith.constant dense<0.000000e+00> : vector<16x16xf32>
    %10 = tpu.matmul %1, %3, %cst_7 {dimension_numbers = #tpu.dot_dimension_numbers<[1], [1], [0], [0], [0, 0, 1, 0], [], []>} : vector<16x3xf32>, vector<16x3xf32>, vector<16x16xf32> -> vector<16x16xf32>
    %11 = vector.broadcast %6 : vector<16x1xf32> to vector<16x16xf32>
    %12 = vector.broadcast %9 : vector<1x16xf32> to vector<16x16xf32>
    %13 = arith.addf %11, %12 : vector<16x16xf32>
    %cst_8 = arith.constant 2.000000e+00 : f32
    %14 = vector.broadcast %cst_8 : f32 to vector<16x16xf32>
    %15 = arith.mulf %14, %10 : vector<16x16xf32>
    %16 = arith.subf %13, %15 : vector<16x16xf32>
    %17 = tpu.iota {dimensions = array<i32: 1>} : vector<16x16xi32>
    %18 = tpu.iota {dimensions = array<i32: 1>} : vector<16x8xi32>
    %c0_i32 = arith.constant 0 : i32
    %19 = vector.broadcast %c0_i32 : i32 to vector<16x8xi32>
    %cst_9 = arith.constant dense<0x7F800000> : vector<16xf32>
    %20 = vector.multi_reduction <minimumf>, %16, %cst_9 [1] : vector<16x16xf32> to vector<16xf32>
    %21 = vector.shape_cast %20 : vector<16xf32> to vector<16x1xf32>
    %22 = vector.broadcast %21 : vector<16x1xf32> to vector<16x16xf32>
    %23 = arith.cmpf oeq, %16, %22 : vector<16x16xf32>
    %c16_i32 = arith.constant 16 : i32
    %24 = vector.broadcast %c16_i32 : i32 to vector<16x16xi32>
    %25 = arith.select %23, %17, %24 : vector<16x16xi1>, vector<16x16xi32>
    %cst_10 = arith.constant dense<2147483647> : vector<16xi32>
    %26 = vector.multi_reduction <minsi>, %25, %cst_10 [1] : vector<16x16xi32> to vector<16xi32>
    %27 = vector.shape_cast %26 : vector<16xi32> to vector<16x1xi32>
    %c0_i32_11 = arith.constant 0 : i32
    %28 = vector.broadcast %c0_i32_11 : i32 to vector<16x8xi32>
    %29 = arith.cmpi eq, %18, %28 : vector<16x8xi32>
    %30 = vector.shape_cast %27 : vector<16x1xi32> to vector<16x1xi32>
    %31 = vector.broadcast %30 : vector<16x1xi32> to vector<16x8xi32>
    %32 = arith.select %29, %31, %19 : vector<16x8xi1>, vector<16x8xi32>
    %33 = vector.broadcast %27 : vector<16x1xi32> to vector<16x16xi32>
    %34 = arith.cmpi eq, %17, %33 : vector<16x16xi32>
    %cst_12 = arith.constant 0x7F800000 : f32
    %35 = vector.broadcast %cst_12 : f32 to vector<16x16xf32>
    %36 = arith.select %34, %35, %16 : vector<16x16xi1>, vector<16x16xf32>
    %cst_13 = arith.constant dense<0x7F800000> : vector<16xf32>
    %37 = vector.multi_reduction <minimumf>, %36, %cst_13 [1] : vector<16x16xf32> to vector<16xf32>
    %38 = vector.shape_cast %37 : vector<16xf32> to vector<16x1xf32>
    %39 = vector.broadcast %38 : vector<16x1xf32> to vector<16x16xf32>
    %40 = arith.cmpf oeq, %36, %39 : vector<16x16xf32>
    %c16_i32_14 = arith.constant 16 : i32
    %41 = vector.broadcast %c16_i32_14 : i32 to vector<16x16xi32>
    %42 = arith.select %40, %17, %41 : vector<16x16xi1>, vector<16x16xi32>
    %cst_15 = arith.constant dense<2147483647> : vector<16xi32>
    %43 = vector.multi_reduction <minsi>, %42, %cst_15 [1] : vector<16x16xi32> to vector<16xi32>
    %44 = vector.shape_cast %43 : vector<16xi32> to vector<16x1xi32>
    %c1_i32 = arith.constant 1 : i32
    %45 = vector.broadcast %c1_i32 : i32 to vector<16x8xi32>
    %46 = arith.cmpi eq, %18, %45 : vector<16x8xi32>
    %47 = vector.shape_cast %44 : vector<16x1xi32> to vector<16x1xi32>
    %48 = vector.broadcast %47 : vector<16x1xi32> to vector<16x8xi32>
    %49 = arith.select %46, %48, %32 : vector<16x8xi1>, vector<16x8xi32>
    %50 = vector.broadcast %44 : vector<16x1xi32> to vector<16x16xi32>
    %51 = arith.cmpi eq, %17, %50 : vector<16x16xi32>
    %cst_16 = arith.constant 0x7F800000 : f32
    %52 = vector.broadcast %cst_16 : f32 to vector<16x16xf32>
    %53 = arith.select %51, %52, %36 : vector<16x16xi1>, vector<16x16xf32>
    %cst_17 = arith.constant dense<0x7F800000> : vector<16xf32>
    %54 = vector.multi_reduction <minimumf>, %53, %cst_17 [1] : vector<16x16xf32> to vector<16xf32>
    %55 = vector.shape_cast %54 : vector<16xf32> to vector<16x1xf32>
    %56 = vector.broadcast %55 : vector<16x1xf32> to vector<16x16xf32>
    %57 = arith.cmpf oeq, %53, %56 : vector<16x16xf32>
    %c16_i32_18 = arith.constant 16 : i32
    %58 = vector.broadcast %c16_i32_18 : i32 to vector<16x16xi32>
    %59 = arith.select %57, %17, %58 : vector<16x16xi1>, vector<16x16xi32>
    %cst_19 = arith.constant dense<2147483647> : vector<16xi32>
    %60 = vector.multi_reduction <minsi>, %59, %cst_19 [1] : vector<16x16xi32> to vector<16xi32>
    %61 = vector.shape_cast %60 : vector<16xi32> to vector<16x1xi32>
    %c2_i32 = arith.constant 2 : i32
    %62 = vector.broadcast %c2_i32 : i32 to vector<16x8xi32>
    %63 = arith.cmpi eq, %18, %62 : vector<16x8xi32>
    %64 = vector.shape_cast %61 : vector<16x1xi32> to vector<16x1xi32>
    %65 = vector.broadcast %64 : vector<16x1xi32> to vector<16x8xi32>
    %66 = arith.select %63, %65, %49 : vector<16x8xi1>, vector<16x8xi32>
    %67 = vector.broadcast %61 : vector<16x1xi32> to vector<16x16xi32>
    %68 = arith.cmpi eq, %17, %67 : vector<16x16xi32>
    %cst_20 = arith.constant 0x7F800000 : f32
    %69 = vector.broadcast %cst_20 : f32 to vector<16x16xf32>
    %70 = arith.select %68, %69, %53 : vector<16x16xi1>, vector<16x16xf32>
    %cst_21 = arith.constant dense<0x7F800000> : vector<16xf32>
    %71 = vector.multi_reduction <minimumf>, %70, %cst_21 [1] : vector<16x16xf32> to vector<16xf32>
    %72 = vector.shape_cast %71 : vector<16xf32> to vector<16x1xf32>
    %73 = vector.broadcast %72 : vector<16x1xf32> to vector<16x16xf32>
    %74 = arith.cmpf oeq, %70, %73 : vector<16x16xf32>
    %c16_i32_22 = arith.constant 16 : i32
    %75 = vector.broadcast %c16_i32_22 : i32 to vector<16x16xi32>
    %76 = arith.select %74, %17, %75 : vector<16x16xi1>, vector<16x16xi32>
    %cst_23 = arith.constant dense<2147483647> : vector<16xi32>
    %77 = vector.multi_reduction <minsi>, %76, %cst_23 [1] : vector<16x16xi32> to vector<16xi32>
    %78 = vector.shape_cast %77 : vector<16xi32> to vector<16x1xi32>
    %c3_i32 = arith.constant 3 : i32
    %79 = vector.broadcast %c3_i32 : i32 to vector<16x8xi32>
    %80 = arith.cmpi eq, %18, %79 : vector<16x8xi32>
    %81 = vector.shape_cast %78 : vector<16x1xi32> to vector<16x1xi32>
    %82 = vector.broadcast %81 : vector<16x1xi32> to vector<16x8xi32>
    %83 = arith.select %80, %82, %66 : vector<16x8xi1>, vector<16x8xi32>
    %84 = vector.broadcast %78 : vector<16x1xi32> to vector<16x16xi32>
    %85 = arith.cmpi eq, %17, %84 : vector<16x16xi32>
    %cst_24 = arith.constant 0x7F800000 : f32
    %86 = vector.broadcast %cst_24 : f32 to vector<16x16xf32>
    %87 = arith.select %85, %86, %70 : vector<16x16xi1>, vector<16x16xf32>
    %cst_25 = arith.constant dense<0x7F800000> : vector<16xf32>
    %88 = vector.multi_reduction <minimumf>, %87, %cst_25 [1] : vector<16x16xf32> to vector<16xf32>
    %89 = vector.shape_cast %88 : vector<16xf32> to vector<16x1xf32>
    %90 = vector.broadcast %89 : vector<16x1xf32> to vector<16x16xf32>
    %91 = arith.cmpf oeq, %87, %90 : vector<16x16xf32>
    %c16_i32_26 = arith.constant 16 : i32
    %92 = vector.broadcast %c16_i32_26 : i32 to vector<16x16xi32>
    %93 = arith.select %91, %17, %92 : vector<16x16xi1>, vector<16x16xi32>
    %cst_27 = arith.constant dense<2147483647> : vector<16xi32>
    %94 = vector.multi_reduction <minsi>, %93, %cst_27 [1] : vector<16x16xi32> to vector<16xi32>
    %95 = vector.shape_cast %94 : vector<16xi32> to vector<16x1xi32>
    %c4_i32 = arith.constant 4 : i32
    %96 = vector.broadcast %c4_i32 : i32 to vector<16x8xi32>
    %97 = arith.cmpi eq, %18, %96 : vector<16x8xi32>
    %98 = vector.shape_cast %95 : vector<16x1xi32> to vector<16x1xi32>
    %99 = vector.broadcast %98 : vector<16x1xi32> to vector<16x8xi32>
    %100 = arith.select %97, %99, %83 : vector<16x8xi1>, vector<16x8xi32>
    %101 = vector.broadcast %95 : vector<16x1xi32> to vector<16x16xi32>
    %102 = arith.cmpi eq, %17, %101 : vector<16x16xi32>
    %cst_28 = arith.constant 0x7F800000 : f32
    %103 = vector.broadcast %cst_28 : f32 to vector<16x16xf32>
    %104 = arith.select %102, %103, %87 : vector<16x16xi1>, vector<16x16xf32>
    %cst_29 = arith.constant dense<0x7F800000> : vector<16xf32>
    %105 = vector.multi_reduction <minimumf>, %104, %cst_29 [1] : vector<16x16xf32> to vector<16xf32>
    %106 = vector.shape_cast %105 : vector<16xf32> to vector<16x1xf32>
    %107 = vector.broadcast %106 : vector<16x1xf32> to vector<16x16xf32>
    %108 = arith.cmpf oeq, %104, %107 : vector<16x16xf32>
    %c16_i32_30 = arith.constant 16 : i32
    %109 = vector.broadcast %c16_i32_30 : i32 to vector<16x16xi32>
    %110 = arith.select %108, %17, %109 : vector<16x16xi1>, vector<16x16xi32>
    %cst_31 = arith.constant dense<2147483647> : vector<16xi32>
    %111 = vector.multi_reduction <minsi>, %110, %cst_31 [1] : vector<16x16xi32> to vector<16xi32>
    %112 = vector.shape_cast %111 : vector<16xi32> to vector<16x1xi32>
    %c5_i32 = arith.constant 5 : i32
    %113 = vector.broadcast %c5_i32 : i32 to vector<16x8xi32>
    %114 = arith.cmpi eq, %18, %113 : vector<16x8xi32>
    %115 = vector.shape_cast %112 : vector<16x1xi32> to vector<16x1xi32>
    %116 = vector.broadcast %115 : vector<16x1xi32> to vector<16x8xi32>
    %117 = arith.select %114, %116, %100 : vector<16x8xi1>, vector<16x8xi32>
    %118 = vector.broadcast %112 : vector<16x1xi32> to vector<16x16xi32>
    %119 = arith.cmpi eq, %17, %118 : vector<16x16xi32>
    %cst_32 = arith.constant 0x7F800000 : f32
    %120 = vector.broadcast %cst_32 : f32 to vector<16x16xf32>
    %121 = arith.select %119, %120, %104 : vector<16x16xi1>, vector<16x16xf32>
    %cst_33 = arith.constant dense<0x7F800000> : vector<16xf32>
    %122 = vector.multi_reduction <minimumf>, %121, %cst_33 [1] : vector<16x16xf32> to vector<16xf32>
    %123 = vector.shape_cast %122 : vector<16xf32> to vector<16x1xf32>
    %124 = vector.broadcast %123 : vector<16x1xf32> to vector<16x16xf32>
    %125 = arith.cmpf oeq, %121, %124 : vector<16x16xf32>
    %c16_i32_34 = arith.constant 16 : i32
    %126 = vector.broadcast %c16_i32_34 : i32 to vector<16x16xi32>
    %127 = arith.select %125, %17, %126 : vector<16x16xi1>, vector<16x16xi32>
    %cst_35 = arith.constant dense<2147483647> : vector<16xi32>
    %128 = vector.multi_reduction <minsi>, %127, %cst_35 [1] : vector<16x16xi32> to vector<16xi32>
    %129 = vector.shape_cast %128 : vector<16xi32> to vector<16x1xi32>
    %c6_i32 = arith.constant 6 : i32
    %130 = vector.broadcast %c6_i32 : i32 to vector<16x8xi32>
    %131 = arith.cmpi eq, %18, %130 : vector<16x8xi32>
    %132 = vector.shape_cast %129 : vector<16x1xi32> to vector<16x1xi32>
    %133 = vector.broadcast %132 : vector<16x1xi32> to vector<16x8xi32>
    %134 = arith.select %131, %133, %117 : vector<16x8xi1>, vector<16x8xi32>
    %135 = vector.broadcast %129 : vector<16x1xi32> to vector<16x16xi32>
    %136 = arith.cmpi eq, %17, %135 : vector<16x16xi32>
    %cst_36 = arith.constant 0x7F800000 : f32
    %137 = vector.broadcast %cst_36 : f32 to vector<16x16xf32>
    %138 = arith.select %136, %137, %121 : vector<16x16xi1>, vector<16x16xf32>
    %cst_37 = arith.constant dense<0x7F800000> : vector<16xf32>
    %139 = vector.multi_reduction <minimumf>, %138, %cst_37 [1] : vector<16x16xf32> to vector<16xf32>
    %140 = vector.shape_cast %139 : vector<16xf32> to vector<16x1xf32>
    %141 = vector.broadcast %140 : vector<16x1xf32> to vector<16x16xf32>
    %142 = arith.cmpf oeq, %138, %141 : vector<16x16xf32>
    %c16_i32_38 = arith.constant 16 : i32
    %143 = vector.broadcast %c16_i32_38 : i32 to vector<16x16xi32>
    %144 = arith.select %142, %17, %143 : vector<16x16xi1>, vector<16x16xi32>
    %cst_39 = arith.constant dense<2147483647> : vector<16xi32>
    %145 = vector.multi_reduction <minsi>, %144, %cst_39 [1] : vector<16x16xi32> to vector<16xi32>
    %146 = vector.shape_cast %145 : vector<16xi32> to vector<16x1xi32>
    %c7_i32 = arith.constant 7 : i32
    %147 = vector.broadcast %c7_i32 : i32 to vector<16x8xi32>
    %148 = arith.cmpi eq, %18, %147 : vector<16x8xi32>
    %149 = vector.shape_cast %146 : vector<16x1xi32> to vector<16x1xi32>
    %150 = vector.broadcast %149 : vector<16x1xi32> to vector<16x8xi32>
    %151 = arith.select %148, %150, %134 : vector<16x8xi1>, vector<16x8xi32>
    %c0_40 = arith.constant 0 : index
    %c0_41 = arith.constant 0 : index
    %c0_42 = arith.constant 0 : index
    %152 = vector.load %arg4[%c0_40, %c0_41, %c0_42] : memref<1x16x8xi32, #tpu.memory_space<vmem>>, vector<1x16x8xi32>
    %153 = vector.shape_cast %152 : vector<1x16x8xi32> to vector<16x8xi32>
    %154 = vector.shape_cast %151 : vector<16x8xi32> to vector<1x16x8xi32>
    tpu.vector_store %arg4[%c0_40, %c0_41, %c0_42], %154 {strides = array<i32>} : memref<1x16x8xi32, #tpu.memory_space<vmem>>, vector<1x16x8xi32>,
    return
  }
  func.func @transform_0(%arg0: i32, %arg1: i32) -> (i32, i32, i32) {
    %c0_i32 = arith.constant 0 : i32
    %c0_i32_0 = arith.constant 0 : i32
    return %arg0, %arg1, %c0_i32 : i32, i32, i32
  }
  func.func @transform_1(%arg0: i32, %arg1: i32) -> (i32, i32, i32) {
    %c0_i32 = arith.constant 0 : i32
    %c0_i32_0 = arith.constant 0 : i32
    %c0_i32_1 = arith.constant 0 : i32
    return %arg0, %c0_i32, %c0_i32_0 : i32, i32, i32
  }
  func.func @transform_2(%arg0: i32, %arg1: i32) -> (i32, i32, i32) {
    %c0_i32 = arith.constant 0 : i32
    %c0_i32_0 = arith.constant 0 : i32
    return %arg0, %arg1, %c0_i32 : i32, i32, i32
  }
}

module attributes {stable_mosaic.version = 11 : i64} {
  func.func @_attn_kernel(%arg0: i32, %arg1: i32, %arg2: memref<1x16x16xf32, #tpu.memory_space<vmem>>, %arg3: memref<1x16x32xbf16, #tpu.memory_space<vmem>>, %arg4: memref<1x16x32xbf16, #tpu.memory_space<vmem>>, %arg5: memref<1x16x3xf32, #tpu.memory_space<vmem>>, %arg6: memref<1x16x8x32xbf16, #tpu.memory_space<vmem>>, %arg7: memref<1x16x8x3xf32, #tpu.memory_space<vmem>>, %arg8: memref<3x16xbf16, #tpu.memory_space<vmem>>, %arg9: memref<16x32xbf16, #tpu.memory_space<vmem>>, %arg10: memref<32x128xbf16, #tpu.memory_space<vmem>>, %arg11: memref<128x32xbf16, #tpu.memory_space<vmem>>, %arg12: memref<32x16xbf16, #tpu.memory_space<vmem>>, %arg13: memref<1x640xf32, #tpu.memory_space<vmem>>, %arg14: memref<1x16x16xf32, #tpu.memory_space<vmem>>) attributes {dimension_semantics = [#tpu.dimension_semantics<parallel>, #tpu.dimension_semantics<parallel>], iteration_bounds = array<i64: 2, 1>, scalar_prefetch = 0 : i64, scratch_operands = 0 : i64, tpu.core_type = #tpu.core_type<tc>, window_params = [{transform_indices = @transform_0, window_bounds = array<i64: 1, 16, 16>}, {transform_indices = @transform_1, window_bounds = array<i64: 1, 16, 32>}, {transform_indices = @transform_2, window_bounds = array<i64: 1, 16, 32>}, {transform_indices = @transform_3, window_bounds = array<i64: 1, 16, 3>}, {transform_indices = @transform_4, window_bounds = array<i64: 1, 16, 8, 32>}, {transform_indices = @transform_5, window_bounds = array<i64: 1, 16, 8, 3>}, {pipeline_mode = #tpu.pipeline_mode<synchronous>, transform_indices = @transform_6, window_bounds = array<i64: 3, 16>}, {pipeline_mode = #tpu.pipeline_mode<synchronous>, transform_indices = @transform_7, window_bounds = array<i64: 16, 32>}, {pipeline_mode = #tpu.pipeline_mode<synchronous>, transform_indices = @transform_8, window_bounds = array<i64: 32, 128>}, {pipeline_mode = #tpu.pipeline_mode<synchronous>, transform_indices = @transform_9, window_bounds = array<i64: 128, 32>}, {pipeline_mode = #tpu.pipeline_mode<synchronous>, transform_indices = @transform_10, window_bounds = array<i64: 32, 16>}, {pipeline_mode = #tpu.pipeline_mode<synchronous>, transform_indices = @transform_11, window_bounds = array<i64: 1, 640>}, {transform_indices = @transform_12, window_bounds = array<i64: 1, 16, 16>}]} {
    %c0 = arith.constant 0 : index
    %c0_0 = arith.constant 0 : index
    %c0_1 = arith.constant 0 : index
    %0 = vector.load %arg2[%c0, %c0_0, %c0_1] : memref<1x16x16xf32, #tpu.memory_space<vmem>>, vector<1x16x16xf32>
    %1 = vector.shape_cast %0 : vector<1x16x16xf32> to vector<16x16xf32>
    %c0_2 = arith.constant 0 : index
    %c0_3 = arith.constant 0 : index
    %c0_4 = arith.constant 0 : index
    %2 = vector.load %arg3[%c0_2, %c0_3, %c0_4] : memref<1x16x32xbf16, #tpu.memory_space<vmem>>, vector<1x16x32xbf16>
    %3 = vector.shape_cast %2 : vector<1x16x32xbf16> to vector<16x32xbf16>
    %4 = arith.extf %3 : vector<16x32xbf16> to vector<16x32xf32>
    %c0_5 = arith.constant 0 : index
    %c0_6 = arith.constant 0 : index
    %c0_7 = arith.constant 0 : index
    %5 = vector.load %arg4[%c0_5, %c0_6, %c0_7] : memref<1x16x32xbf16, #tpu.memory_space<vmem>>, vector<1x16x32xbf16>
    %6 = vector.shape_cast %5 : vector<1x16x32xbf16> to vector<16x32xbf16>
    %7 = arith.extf %6 : vector<16x32xbf16> to vector<16x32xf32>
    %c0_8 = arith.constant 0 : index
    %c0_9 = arith.constant 0 : index
    %c0_10 = arith.constant 0 : index
    %8 = vector.load %arg5[%c0_8, %c0_9, %c0_10] : memref<1x16x3xf32, #tpu.memory_space<vmem>>, vector<1x16x3xf32>
    %9 = vector.shape_cast %8 : vector<1x16x3xf32> to vector<16x3xf32>
    %c0_11 = arith.constant 0 : index
    %c0_12 = arith.constant 0 : index
    %c0_13 = arith.constant 0 : index
    %c0_14 = arith.constant 0 : index
    %10 = vector.load %arg6[%c0_11, %c0_12, %c0_13, %c0_14] : memref<1x16x8x32xbf16, #tpu.memory_space<vmem>>, vector<1x16x8x32xbf16>
    %11 = vector.shape_cast %10 : vector<1x16x8x32xbf16> to vector<16x8x32xbf16>
    %12 = arith.extf %11 : vector<16x8x32xbf16> to vector<16x8x32xf32>
    %c0_15 = arith.constant 0 : index
    %c0_16 = arith.constant 0 : index
    %c0_17 = arith.constant 0 : index
    %c0_18 = arith.constant 0 : index
    %13 = vector.load %arg7[%c0_15, %c0_16, %c0_17, %c0_18] : memref<1x16x8x3xf32, #tpu.memory_space<vmem>>, vector<1x16x8x3xf32>
    %14 = vector.shape_cast %13 : vector<1x16x8x3xf32> to vector<16x8x3xf32>
    %15 = vector.shape_cast %4 : vector<16x32xf32> to vector<16x1x32xf32>
    %16 = vector.broadcast %15 : vector<16x1x32xf32> to vector<16x8x32xf32>
    %17 = arith.subf %16, %12 : vector<16x8x32xf32>
    %18 = vector.shape_cast %17 : vector<16x8x32xf32> to vector<128x32xf32>
    %19 = vector.shape_cast %9 : vector<16x3xf32> to vector<16x1x3xf32>
    %20 = vector.broadcast %19 : vector<16x1x3xf32> to vector<16x8x3xf32>
    %21 = arith.subf %20, %14 : vector<16x8x3xf32>
    %22 = vector.shape_cast %21 : vector<16x8x3xf32> to vector<128x3xf32>
    %23 = arith.truncf %22 : vector<128x3xf32> to vector<128x3xbf16>
    %c0_19 = arith.constant 0 : index
    %c0_20 = arith.constant 0 : index
    %24 = vector.load %arg8[%c0_19, %c0_20] : memref<3x16xbf16, #tpu.memory_space<vmem>>, vector<3x16xbf16>
    %cst = arith.constant dense<0.000000e+00> : vector<128x16xf32>
    %25 = tpu.matmul %23, %24, %cst {dimension_numbers = #tpu.dot_dimension_numbers<[1], [0], [0], [1], [0, 0, 1, 1], [], []>} : vector<128x3xbf16>, vector<3x16xbf16>, vector<128x16xf32> -> vector<128x16xf32>
    %c0_21 = arith.constant 0 : index
    %c0_22 = arith.constant 0 : index
    %26 = vector.load %arg13[%c0_21, %c0_22] : memref<1x640xf32, #tpu.memory_space<vmem>>, vector<1x16xf32>
    %27 = vector.broadcast %26 : vector<1x16xf32> to vector<128x16xf32>
    %28 = arith.addf %25, %27 : vector<128x16xf32>
    %cst_23 = arith.constant 0.000000e+00 : f32
    %29 = vector.broadcast %cst_23 : f32 to vector<128x16xf32>
    %30 = arith.maximumf %28, %29 : vector<128x16xf32>
    %31 = arith.truncf %30 : vector<128x16xf32> to vector<128x16xbf16>
    %c0_24 = arith.constant 0 : index
    %c0_25 = arith.constant 0 : index
    %32 = vector.load %arg9[%c0_24, %c0_25] : memref<16x32xbf16, #tpu.memory_space<vmem>>, vector<16x32xbf16>
    %cst_26 = arith.constant dense<0.000000e+00> : vector<128x32xf32>
    %33 = tpu.matmul %31, %32, %cst_26 {dimension_numbers = #tpu.dot_dimension_numbers<[1], [0], [0], [1], [0, 0, 1, 1], [], []>} : vector<128x16xbf16>, vector<16x32xbf16>, vector<128x32xf32> -> vector<128x32xf32>
    %c0_27 = arith.constant 0 : index
    %c128 = arith.constant 128 : index
    %34 = vector.load %arg13[%c0_27, %c128] : memref<1x640xf32, #tpu.memory_space<vmem>>, vector<1x32xf32>
    %35 = vector.broadcast %34 : vector<1x32xf32> to vector<128x32xf32>
    %36 = arith.addf %33, %35 : vector<128x32xf32>
    %37 = arith.addf %18, %36 : vector<128x32xf32>
    %38 = arith.truncf %37 : vector<128x32xf32> to vector<128x32xbf16>
    %c0_28 = arith.constant 0 : index
    %c0_29 = arith.constant 0 : index
    %39 = vector.load %arg10[%c0_28, %c0_29] : memref<32x128xbf16, #tpu.memory_space<vmem>>, vector<32x128xbf16>
    %cst_30 = arith.constant dense<0.000000e+00> : vector<128x128xf32>
    %40 = tpu.matmul %38, %39, %cst_30 {dimension_numbers = #tpu.dot_dimension_numbers<[1], [0], [0], [1], [0, 0, 1, 1], [], []>} : vector<128x32xbf16>, vector<32x128xbf16>, vector<128x128xf32> -> vector<128x128xf32>
    %c0_31 = arith.constant 0 : index
    %c256 = arith.constant 256 : index
    %41 = vector.load %arg13[%c0_31, %c256] : memref<1x640xf32, #tpu.memory_space<vmem>>, vector<1x128xf32>
    %42 = vector.broadcast %41 : vector<1x128xf32> to vector<128x128xf32>
    %43 = arith.addf %40, %42 : vector<128x128xf32>
    %cst_32 = arith.constant 0.000000e+00 : f32
    %44 = vector.broadcast %cst_32 : f32 to vector<128x128xf32>
    %45 = arith.maximumf %43, %44 : vector<128x128xf32>
    %46 = arith.truncf %45 : vector<128x128xf32> to vector<128x128xbf16>
    %c0_33 = arith.constant 0 : index
    %c0_34 = arith.constant 0 : index
    %47 = vector.load %arg11[%c0_33, %c0_34] : memref<128x32xbf16, #tpu.memory_space<vmem>>, vector<128x32xbf16>
    %cst_35 = arith.constant dense<0.000000e+00> : vector<128x32xf32>
    %48 = tpu.matmul %46, %47, %cst_35 {dimension_numbers = #tpu.dot_dimension_numbers<[1], [0], [0], [1], [0, 0, 1, 1], [], []>} : vector<128x128xbf16>, vector<128x32xbf16>, vector<128x32xf32> -> vector<128x32xf32>
    %c0_36 = arith.constant 0 : index
    %c384 = arith.constant 384 : index
    %49 = vector.load %arg13[%c0_36, %c384] : memref<1x640xf32, #tpu.memory_space<vmem>>, vector<1x32xf32>
    %50 = vector.broadcast %49 : vector<1x32xf32> to vector<128x32xf32>
    %51 = arith.addf %48, %50 : vector<128x32xf32>
    %52 = vector.shape_cast %51 : vector<128x32xf32> to vector<16x8x32xf32>
    %cst_37 = arith.constant dense<0xFF800000> : vector<16x32xf32>
    %53 = vector.multi_reduction <maximumf>, %52, %cst_37 [1] : vector<16x8x32xf32> to vector<16x32xf32>
    %54 = vector.shape_cast %53 : vector<16x32xf32> to vector<16x1x32xf32>
    %55 = vector.broadcast %54 : vector<16x1x32xf32> to vector<16x8x32xf32>
    %56 = arith.subf %52, %55 : vector<16x8x32xf32>
    %57 = math.exp %56 : vector<16x8x32xf32>
    %cst_38 = arith.constant dense<0.000000e+00> : vector<16x32xf32>
    %58 = vector.multi_reduction <add>, %57, %cst_38 [1] : vector<16x8x32xf32> to vector<16x32xf32>
    %59 = vector.shape_cast %58 : vector<16x32xf32> to vector<16x1x32xf32>
    %60 = tpu.reciprocal %59 {approx = true} : vector<16x1x32xf32> -> vector<16x1x32xf32>
    %61 = vector.broadcast %60 : vector<16x1x32xf32> to vector<16x8x32xf32>
    %62 = arith.mulf %57, %61 : vector<16x8x32xf32>
    %63 = vector.shape_cast %7 : vector<16x32xf32> to vector<16x1x32xf32>
    %64 = vector.shape_cast %36 : vector<128x32xf32> to vector<16x8x32xf32>
    %65 = vector.broadcast %63 : vector<16x1x32xf32> to vector<16x8x32xf32>
    %66 = arith.addf %65, %64 : vector<16x8x32xf32>
    %67 = arith.mulf %62, %66 : vector<16x8x32xf32>
    %cst_39 = arith.constant dense<0.000000e+00> : vector<16x32xf32>
    %68 = vector.multi_reduction <add>, %67, %cst_39 [1] : vector<16x8x32xf32> to vector<16x32xf32>
    %69 = arith.truncf %68 : vector<16x32xf32> to vector<16x32xbf16>
    %c0_40 = arith.constant 0 : index
    %c0_41 = arith.constant 0 : index
    %70 = vector.load %arg12[%c0_40, %c0_41] : memref<32x16xbf16, #tpu.memory_space<vmem>>, vector<32x16xbf16>
    %cst_42 = arith.constant dense<0.000000e+00> : vector<16x16xf32>
    %71 = tpu.matmul %69, %70, %cst_42 {dimension_numbers = #tpu.dot_dimension_numbers<[1], [0], [0], [1], [0, 0, 1, 1], [], []>} : vector<16x32xbf16>, vector<32x16xbf16>, vector<16x16xf32> -> vector<16x16xf32>
    %c0_43 = arith.constant 0 : index
    %c512 = arith.constant 512 : index
    %72 = vector.load %arg13[%c0_43, %c512] : memref<1x640xf32, #tpu.memory_space<vmem>>, vector<1x16xf32>
    %73 = vector.broadcast %72 : vector<1x16xf32> to vector<16x16xf32>
    %74 = arith.addf %71, %73 : vector<16x16xf32>
    %75 = arith.addf %74, %1 : vector<16x16xf32>
    %c0_44 = arith.constant 0 : index
    %c0_45 = arith.constant 0 : index
    %c0_46 = arith.constant 0 : index
    %76 = vector.load %arg14[%c0_44, %c0_45, %c0_46] : memref<1x16x16xf32, #tpu.memory_space<vmem>>, vector<1x16x16xf32>
    %77 = vector.shape_cast %76 : vector<1x16x16xf32> to vector<16x16xf32>
    %78 = vector.shape_cast %75 : vector<16x16xf32> to vector<1x16x16xf32>
    tpu.vector_store %arg14[%c0_44, %c0_45, %c0_46], %78 {strides = array<i32>} : memref<1x16x16xf32, #tpu.memory_space<vmem>>, vector<1x16x16xf32>,
    return
  }
  func.func @transform_0(%arg0: i32, %arg1: i32) -> (i32, i32, i32) {
    %c0_i32 = arith.constant 0 : i32
    %c0_i32_0 = arith.constant 0 : i32
    return %arg0, %arg1, %c0_i32 : i32, i32, i32
  }
  func.func @transform_1(%arg0: i32, %arg1: i32) -> (i32, i32, i32) {
    %c0_i32 = arith.constant 0 : i32
    %c0_i32_0 = arith.constant 0 : i32
    return %arg0, %arg1, %c0_i32 : i32, i32, i32
  }
  func.func @transform_2(%arg0: i32, %arg1: i32) -> (i32, i32, i32) {
    %c0_i32 = arith.constant 0 : i32
    %c0_i32_0 = arith.constant 0 : i32
    return %arg0, %arg1, %c0_i32 : i32, i32, i32
  }
  func.func @transform_3(%arg0: i32, %arg1: i32) -> (i32, i32, i32) {
    %c0_i32 = arith.constant 0 : i32
    %c0_i32_0 = arith.constant 0 : i32
    return %arg0, %arg1, %c0_i32 : i32, i32, i32
  }
  func.func @transform_4(%arg0: i32, %arg1: i32) -> (i32, i32, i32, i32) {
    %c0_i32 = arith.constant 0 : i32
    %c0_i32_0 = arith.constant 0 : i32
    %c0_i32_1 = arith.constant 0 : i32
    return %arg0, %arg1, %c0_i32, %c0_i32_0 : i32, i32, i32, i32
  }
  func.func @transform_5(%arg0: i32, %arg1: i32) -> (i32, i32, i32, i32) {
    %c0_i32 = arith.constant 0 : i32
    %c0_i32_0 = arith.constant 0 : i32
    %c0_i32_1 = arith.constant 0 : i32
    return %arg0, %arg1, %c0_i32, %c0_i32_0 : i32, i32, i32, i32
  }
  func.func @transform_6(%arg0: i32, %arg1: i32) -> (i32, i32) {
    %c0_i32 = arith.constant 0 : i32
    %c0_i32_0 = arith.constant 0 : i32
    %c0_i32_1 = arith.constant 0 : i32
    return %c0_i32, %c0_i32_0 : i32, i32
  }
  func.func @transform_7(%arg0: i32, %arg1: i32) -> (i32, i32) {
    %c0_i32 = arith.constant 0 : i32
    %c0_i32_0 = arith.constant 0 : i32
    %c0_i32_1 = arith.constant 0 : i32
    return %c0_i32, %c0_i32_0 : i32, i32
  }
  func.func @transform_8(%arg0: i32, %arg1: i32) -> (i32, i32) {
    %c0_i32 = arith.constant 0 : i32
    %c0_i32_0 = arith.constant 0 : i32
    %c0_i32_1 = arith.constant 0 : i32
    return %c0_i32, %c0_i32_0 : i32, i32
  }
  func.func @transform_9(%arg0: i32, %arg1: i32) -> (i32, i32) {
    %c0_i32 = arith.constant 0 : i32
    %c0_i32_0 = arith.constant 0 : i32
    %c0_i32_1 = arith.constant 0 : i32
    return %c0_i32, %c0_i32_0 : i32, i32
  }
  func.func @transform_10(%arg0: i32, %arg1: i32) -> (i32, i32) {
    %c0_i32 = arith.constant 0 : i32
    %c0_i32_0 = arith.constant 0 : i32
    %c0_i32_1 = arith.constant 0 : i32
    return %c0_i32, %c0_i32_0 : i32, i32
  }
  func.func @transform_11(%arg0: i32, %arg1: i32) -> (i32, i32) {
    %c0_i32 = arith.constant 0 : i32
    %c0_i32_0 = arith.constant 0 : i32
    %c0_i32_1 = arith.constant 0 : i32
    return %c0_i32, %c0_i32_0 : i32, i32
  }
  func.func @transform_12(%arg0: i32, %arg1: i32) -> (i32, i32, i32) {
    %c0_i32 = arith.constant 0 : i32
    %c0_i32_0 = arith.constant 0 : i32
    return %arg0, %arg1, %c0_i32 : i32, i32, i32
  }
}

</mosaic_0001>

<llo_original>
// kernel: custom-call.4
$region0: #{custom-call.4}
  %s0 = inlined_call_operand.vmem [shape: f32[640], index: 0, kind: output, shape index: {}]

// kernel: transformer_apply.3
$region0: #{transformer_apply.3}
  #allocation0 [shape = 'u32[]', space=smem, size = 0x4, offset = 0x4, fixed_abs, tag = 'smem constant byte address 0x4 - core index']
  #allocation1 [shape = 'u32[72,128]{1,0:T(1,128)}', space=vmem, size = 0x9000, scoped, tag = 'internal scratch']
  %s0 = inlined_call_operand.vmem [shape: f32[2,16,3], index: 0, kind: input, shape index: {}, may-alias: {0,1}]
  %s1 = inlined_call_operand.vmem [shape: f32[2,16,3], index: 1, kind: input, shape index: {}, may-alias: {0,1}]
  %s2 = inlined_call_operand.vmem [shape: s32[2,16,8], index: 2, kind: output, shape index: {}]
  %s3 = sld [smem:[#allocation0]]
  $region41: #{transformer_apply.3} parent=0
    _
  %s5 = ssub.s32 1, %s3
  %s6 = scalar_select 0, %s5, %s3
  loop: start=0, step=1, limit=4
  $region2: #{transformer_apply.3} parent=0 // loop_pre_header
    _
  $region3: #{transformer_apply.3} parent=0 // loop_header
    %s8 = sphi 0, %s12
    %p9 = scmp.ge.s32.totalorder %s8, 4
    %s15 = sphi 0, %s27
    %s16 = sphi 0, %s23
    %s17 = sphi 0, %s15
    %s18 = sphi 0, %s16
    %s19 = sphi 0, %s17
    %s20 = sphi 0, %s18
    %s32 = sphi 0, %s34
    %s35 = sphi 0, %s32
    %s36 = sphi 0, %s35
    %s52 = sphi 0, %s36
    %s58 = sphi 0, %s60
    %s61 = sphi 0, %s58
    %s62 = sphi 0, %s61
    %s78 = sphi 0, %s62
    %s86 = sphi 0, %s88
    %s89 = sphi 0, %s86
    %s90 = sphi 0, %s89
    %s106 = sphi 0, %s90
  $region4: #{transformer_apply.3} parent=0 // loop_header_branch
    %11 = sbr.rel (%p9) target = $region8
  $region5: #{transformer_apply.3} parent=0 // loop_body
    %s13 = ssub.s32 %s8, 1
    %s14 = ssub.s32 %s8, 2
    %s21 = sadd.s32 1, %s16
    %p22 = scmp.ge.s32.totalorder %s21, 1
    %s23 = scalar_select %p22, 0, %s21
    %s24 = sadd.s32 1, %s15
    %s25 = scalar_select %p22, %s24, %s15
    %p26 = scmp.ge.s32.totalorder %s25, 2
    %s27 = scalar_select %p26, 0, %s25
    %s28 = ssub.s32 %s15, %s27
    %s29 = ssub.s32 %s16, %s23
    %s30 = sor.u32 %s28, %s29
    %p31 = scmp.eq.s32.totalorder %s30, 0
    %s33 = sadd.s32 %s32, 1
    %s34 = scalar_select %p31, %s32, %s33
    %p37 = pneg %p31
    %p38 = scmp.eq.s32.totalorder %s8, 1
    %p39 = por %p37, %p38
    %p40 = scmp.ne.s32.totalorder %s32, %s35
    %p41 = scmp.eq.s32.totalorder %s8, 0
    %p42 = por %p40, %p41
    %p43 = scmp.ne.s32.totalorder %s32, %s35
    %p44 = scmp.eq.s32.totalorder %s13, 1
    %p45 = por %p43, %p44
    %p46 = scmp.ne.s32.totalorder %s35, %s36
    %p47 = scmp.eq.s32.totalorder %s13, 0
    %p48 = por %p46, %p47
    %p49 = scmp.ne.s32.totalorder %s35, %s36
    %p50 = scmp.eq.s32.totalorder %s14, 1
    %p51 = por %p49, %p50
    %p53 = scmp.ne.s32.totalorder %s36, %s52
    %p54 = scmp.eq.s32.totalorder %s14, 0
    %p55 = por %p53, %p54
    %s56 = ssub.s32 %s15, %s27
    %p57 = scmp.eq.s32.totalorder %s56, 0
    %s59 = sadd.s32 %s58, 1
    %s60 = scalar_select %p57, %s58, %s59
    %p63 = pneg %p57
    %p64 = scmp.eq.s32.totalorder %s8, 1
    %p65 = por %p63, %p64
    %p66 = scmp.ne.s32.totalorder %s58, %s61
    %p67 = scmp.eq.s32.totalorder %s8, 0
    %p68 = por %p66, %p67
    %p69 = scmp.ne.s32.totalorder %s58, %s61
    %p70 = scmp.eq.s32.totalorder %s13, 1
    %p71 = por %p69, %p70
    %p72 = scmp.ne.s32.totalorder %s61, %s62
    %p73 = scmp.eq.s32.totalorder %s13, 0
    %p74 = por %p72, %p73
    %p75 = scmp.ne.s32.totalorder %s61, %s62
    %p76 = scmp.eq.s32.totalorder %s14, 1
    %p77 = por %p75, %p76
    %p79 = scmp.ne.s32.totalorder %s62, %s78
    %p80 = scmp.eq.s32.totalorder %s14, 0
    %p81 = por %p79, %p80
    %s82 = ssub.s32 %s15, %s27
    %s83 = ssub.s32 %s16, %s23
    %s84 = sor.u32 %s82, %s83
    %p85 = scmp.eq.s32.totalorder %s84, 0
    %s87 = sadd.s32 %s86, 1
    %s88 = scalar_select %p85, %s86, %s87
    %p91 = pneg %p85
    %p92 = scmp.eq.s32.totalorder %s8, 1
    %p93 = por %p91, %p92
    %p94 = scmp.ne.s32.totalorder %s86, %s89
    %p95 = scmp.eq.s32.totalorder %s8, 0
    %p96 = por %p94, %p95
    %p97 = scmp.ne.s32.totalorder %s86, %s89
    %p98 = scmp.eq.s32.totalorder %s13, 1
    %p99 = por %p97, %p98
    %p100 = scmp.ne.s32.totalorder %s89, %s90
    %p101 = scmp.eq.s32.totalorder %s13, 0
    %p102 = por %p100, %p101
    %p103 = scmp.ne.s32.totalorder %s89, %s90
    %p104 = scmp.eq.s32.totalorder %s14, 1
    %p105 = por %p103, %p104
    %p107 = scmp.ne.s32.totalorder %s90, %s106
    %p108 = scmp.eq.s32.totalorder %s14, 0
    %p109 = por %p107, %p108
    %p110 = scmp.le.s32.totalorder 1, %s8
    %p111 = scmp.lt.s32.totalorder %s8, 3
    %p112 = pnand %p110, %p111
    %p113 = pneg %p112
    // Predicated region
    $region9: #{transformer_apply.3} parent=5 // pred_check
      _
    $region10: #{transformer_apply.3} parent=5 // pred_check_branch
      %115 = sbr.rel (%p112) target = $region12
    $region11: #{transformer_apply.3} parent=5 // pred_region
      %s116 = ssub.s32 %s8, 1
    $region12: #{transformer_apply.3} parent=5 // pred_fallthru
      _
    %p117 = scmp.lt.s32.totalorder %s8, 2
    // Predicated region
    $region13: #{transformer_apply.3} parent=5 // pred_check
      %p118 = pneg %p117
    $region14: #{transformer_apply.3} parent=5 // pred_check_branch
      %120 = sbr.rel (%p118) target = $region16
    $region15: #{transformer_apply.3} parent=5 // pred_region
      // Predicated region
      $region17: #{transformer_apply.3} parent=15 // pred_check
        %p121 = pneg %p42
      $region18: #{transformer_apply.3} parent=15 // pred_check_branch
        %123 = sbr.rel (%p121) target = $region20
      $region19: #{transformer_apply.3} parent=15 // pred_region
        %s124 = smul.u32 2, %s16
        %p125 = scmp.lt.s32.totalorder %s15, 1
        %s126 = scalar_select %p125, %s15, 1
        %p127 = scmp.lt.s32.totalorder %s124, 1
        %s128 = scalar_select %p127, %s124, 1
        %s129 = smul.addr %s126, 2
        %s130 = sadd.s32 %s128, %s129
        %s131 = smul.addr %s130, 8
        %s132 = scalar_lea.vmem %s0, %s131
        %s133 = smul.u32 2, %s16
      $region20: #{transformer_apply.3} parent=15 // pred_fallthru
        _
      // Predicated region
      $region21: #{transformer_apply.3} parent=15 // pred_check
        %p134 = pneg %p68
      $region22: #{transformer_apply.3} parent=15 // pred_check_branch
        %136 = sbr.rel (%p134) target = $region24
      $region23: #{transformer_apply.3} parent=15 // pred_region
        %p137 = scmp.lt.s32.totalorder %s15, 1
        %s138 = scalar_select %p137, %s15, 1
        %s139 = smul.addr %s138, 2
        %s140 = smul.addr %s139, 8
        %s141 = scalar_lea.vmem %s1, %s140
      $region24: #{transformer_apply.3} parent=15 // pred_fallthru
        _
    $region16: #{transformer_apply.3} parent=5 // pred_fallthru
      _
    %p142 = scmp.le.s32.totalorder 1, %s8
    %p143 = scmp.lt.s32.totalorder %s8, 3
    %p144 = pnand %p142, %p143
    %p145 = pneg %p144
    // Predicated region
    $region25: #{transformer_apply.3} parent=5 // pred_check
      _
    $region26: #{transformer_apply.3} parent=5 // pred_check_branch
      %147 = sbr.rel (%p144) target = $region28
    $region27: #{transformer_apply.3} parent=5 // pred_region
      %s148 = ssub.s32 %s8, 1
      %s149 = smul.u32 2, %s18
      %p150 = scmp.lt.s32.totalorder %s17, 1
      %s151 = scalar_select %p150, %s17, 1
      %p152 = scmp.lt.s32.totalorder %s149, 1
      %s153 = scalar_select %p152, %s149, 1
      %s154 = smul.addr %s151, 2
      %s155 = sadd.s32 %s153, %s154
      %s156 = smul.addr %s155, 8
      %s157 = scalar_lea.vmem %s0, %s156
      %p158 = pneg %p48
      %p159 = pneg %p45
      %p160 = scmp.lt.s32.totalorder %s17, 1
      %s161 = scalar_select %p160, %s17, 1
      %s162 = smul.addr %s161, 2
      %s163 = smul.addr %s162, 8
      %s164 = scalar_lea.vmem %s1, %s163
      %p165 = pneg %p74
      %p166 = pneg %p71
      %p167 = pneg %p102
      %p168 = pneg %p99
      %s169 = smul.u32 2, %s18
      %p170 = scmp.lt.s32.totalorder %s17, 1
      %s171 = scalar_select %p170, %s17, 1
      %p172 = scmp.lt.s32.totalorder %s169, 1
      %s173 = scalar_select %p172, %s169, 1
      %s174 = smul.addr %s171, 2
      %s175 = sadd.s32 %s173, %s174
      %s176 = smul.addr %s175, 8
      %s177 = scalar_lea.vmem %s2, %s176
      %s178 = smul.u32 2, %s18
      %p179 = scmp.lt.s32.totalorder %s17, 1
      %s180 = scalar_select %p179, %s17, 1
      %p181 = scmp.lt.s32.totalorder %s178, 1
      %s182 = scalar_select %p181, %s178, 1
      %s183 = smul.addr %s180, 2
      %s184 = sadd.s32 %s182, %s183
      %s185 = smul.addr %s184, 8
      %s186 = scalar_lea.vmem %s0, %s185
      %s187 = smul.u32 2, %s18
      %p188 = scmp.lt.s32.totalorder %s17, 1
      %s189 = scalar_select %p188, %s17, 1
      %s190 = smul.addr %s189, 2
      %s191 = smul.addr %s190, 8
      %s192 = scalar_lea.vmem %s1, %s191
      %s193 = smul.u32 2, %s18
      %p194 = scmp.lt.s32.totalorder %s17, 1
      %s195 = scalar_select %p194, %s17, 1
      %p196 = scmp.lt.s32.totalorder %s193, 1
      %s197 = scalar_select %p196, %s193, 1
      %s198 = smul.addr %s195, 2
      %s199 = sadd.s32 %s197, %s198
      %s200 = smul.addr %s199, 8
      %s201 = scalar_lea.vmem %s2, %s200
      %s202 = smul.u32 2, %s18
      %v203 = vld [vmem:[%s186] sm:$0xff]
      %v204 = vld [vmem:[%s186 + $0x8] sm:$0xff]
      %v205 = vld [vmem:[%s192] sm:$0xff]
      %v206 = vld [vmem:[%s192 + $0x8] sm:$0xff]
      %v207 = vmul.f32 %v203, %v203
      %v208 = vmul.f32 %v204, %v204
      %vm209 = vcmask 23552
      %v210 = vsel %vm209, %v207, 0.0
      %211 = vadd.xlane.f32.xlu0 %v210
      %v212 = vpop.xlane.xlu0 %211
      %v213 = vsel %vm209, %v208, 0.0
      %214 = vadd.xlane.f32.xlu0 %v213
      %v215 = vpop.xlane.xlu0 %214
      %v216 = vmul.f32 %v205, %v205
      %v217 = vmul.f32 %v206, %v206
      %v219 = vsel %vm209, 1.0, 0
      %v222 = vsel %vm209, %v216, 0
      %v225 = vsel %vm209, %v217, 0
      %227 = vmatpush.xpose.msra.mxu0 0.0
      %228 = vmatpush.xpose.msra.mxu0 0.0
      %229 = vmatpush.xpose.msra.mxu0 0.0
      %230 = vmatpush.xpose.msra.mxu0 0.0
      %231 = vmatpush.xpose.msra.mxu0 0.0
      %232 = vmatpush.xpose.msra.mxu0 0.0
      %233 = vmatpush.xpose.msra.mxu0 0.0
      %234 = vmatpush.xpose.msra.mxu0 0.0
      %235 = vmatpush.xpose.msra.mxu0 0.0
      %236 = vmatpush.xpose.msra.mxu0 0.0
      %237 = vmatpush.xpose.msra.mxu0 0.0
      %238 = vmatpush.xpose.msra.mxu0 0.0
      %239 = vmatpush.xpose.msra.mxu0 0.0
      %240 = vmatpush.xpose.msra.mxu0 0.0
      %241 = vmatpush.xpose.msra.mxu0 %v225
      %242 = vmatpush.xpose.msra.mxu0 %v222
      %243 = vmatmul.f32.gmra.mxu0 %v219
      %v244 = vpop.f32.mrf.mxu0
      %v245 = vadd.f32 0.0, %v244
      %246 = vdwg.mxu0
      %v248 = vsel %vm209, %v203, 0
      %v251 = vsel %vm209, %v204, 0
      %v254 = vsel %vm209, %v205, 0
      %v257 = vsel %vm209, %v206, 0
      %259 = vmatpush.xpose.msra.mxu0 0.0
      %260 = vmatpush.xpose.msra.mxu0 0.0
      %261 = vmatpush.xpose.msra.mxu0 0.0
      %262 = vmatpush.xpose.msra.mxu0 0.0
      %263 = vmatpush.xpose.msra.mxu0 0.0
      %264 = vmatpush.xpose.msra.mxu0 0.0
      %265 = vmatpush.xpose.msra.mxu0 0.0
      %266 = vmatpush.xpose.msra.mxu0 0.0
      %267 = vmatpush.xpose.msra.mxu0 0.0
      %268 = vmatpush.xpose.msra.mxu0 0.0
      %269 = vmatpush.xpose.msra.mxu0 0.0
      %270 = vmatpush.xpose.msra.mxu0 0.0
      %271 = vmatpush.xpose.msra.mxu0 0.0
      %272 = vmatpush.xpose.msra.mxu0 0.0
      %273 = vmatpush.xpose.msra.mxu0 %v257
      %274 = vmatpush.xpose.msra.mxu0 %v254
      %275 = vmatmul.f32.gmra.mxu0 %v248
      %v276 = vpop.f32.mrf.mxu0
      %v277 = vadd.f32 0.0, %v276
      %278 = vmatmul.f32.gmra.mxu0 %v251
      %v279 = vpop.f32.mrf.mxu0
      %v280 = vadd.f32 0.0, %v279
      %281 = vdwg.mxu0
      %v282 = vperm.slane %v245, 0
      %v283 = vadd.f32 %v212, %v282
      %v284 = vadd.f32 %v215, %v282
      %v285 = vmul.f32 %v277, 2.0
      %v286 = vmul.f32 %v280, 2.0
      %v287 = vsub.f32 %v283, %v285
      %v288 = vsub.f32 %v284, %v286
      %v289 = vlaneseq
      %v290 = vand.u32 %v289, 127
      %vm291 = vcmask 130048
      %v292 = vsel %vm291, %v287, inf
      %293 = vmin.xlane.f32.xlu0 %v292
      %v294 = vpop.xlane.xlu0 %293
      %v295 = vsel %vm291, %v288, inf
      %296 = vmin.xlane.f32.xlu0 %v295
      %v297 = vpop.xlane.xlu0 %296
      %vm298 = vcmp.eq.f32.partialorder %v287, %v294
      %vm299 = vcmp.eq.f32.partialorder %v288, %v297
      %v300 = vsel %vm298, %v290, 16
      %v301 = vsel %vm299, %v290, 16
      %v302 = vsel %vm291, %v300, 2147483647
      %v303 = vand.u32 %v302, 65535
      %v304 = vshra.s32 %v302, 16
      %v305 = vcvt.s32.f32 %v303
      %v306 = vcvt.s32.f32 %v304
      %307 = vmin.xlane.f32.xlu0 %v306
      %v308 = vpop.xlane.xlu0 %307
      %vm309 = vcmp.eq.f32.partialorder %v306, %v308
      %v310 = vsel %vm309, %v305, inf
      %311 = vmin.xlane.f32.xlu0 %v310
      %v312 = vpop.xlane.xlu0 %311
      %v313 = vcvt.f32.s32 %v312
      %v314 = vcvt.f32.s32 %v308
      %v315 = vshll.u32 %v314, 16
      %v316 = vadd.s32 %v315, %v313
      %v317 = vsel %vm291, %v301, 2147483647
      %v318 = vand.u32 %v317, 65535
      %v319 = vshra.s32 %v317, 16
      %v320 = vcvt.s32.f32 %v318
      %v321 = vcvt.s32.f32 %v319
      %322 = vmin.xlane.f32.xlu0 %v321
      %v323 = vpop.xlane.xlu0 %322
      %vm324 = vcmp.eq.f32.partialorder %v321, %v323
      %v325 = vsel %vm324, %v320, inf
      %326 = vmin.xlane.f32.xlu0 %v325
      %v327 = vpop.xlane.xlu0 %326
      %v328 = vcvt.f32.s32 %v327
      %v329 = vcvt.f32.s32 %v323
      %v330 = vshll.u32 %v329, 16
      %v331 = vadd.s32 %v330, %v328
      %vm332 = vcmp.eq.s32.totalorder %v290, 0
      %v333 = vsel %vm332, %v316, 0
      %v334 = vsel %vm332, %v331, 0
      %vm335 = vcmp.eq.s32.totalorder %v290, %v316
      %vm336 = vcmp.eq.s32.totalorder %v290, %v331
      %v337 = vsel %vm335, inf, %v287
      %v338 = vsel %vm336, inf, %v288
      %v339 = vsel %vm291, %v337, inf
      %340 = vmin.xlane.f32.xlu0 %v339
      %v341 = vpop.xlane.xlu0 %340
      %v342 = vsel %vm291, %v338, inf
      %343 = vmin.xlane.f32.xlu0 %v342
      %v344 = vpop.xlane.xlu0 %343
      %vm345 = vcmp.eq.f32.partialorder %v337, %v341
      %vm346 = vcmp.eq.f32.partialorder %v338, %v344
      %v347 = vsel %vm345, %v290, 16
      %v348 = vsel %vm346, %v290, 16
      %v349 = vsel %vm291, %v347, 2147483647
      %v350 = vand.u32 %v349, 65535
      %v351 = vshra.s32 %v349, 16
      %v352 = vcvt.s32.f32 %v350
      %v353 = vcvt.s32.f32 %v351
      %354 = vmin.xlane.f32.xlu0 %v353
      %v355 = vpop.xlane.xlu0 %354
      %vm356 = vcmp.eq.f32.partialorder %v353, %v355
      %v357 = vsel %vm356, %v352, inf
      %358 = vmin.xlane.f32.xlu0 %v357
      %v359 = vpop.xlane.xlu0 %358
      %v360 = vcvt.f32.s32 %v359
      %v361 = vcvt.f32.s32 %v355
      %v362 = vshll.u32 %v361, 16
      %v363 = vadd.s32 %v362, %v360
      %v364 = vsel %vm291, %v348, 2147483647
      %v365 = vand.u32 %v364, 65535
      %v366 = vshra.s32 %v364, 16
      %v367 = vcvt.s32.f32 %v365
      %v368 = vcvt.s32.f32 %v366
      %369 = vmin.xlane.f32.xlu0 %v368
      %v370 = vpop.xlane.xlu0 %369
      %vm371 = vcmp.eq.f32.partialorder %v368, %v370
      %v372 = vsel %vm371, %v367, inf
      %373 = vmin.xlane.f32.xlu0 %v372
      %v374 = vpop.xlane.xlu0 %373
      %v375 = vcvt.f32.s32 %v374
      %v376 = vcvt.f32.s32 %v370
      %v377 = vshll.u32 %v376, 16
      %v378 = vadd.s32 %v377, %v375
      %vm379 = vcmp.eq.s32.totalorder %v290, 1
      %v380 = vsel %vm379, %v363, %v333
      %v381 = vsel %vm379, %v378, %v334
      %vm382 = vcmp.eq.s32.totalorder %v290, %v363
      %vm383 = vcmp.eq.s32.totalorder %v290, %v378
      %v384 = vsel %vm382, inf, %v337
      %v385 = vsel %vm383, inf, %v338
      %v386 = vsel %vm291, %v384, inf
      %387 = vmin.xlane.f32.xlu0 %v386
      %v388 = vpop.xlane.xlu0 %387
      %v389 = vsel %vm291, %v385, inf
      %390 = vmin.xlane.f32.xlu0 %v389
      %v391 = vpop.xlane.xlu0 %390
      %vm392 = vcmp.eq.f32.partialorder %v384, %v388
      %vm393 = vcmp.eq.f32.partialorder %v385, %v391
      %v394 = vsel %vm392, %v290, 16
      %v395 = vsel %vm393, %v290, 16
      %v396 = vsel %vm291, %v394, 2147483647
      %v397 = vand.u32 %v396, 65535
      %v398 = vshra.s32 %v396, 16
      %v399 = vcvt.s32.f32 %v397
      %v400 = vcvt.s32.f32 %v398
      %401 = vmin.xlane.f32.xlu0 %v400
      %v402 = vpop.xlane.xlu0 %401
      %vm403 = vcmp.eq.f32.partialorder %v400, %v402
      %v404 = vsel %vm403, %v399, inf
      %405 = vmin.xlane.f32.xlu0 %v404
      %v406 = vpop.xlane.xlu0 %405
      %v407 = vcvt.f32.s32 %v406
      %v408 = vcvt.f32.s32 %v402
      %v409 = vshll.u32 %v408, 16
      %v410 = vadd.s32 %v409, %v407
      %v411 = vsel %vm291, %v395, 2147483647
      %v412 = vand.u32 %v411, 65535
      %v413 = vshra.s32 %v411, 16
      %v414 = vcvt.s32.f32 %v412
      %v415 = vcvt.s32.f32 %v413
      %416 = vmin.xlane.f32.xlu0 %v415
      %v417 = vpop.xlane.xlu0 %416
      %vm418 = vcmp.eq.f32.partialorder %v415, %v417
      %v419 = vsel %vm418, %v414, inf
      %420 = vmin.xlane.f32.xlu0 %v419
      %v421 = vpop.xlane.xlu0 %420
      %v422 = vcvt.f32.s32 %v421
      %v423 = vcvt.f32.s32 %v417
      %v424 = vshll.u32 %v423, 16
      %v425 = vadd.s32 %v424, %v422
      %vm426 = vcmp.eq.s32.totalorder %v290, 2
      %v427 = vsel %vm426, %v410, %v380
      %v428 = vsel %vm426, %v425, %v381
      %vm429 = vcmp.eq.s32.totalorder %v290, %v410
      %vm430 = vcmp.eq.s32.totalorder %v290, %v425
      %v431 = vsel %vm429, inf, %v384
      %v432 = vsel %vm430, inf, %v385
      %v433 = vsel %vm291, %v431, inf
      %434 = vmin.xlane.f32.xlu0 %v433
      %v435 = vpop.xlane.xlu0 %434
      %v436 = vsel %vm291, %v432, inf
      %437 = vmin.xlane.f32.xlu0 %v436
      %v438 = vpop.xlane.xlu0 %437
      %vm439 = vcmp.eq.f32.partialorder %v431, %v435
      %vm440 = vcmp.eq.f32.partialorder %v432, %v438
      %v441 = vsel %vm439, %v290, 16
      %v442 = vsel %vm440, %v290, 16
      %v443 = vsel %vm291, %v441, 2147483647
      %v444 = vand.u32 %v443, 65535
      %v445 = vshra.s32 %v443, 16
      %v446 = vcvt.s32.f32 %v444
      %v447 = vcvt.s32.f32 %v445
      %448 = vmin.xlane.f32.xlu0 %v447
      %v449 = vpop.xlane.xlu0 %448
      %vm450 = vcmp.eq.f32.partialorder %v447, %v449
      %v451 = vsel %vm450, %v446, inf
      %452 = vmin.xlane.f32.xlu0 %v451
      %v453 = vpop.xlane.xlu0 %452
      %v454 = vcvt.f32.s32 %v453
      %v455 = vcvt.f32.s32 %v449
      %v456 = vshll.u32 %v455, 16
      %v457 = vadd.s32 %v456, %v454
      %v458 = vsel %vm291, %v442, 2147483647
      %v459 = vand.u32 %v458, 65535
      %v460 = vshra.s32 %v458, 16
      %v461 = vcvt.s32.f32 %v459
      %v462 = vcvt.s32.f32 %v460
      %463 = vmin.xlane.f32.xlu0 %v462
      %v464 = vpop.xlane.xlu0 %463
      %vm465 = vcmp.eq.f32.partialorder %v462, %v464
      %v466 = vsel %vm465, %v461, inf
      %467 = vmin.xlane.f32.xlu0 %v466
      %v468 = vpop.xlane.xlu0 %467
      %v469 = vcvt.f32.s32 %v468
      %v470 = vcvt.f32.s32 %v464
      %v471 = vshll.u32 %v470, 16
      %v472 = vadd.s32 %v471, %v469
      %vm473 = vcmp.eq.s32.totalorder %v290, 3
      %v474 = vsel %vm473, %v457, %v427
      %v475 = vsel %vm473, %v472, %v428
      %vm476 = vcmp.eq.s32.totalorder %v290, %v457
      %vm477 = vcmp.eq.s32.totalorder %v290, %v472
      %v478 = vsel %vm476, inf, %v431
      %v479 = vsel %vm477, inf, %v432
      %v480 = vsel %vm291, %v478, inf
      %481 = vmin.xlane.f32.xlu0 %v480
      %v482 = vpop.xlane.xlu0 %481
      %v483 = vsel %vm291, %v479, inf
      %484 = vmin.xlane.f32.xlu0 %v483
      %v485 = vpop.xlane.xlu0 %484
      %vm486 = vcmp.eq.f32.partialorder %v478, %v482
      %vm487 = vcmp.eq.f32.partialorder %v479, %v485
      %v488 = vsel %vm486, %v290, 16
      %v489 = vsel %vm487, %v290, 16
      %v490 = vsel %vm291, %v488, 2147483647
      %v491 = vand.u32 %v490, 65535
      %v492 = vshra.s32 %v490, 16
      %v493 = vcvt.s32.f32 %v491
      %v494 = vcvt.s32.f32 %v492
      %495 = vmin.xlane.f32.xlu0 %v494
      %v496 = vpop.xlane.xlu0 %495
      %vm497 = vcmp.eq.f32.partialorder %v494, %v496
      %v498 = vsel %vm497, %v493, inf
      %499 = vmin.xlane.f32.xlu0 %v498
      %v500 = vpop.xlane.xlu0 %499
      %v501 = vcvt.f32.s32 %v500
      %v502 = vcvt.f32.s32 %v496
      %v503 = vshll.u32 %v502, 16
      %v504 = vadd.s32 %v503, %v501
      %v505 = vsel %vm291, %v489, 2147483647
      %v506 = vand.u32 %v505, 65535
      %v507 = vshra.s32 %v505, 16
      %v508 = vcvt.s32.f32 %v506
      %v509 = vcvt.s32.f32 %v507
      %510 = vmin.xlane.f32.xlu0 %v509
      %v511 = vpop.xlane.xlu0 %510
      %vm512 = vcmp.eq.f32.partialorder %v509, %v511
      %v513 = vsel %vm512, %v508, inf
      %514 = vmin.xlane.f32.xlu0 %v513
      %v515 = vpop.xlane.xlu0 %514
      %v516 = vcvt.f32.s32 %v515
      %v517 = vcvt.f32.s32 %v511
      %v518 = vshll.u32 %v517, 16
      %v519 = vadd.s32 %v518, %v516
      %vm520 = vcmp.eq.s32.totalorder %v290, 4
      %v521 = vsel %vm520, %v504, %v474
      %v522 = vsel %vm520, %v519, %v475
      %vm523 = vcmp.eq.s32.totalorder %v290, %v504
      %vm524 = vcmp.eq.s32.totalorder %v290, %v519
      %v525 = vsel %vm523, inf, %v478
      %v526 = vsel %vm524, inf, %v479
      %v527 = vsel %vm291, %v525, inf
      %528 = vmin.xlane.f32.xlu0 %v527
      %v529 = vpop.xlane.xlu0 %528
      %v530 = vsel %vm291, %v526, inf
      %531 = vmin.xlane.f32.xlu0 %v530
      %v532 = vpop.xlane.xlu0 %531
      %vm533 = vcmp.eq.f32.partialorder %v525, %v529
      %vm534 = vcmp.eq.f32.partialorder %v526, %v532
      %v535 = vsel %vm533, %v290, 16
      %v536 = vsel %vm534, %v290, 16
      %v537 = vsel %vm291, %v535, 2147483647
      %v538 = vand.u32 %v537, 65535
      %v539 = vshra.s32 %v537, 16
      %v540 = vcvt.s32.f32 %v538
      %v541 = vcvt.s32.f32 %v539
      %542 = vmin.xlane.f32.xlu0 %v541
      %v543 = vpop.xlane.xlu0 %542
      %vm544 = vcmp.eq.f32.partialorder %v541, %v543
      %v545 = vsel %vm544, %v540, inf
      %546 = vmin.xlane.f32.xlu0 %v545
      %v547 = vpop.xlane.xlu0 %546
      %v548 = vcvt.f32.s32 %v547
      %v549 = vcvt.f32.s32 %v543
      %v550 = vshll.u32 %v549, 16
      %v551 = vadd.s32 %v550, %v548
      %v552 = vsel %vm291, %v536, 2147483647
      %v553 = vand.u32 %v552, 65535
      %v554 = vshra.s32 %v552, 16
      %v555 = vcvt.s32.f32 %v553
      %v556 = vcvt.s32.f32 %v554
      %557 = vmin.xlane.f32.xlu0 %v556
      %v558 = vpop.xlane.xlu0 %557
      %vm559 = vcmp.eq.f32.partialorder %v556, %v558
      %v560 = vsel %vm559, %v555, inf
      %561 = vmin.xlane.f32.xlu0 %v560
      %v562 = vpop.xlane.xlu0 %561
      %v563 = vcvt.f32.s32 %v562
      %v564 = vcvt.f32.s32 %v558
      %v565 = vshll.u32 %v564, 16
      %v566 = vadd.s32 %v565, %v563
      %vm567 = vcmp.eq.s32.totalorder %v290, 5
      %v568 = vsel %vm567, %v551, %v521
      %v569 = vsel %vm567, %v566, %v522
      %vm570 = vcmp.eq.s32.totalorder %v290, %v551
      %vm571 = vcmp.eq.s32.totalorder %v290, %v566
      %v572 = vsel %vm570, inf, %v525
      %v573 = vsel %vm571, inf, %v526
      %v574 = vsel %vm291, %v572, inf
      %575 = vmin.xlane.f32.xlu0 %v574
      %v576 = vpop.xlane.xlu0 %575
      %v577 = vsel %vm291, %v573, inf
      %578 = vmin.xlane.f32.xlu0 %v577
      %v579 = vpop.xlane.xlu0 %578
      %vm580 = vcmp.eq.f32.partialorder %v572, %v576
      %vm581 = vcmp.eq.f32.partialorder %v573, %v579
      %v582 = vsel %vm580, %v290, 16
      %v583 = vsel %vm581, %v290, 16
      %v584 = vsel %vm291, %v582, 2147483647
      %v585 = vand.u32 %v584, 65535
      %v586 = vshra.s32 %v584, 16
      %v587 = vcvt.s32.f32 %v585
      %v588 = vcvt.s32.f32 %v586
      %589 = vmin.xlane.f32.xlu0 %v588
      %v590 = vpop.xlane.xlu0 %589
      %vm591 = vcmp.eq.f32.partialorder %v588, %v590
      %v592 = vsel %vm591, %v587, inf
      %593 = vmin.xlane.f32.xlu0 %v592
      %v594 = vpop.xlane.xlu0 %593
      %v595 = vcvt.f32.s32 %v594
      %v596 = vcvt.f32.s32 %v590
      %v597 = vshll.u32 %v596, 16
      %v598 = vadd.s32 %v597, %v595
      %v599 = vsel %vm291, %v583, 2147483647
      %v600 = vand.u32 %v599, 65535
      %v601 = vshra.s32 %v599, 16
      %v602 = vcvt.s32.f32 %v600
      %v603 = vcvt.s32.f32 %v601
      %604 = vmin.xlane.f32.xlu0 %v603
      %v605 = vpop.xlane.xlu0 %604
      %vm606 = vcmp.eq.f32.partialorder %v603, %v605
      %v607 = vsel %vm606, %v602, inf
      %608 = vmin.xlane.f32.xlu0 %v607
      %v609 = vpop.xlane.xlu0 %608
      %v610 = vcvt.f32.s32 %v609
      %v611 = vcvt.f32.s32 %v605
      %v612 = vshll.u32 %v611, 16
      %v613 = vadd.s32 %v612, %v610
      %vm614 = vcmp.eq.s32.totalorder %v290, 6
      %v615 = vsel %vm614, %v598, %v568
      %v616 = vsel %vm614, %v613, %v569
      %vm617 = vcmp.eq.s32.totalorder %v290, %v598
      %vm618 = vcmp.eq.s32.totalorder %v290, %v613
      %v619 = vsel %vm617, inf, %v572
      %v620 = vsel %vm618, inf, %v573
      %v621 = vsel %vm291, %v619, inf
      %622 = vmin.xlane.f32.xlu0 %v621
      %v623 = vpop.xlane.xlu0 %622
      %v624 = vsel %vm291, %v620, inf
      %625 = vmin.xlane.f32.xlu0 %v624
      %v626 = vpop.xlane.xlu0 %625
      %vm627 = vcmp.eq.f32.partialorder %v619, %v623
      %vm628 = vcmp.eq.f32.partialorder %v620, %v626
      %v629 = vsel %vm627, %v290, 16
      %v630 = vsel %vm628, %v290, 16
      %v631 = vsel %vm291, %v629, 2147483647
      %v632 = vand.u32 %v631, 65535
      %v633 = vshra.s32 %v631, 16
      %v634 = vcvt.s32.f32 %v632
      %v635 = vcvt.s32.f32 %v633
      %636 = vmin.xlane.f32.xlu0 %v635
      %v637 = vpop.xlane.xlu0 %636
      %vm638 = vcmp.eq.f32.partialorder %v635, %v637
      %v639 = vsel %vm638, %v634, inf
      %640 = vmin.xlane.f32.xlu0 %v639
      %v641 = vpop.xlane.xlu0 %640
      %v642 = vcvt.f32.s32 %v641
      %v643 = vcvt.f32.s32 %v637
      %v644 = vshll.u32 %v643, 16
      %v645 = vadd.s32 %v644, %v642
      %v646 = vsel %vm291, %v630, 2147483647
      %v647 = vand.u32 %v646, 65535
      %v648 = vshra.s32 %v646, 16
      %v649 = vcvt.s32.f32 %v647
      %v650 = vcvt.s32.f32 %v648
      %651 = vmin.xlane.f32.xlu0 %v650
      %v652 = vpop.xlane.xlu0 %651
      %vm653 = vcmp.eq.f32.partialorder %v650, %v652
      %v654 = vsel %vm653, %v649, inf
      %655 = vmin.xlane.f32.xlu0 %v654
      %v656 = vpop.xlane.xlu0 %655
      %v657 = vcvt.f32.s32 %v656
      %v658 = vcvt.f32.s32 %v652
      %v659 = vshll.u32 %v658, 16
      %v660 = vadd.s32 %v659, %v657
      %vm661 = vcmp.eq.s32.totalorder %v290, 7
      %v662 = vsel %vm661, %v645, %v615
      %v663 = vsel %vm661, %v660, %v616
      %vm664 = vcmask 64512
      %665 = vst.msk [vmem:[%s201] sm:$0xff] %vm664, %v662
      %666 = vst.msk [vmem:[%s201 + $0x8] sm:$0xff] %vm664, %v663
      %s667 = smul.u32 2, %s18
      %p668 = scmp.lt.s32.totalorder %s17, 1
      %s669 = scalar_select %p668, %s17, 1
      %p670 = scmp.lt.s32.totalorder %s667, 1
      %s671 = scalar_select %p670, %s667, 1
      %s672 = smul.addr %s669, 2
      %s673 = sadd.s32 %s671, %s672
      %s674 = smul.addr %s673, 8
      %s675 = scalar_lea.vmem %s2, %s674
      // Predicated region
      $region29: #{transformer_apply.3} parent=27 // pred_check
        %p676 = pneg %p99
      $region30: #{transformer_apply.3} parent=27 // pred_check_branch
        %678 = sbr.rel (%p676) target = $region32
      $region31: #{transformer_apply.3} parent=27 // pred_region
        %s679 = smul.u32 2, %s18
      $region32: #{transformer_apply.3} parent=27 // pred_fallthru
        _
    $region28: #{transformer_apply.3} parent=5 // pred_fallthru
      _
    %p680 = scmp.le.s32.totalorder 2, %s8
    // Predicated region
    $region33: #{transformer_apply.3} parent=5 // pred_check
      %p681 = pneg %p680
    $region34: #{transformer_apply.3} parent=5 // pred_check_branch
      %683 = sbr.rel (%p681) target = $region36
    $region35: #{transformer_apply.3} parent=5 // pred_region
      %s684 = ssub.s32 %s8, 2
      // Predicated region
      $region37: #{transformer_apply.3} parent=35 // pred_check
        %p685 = pneg %p105
      $region38: #{transformer_apply.3} parent=35 // pred_check_branch
        %687 = sbr.rel (%p685) target = $region40
      $region39: #{transformer_apply.3} parent=35 // pred_region
        %s688 = smul.u32 2, %s20
        %p689 = scmp.lt.s32.totalorder %s19, 1
        %s690 = scalar_select %p689, %s19, 1
        %p691 = scmp.lt.s32.totalorder %s688, 1
        %s692 = scalar_select %p691, %s688, 1
        %s693 = smul.addr %s690, 2
        %s694 = sadd.s32 %s692, %s693
        %s695 = smul.addr %s694, 8
        %s696 = scalar_lea.vmem %s2, %s695
      $region40: #{transformer_apply.3} parent=35 // pred_fallthru
        _
    $region36: #{transformer_apply.3} parent=5 // pred_fallthru
      _
  $region6: #{transformer_apply.3} parent=0 // loop_footer
    %s12 = sadd.s32 1, %s8
  $region7: #{transformer_apply.3} parent=0 // loop_footer_branch
    %7 = sbr.rel target = $region3
  $region8: #{transformer_apply.3} parent=0 // loop_exit
    _

// kernel: transformer_apply.4
$region0: #{transformer_apply.4}
  #allocation0 [shape = 'u32[]', space=smem, size = 0x4, offset = 0x4, fixed_abs, tag = 'smem constant byte address 0x4 - core index']
  #allocation1 [shape = 'u32[72,128]{1,0:T(1,128)}', space=vmem, size = 0x9000, scoped, tag = 'internal scratch']
  %s0 = inlined_call_operand.vmem [shape: f32[2,16,16], index: 0, kind: input, shape index: {}]
  %s1 = inlined_call_operand.vmem [shape: bf16[16,32], index: 1, kind: input, shape index: {}]
  %s2 = inlined_call_operand.vmem [shape: bf16[32,96], index: 2, kind: input, shape index: {}]
  %s3 = inlined_call_operand.vmem [shape: f32[1,256], index: 3, kind: input, shape index: {}]
  %s4 = inlined_call_operand.vmem [shape: bf16[2,16,96], index: 4, kind: output, shape index: {}]
  %s5 = sld [smem:[#allocation0]]
  $region49: #{transformer_apply.4} parent=0
    _
  %s7 = ssub.s32 1, %s5
  %s8 = scalar_select 0, %s7, %s5
  loop: start=0, step=1, limit=4
  $region2: #{transformer_apply.4} parent=0 // loop_pre_header
    _
  $region3: #{transformer_apply.4} parent=0 // loop_header
    %s10 = sphi 0, %s14
    %p11 = scmp.ge.s32.totalorder %s10, 4
    %s17 = sphi 0, %s29
    %s18 = sphi 0, %s25
    %s19 = sphi 0, %s17
    %s20 = sphi 0, %s18
    %s21 = sphi 0, %s19
    %s22 = sphi 0, %s20
    %s34 = sphi 0, %s36
    %s37 = sphi 0, %s34
    %s38 = sphi 0, %s37
    %s54 = sphi 0, %s38
    %s58 = sphi 0, %s58
    %s60 = sphi 0, %s58
    %s61 = sphi 0, %s60
    %s75 = sphi 0, %s61
    %s79 = sphi 0, %s79
    %s81 = sphi 0, %s79
    %s82 = sphi 0, %s81
    %s96 = sphi 0, %s82
    %s100 = sphi 0, %s100
    %s102 = sphi 0, %s100
    %s103 = sphi 0, %s102
    %s117 = sphi 0, %s103
    %s125 = sphi 0, %s127
    %s128 = sphi 0, %s125
    %s129 = sphi 0, %s128
    %s145 = sphi 0, %s129
  $region4: #{transformer_apply.4} parent=0 // loop_header_branch
    %13 = sbr.rel (%p11) target = $region8
  $region5: #{transformer_apply.4} parent=0 // loop_body
    %s15 = ssub.s32 %s10, 1
    %s16 = ssub.s32 %s10, 2
    %s23 = sadd.s32 1, %s18
    %p24 = scmp.ge.s32.totalorder %s23, 1
    %s25 = scalar_select %p24, 0, %s23
    %s26 = sadd.s32 1, %s17
    %s27 = scalar_select %p24, %s26, %s17
    %p28 = scmp.ge.s32.totalorder %s27, 2
    %s29 = scalar_select %p28, 0, %s27
    %s30 = ssub.s32 %s17, %s29
    %s31 = ssub.s32 %s18, %s25
    %s32 = sor.u32 %s30, %s31
    %p33 = scmp.eq.s32.totalorder %s32, 0
    %s35 = sadd.s32 %s34, 1
    %s36 = scalar_select %p33, %s34, %s35
    %p39 = pneg %p33
    %p40 = scmp.eq.s32.totalorder %s10, 1
    %p41 = por %p39, %p40
    %p42 = scmp.ne.s32.totalorder %s34, %s37
    %p43 = scmp.eq.s32.totalorder %s10, 0
    %p44 = por %p42, %p43
    %p45 = scmp.ne.s32.totalorder %s34, %s37
    %p46 = scmp.eq.s32.totalorder %s15, 1
    %p47 = por %p45, %p46
    %p48 = scmp.ne.s32.totalorder %s37, %s38
    %p49 = scmp.eq.s32.totalorder %s15, 0
    %p50 = por %p48, %p49
    %p51 = scmp.ne.s32.totalorder %s37, %s38
    %p52 = scmp.eq.s32.totalorder %s16, 1
    %p53 = por %p51, %p52
    %p55 = scmp.ne.s32.totalorder %s38, %s54
    %p56 = scmp.eq.s32.totalorder %s16, 0
    %p57 = por %p55, %p56
    %s59 = sadd.s32 %s58, 1
    %p62 = scmp.eq.s32.totalorder %s10, 1
    %p63 = scmp.ne.s32.totalorder %s58, %s60
    %p64 = scmp.eq.s32.totalorder %s10, 0
    %p65 = por %p63, %p64
    %p66 = scmp.ne.s32.totalorder %s58, %s60
    %p67 = scmp.eq.s32.totalorder %s15, 1
    %p68 = por %p66, %p67
    %p69 = scmp.ne.s32.totalorder %s60, %s61
    %p70 = scmp.eq.s32.totalorder %s15, 0
    %p71 = por %p69, %p70
    %p72 = scmp.ne.s32.totalorder %s60, %s61
    %p73 = scmp.eq.s32.totalorder %s16, 1
    %p74 = por %p72, %p73
    %p76 = scmp.ne.s32.totalorder %s61, %s75
    %p77 = scmp.eq.s32.totalorder %s16, 0
    %p78 = por %p76, %p77
    %s80 = sadd.s32 %s79, 1
    %p83 = scmp.eq.s32.totalorder %s10, 1
    %p84 = scmp.ne.s32.totalorder %s79, %s81
    %p85 = scmp.eq.s32.totalorder %s10, 0
    %p86 = por %p84, %p85
    %p87 = scmp.ne.s32.totalorder %s79, %s81
    %p88 = scmp.eq.s32.totalorder %s15, 1
    %p89 = por %p87, %p88
    %p90 = scmp.ne.s32.totalorder %s81, %s82
    %p91 = scmp.eq.s32.totalorder %s15, 0
    %p92 = por %p90, %p91
    %p93 = scmp.ne.s32.totalorder %s81, %s82
    %p94 = scmp.eq.s32.totalorder %s16, 1
    %p95 = por %p93, %p94
    %p97 = scmp.ne.s32.totalorder %s82, %s96
    %p98 = scmp.eq.s32.totalorder %s16, 0
    %p99 = por %p97, %p98
    %s101 = sadd.s32 %s100, 1
    %p104 = scmp.eq.s32.totalorder %s10, 1
    %p105 = scmp.ne.s32.totalorder %s100, %s102
    %p106 = scmp.eq.s32.totalorder %s10, 0
    %p107 = por %p105, %p106
    %p108 = scmp.ne.s32.totalorder %s100, %s102
    %p109 = scmp.eq.s32.totalorder %s15, 1
    %p110 = por %p108, %p109
    %p111 = scmp.ne.s32.totalorder %s102, %s103
    %p112 = scmp.eq.s32.totalorder %s15, 0
    %p113 = por %p111, %p112
    %p114 = scmp.ne.s32.totalorder %s102, %s103
    %p115 = scmp.eq.s32.totalorder %s16, 1
    %p116 = por %p114, %p115
    %p118 = scmp.ne.s32.totalorder %s103, %s117
    %p119 = scmp.eq.s32.totalorder %s16, 0
    %p120 = por %p118, %p119
    %s121 = ssub.s32 %s17, %s29
    %s122 = ssub.s32 %s18, %s25
    %s123 = sor.u32 %s121, %s122
    %p124 = scmp.eq.s32.totalorder %s123, 0
    %s126 = sadd.s32 %s125, 1
    %s127 = scalar_select %p124, %s125, %s126
    %p130 = pneg %p124
    %p131 = scmp.eq.s32.totalorder %s10, 1
    %p132 = por %p130, %p131
    %p133 = scmp.ne.s32.totalorder %s125, %s128
    %p134 = scmp.eq.s32.totalorder %s10, 0
    %p135 = por %p133, %p134
    %p136 = scmp.ne.s32.totalorder %s125, %s128
    %p137 = scmp.eq.s32.totalorder %s15, 1
    %p138 = por %p136, %p137
    %p139 = scmp.ne.s32.totalorder %s128, %s129
    %p140 = scmp.eq.s32.totalorder %s15, 0
    %p141 = por %p139, %p140
    %p142 = scmp.ne.s32.totalorder %s128, %s129
    %p143 = scmp.eq.s32.totalorder %s16, 1
    %p144 = por %p142, %p143
    %p146 = scmp.ne.s32.totalorder %s129, %s145
    %p147 = scmp.eq.s32.totalorder %s16, 0
    %p148 = por %p146, %p147
    %p149 = scmp.le.s32.totalorder 1, %s10
    %p150 = scmp.lt.s32.totalorder %s10, 3
    %p151 = pnand %p149, %p150
    %p152 = pneg %p151
    // Predicated region
    $region9: #{transformer_apply.4} parent=5 // pred_check
      _
    $region10: #{transformer_apply.4} parent=5 // pred_check_branch
      %154 = sbr.rel (%p151) target = $region12
    $region11: #{transformer_apply.4} parent=5 // pred_region
      %s155 = ssub.s32 %s10, 1
      // Predicated region
      $region13: #{transformer_apply.4} parent=11 // pred_check
        %p156 = pneg %p71
      $region14: #{transformer_apply.4} parent=11 // pred_check_branch
        %158 = sbr.rel (%p156) target = $region16
      $region15: #{transformer_apply.4} parent=11 // pred_region
        _
      $region16: #{transformer_apply.4} parent=11 // pred_fallthru
        _
      // Predicated region
      $region17: #{transformer_apply.4} parent=11 // pred_check
        %p159 = pneg %p92
      $region18: #{transformer_apply.4} parent=11 // pred_check_branch
        %161 = sbr.rel (%p159) target = $region20
      $region19: #{transformer_apply.4} parent=11 // pred_region
        _
      $region20: #{transformer_apply.4} parent=11 // pred_fallthru
        _
      // Predicated region
      $region21: #{transformer_apply.4} parent=11 // pred_check
        %p162 = pneg %p113
      $region22: #{transformer_apply.4} parent=11 // pred_check_branch
        %164 = sbr.rel (%p162) target = $region24
      $region23: #{transformer_apply.4} parent=11 // pred_region
        _
      $region24: #{transformer_apply.4} parent=11 // pred_fallthru
        _
    $region12: #{transformer_apply.4} parent=5 // pred_fallthru
      _
    %p165 = scmp.lt.s32.totalorder %s10, 2
    // Predicated region
    $region25: #{transformer_apply.4} parent=5 // pred_check
      %p166 = pneg %p165
    $region26: #{transformer_apply.4} parent=5 // pred_check_branch
      %168 = sbr.rel (%p166) target = $region28
    $region27: #{transformer_apply.4} parent=5 // pred_region
      // Predicated region
      $region29: #{transformer_apply.4} parent=27 // pred_check
        %p169 = pneg %p44
      $region30: #{transformer_apply.4} parent=27 // pred_check_branch
        %171 = sbr.rel (%p169) target = $region32
      $region31: #{transformer_apply.4} parent=27 // pred_region
        %s172 = smul.u32 2, %s18
        %p173 = scmp.lt.s32.totalorder %s17, 1
        %s174 = scalar_select %p173, %s17, 1
        %p175 = scmp.lt.s32.totalorder %s172, 1
        %s176 = scalar_select %p175, %s172, 1
        %s177 = smul.addr %s174, 2
        %s178 = sadd.s32 %s176, %s177
        %s179 = smul.addr %s178, 8
        %s180 = scalar_lea.vmem %s0, %s179
        %s181 = smul.u32 2, %s18
      $region32: #{transformer_apply.4} parent=27 // pred_fallthru
        _
    $region28: #{transformer_apply.4} parent=5 // pred_fallthru
      _
    %p182 = scmp.le.s32.totalorder 1, %s10
    %p183 = scmp.lt.s32.totalorder %s10, 3
    %p184 = pnand %p182, %p183
    %p185 = pneg %p184
    // Predicated region
    $region33: #{transformer_apply.4} parent=5 // pred_check
      _
    $region34: #{transformer_apply.4} parent=5 // pred_check_branch
      %187 = sbr.rel (%p184) target = $region36
    $region35: #{transformer_apply.4} parent=5 // pred_region
      %s188 = ssub.s32 %s10, 1
      %s189 = smul.u32 2, %s20
      %p190 = scmp.lt.s32.totalorder %s19, 1
      %s191 = scalar_select %p190, %s19, 1
      %p192 = scmp.lt.s32.totalorder %s189, 1
      %s193 = scalar_select %p192, %s189, 1
      %s194 = smul.addr %s191, 2
      %s195 = sadd.s32 %s193, %s194
      %s196 = smul.addr %s195, 8
      %s197 = scalar_lea.vmem %s0, %s196
      %p198 = pneg %p50
      %p199 = pneg %p47
      %p200 = pneg %p71
      %p201 = pneg %p68
      %p202 = pneg %p92
      %p203 = pneg %p89
      %p204 = pneg %p113
      %p205 = pneg %p110
      %p206 = pneg %p141
      %p207 = pneg %p138
      %s208 = smul.u32 2, %s20
      %p209 = scmp.lt.s32.totalorder %s19, 1
      %s210 = scalar_select %p209, %s19, 1
      %p211 = scmp.lt.s32.totalorder %s208, 1
      %s212 = scalar_select %p211, %s208, 1
      %s213 = smul.addr %s210, 2
      %s214 = sadd.s32 %s212, %s213
      %s215 = smul.addr %s214, 4
      %s216 = scalar_lea.vmem %s4, %s215
      %s217 = smul.u32 2, %s20
      %p218 = scmp.lt.s32.totalorder %s19, 1
      %s219 = scalar_select %p218, %s19, 1
      %p220 = scmp.lt.s32.totalorder %s217, 1
      %s221 = scalar_select %p220, %s217, 1
      %s222 = smul.addr %s219, 2
      %s223 = sadd.s32 %s221, %s222
      %s224 = smul.addr %s223, 8
      %s225 = scalar_lea.vmem %s0, %s224
      %s226 = smul.u32 2, %s20
      %s227 = smul.u32 2, %s20
      %p228 = scmp.lt.s32.totalorder %s19, 1
      %s229 = scalar_select %p228, %s19, 1
      %p230 = scmp.lt.s32.totalorder %s227, 1
      %s231 = scalar_select %p230, %s227, 1
      %s232 = smul.addr %s229, 2
      %s233 = sadd.s32 %s231, %s232
      %s234 = smul.addr %s233, 4
      %s235 = scalar_lea.vmem %s4, %s234
      %s236 = smul.u32 2, %s20
      %v238 = vld [vmem:[%s3] sm:$0x1]
      %v239 = vld [vmem:[%s3 + $0x1] sm:$0x1]
      %v240 = vld [vmem:[%s225] sm:$0xff]
      %v241 = vld [vmem:[%s225 + $0x8] sm:$0xff]
      %v242 = vpack.c.bf16 %v241, %v240
      %v243 = vld [vmem:[%s1] sm:$0xf]
      %v244 = vld [vmem:[%s1 + $0x4] sm:$0xf]
      %v246 = vperm.slane %v238, 0
      %v250 = vunpack.c.l.b16 %v243
      %v251 = vunpack.c.l.b16 %v244
      %v252 = vpack.c.b16 %v251, %v250
      %vm254 = vcmask 130048
      %v256 = vsel %vm254, %v242, 0
      %258 = vmatpush.bf16.msra.mxu0 0
      %259 = vmatpush.bf16.msra.mxu0 0
      %260 = vmatpush.bf16.msra.mxu0 0
      %261 = vmatpush.bf16.msra.mxu0 0
      %262 = vmatpush.bf16.msra.mxu0 0
      %263 = vmatpush.bf16.msra.mxu0 0
      %264 = vmatpush.bf16.msra.mxu0 0
      %265 = vmatpush.bf16.msra.mxu0 %v252
      %266 = vmatmul.bf16.gmra.mxu0 %v256
      %v267 = vpop.f32.mrf.mxu0
      %v268 = vadd.f32 %v246, %v267
      %v269 = vpop.f32.mrf.mxu0
      %v270 = vadd.f32 %v246, %v269
      %271 = vdwg.mxu0
      %v272 = vpack.c.bf16 %v270, %v268
      %v273 = vld [vmem:[%s2] sm:$0xf]
      %v274 = vld [vmem:[%s2 + $0x4] sm:$0xf]
      %v275 = vld [vmem:[%s2 + $0x8] sm:$0xf]
      %v276 = vld [vmem:[%s2 + $0xc] sm:$0xf]
      %v278 = vperm.slane %v239, 0
      %v284 = vunpack.c.l.b16 %v273
      %v285 = vunpack.c.l.b16 %v274
      %v286 = vunpack.c.l.b16 %v275
      %v287 = vunpack.c.l.b16 %v276
      %v288 = vpack.c.b16 %v285, %v284
      %v289 = vpack.c.b16 %v287, %v286
      %vm292 = vcmask 261120
      %v294 = vsel %vm292, %v272, 0
      %296 = vmatpush.bf16.msra.mxu0 0
      %297 = vmatpush.bf16.msra.mxu0 0
      %298 = vmatpush.bf16.msra.mxu0 0
      %299 = vmatpush.bf16.msra.mxu0 0
      %300 = vmatpush.bf16.msra.mxu0 0
      %301 = vmatpush.bf16.msra.mxu0 0
      %302 = vmatpush.bf16.msra.mxu0 %v289
      %303 = vmatpush.bf16.msra.mxu0 %v288
      %304 = vmatmul.bf16.gmra.mxu0 %v294
      %v305 = vpop.f32.mrf.mxu0
      %v306 = vadd.f32 %v278, %v305
      %v307 = vpop.f32.mrf.mxu0
      %v308 = vadd.f32 %v278, %v307
      %309 = vdwg.mxu0
      %v310 = vpack.c.bf16 %v306, %v306
      %v311 = vpack.c.bf16 %v308, %v308
      %vm312 = vcmask 781312
      %313 = vst.msk [vmem:[%s235] sm:$0xf] %vm312, %v310
      %314 = vst.msk [vmem:[%s235 + $0x4] sm:$0xf] %vm312, %v311
      %s315 = smul.u32 2, %s20
      %p316 = scmp.lt.s32.totalorder %s19, 1
      %s317 = scalar_select %p316, %s19, 1
      %p318 = scmp.lt.s32.totalorder %s315, 1
      %s319 = scalar_select %p318, %s315, 1
      %s320 = smul.addr %s317, 2
      %s321 = sadd.s32 %s319, %s320
      %s322 = smul.addr %s321, 4
      %s323 = scalar_lea.vmem %s4, %s322
      // Predicated region
      $region37: #{transformer_apply.4} parent=35 // pred_check
        %p324 = pneg %p138
      $region38: #{transformer_apply.4} parent=35 // pred_check_branch
        %326 = sbr.rel (%p324) target = $region40
      $region39: #{transformer_apply.4} parent=35 // pred_region
        %s327 = smul.u32 2, %s20
      $region40: #{transformer_apply.4} parent=35 // pred_fallthru
        _
    $region36: #{transformer_apply.4} parent=5 // pred_fallthru
      _
    %p328 = scmp.le.s32.totalorder 2, %s10
    // Predicated region
    $region41: #{transformer_apply.4} parent=5 // pred_check
      %p329 = pneg %p328
    $region42: #{transformer_apply.4} parent=5 // pred_check_branch
      %331 = sbr.rel (%p329) target = $region44
    $region43: #{transformer_apply.4} parent=5 // pred_region
      %s332 = ssub.s32 %s10, 2
      // Predicated region
      $region45: #{transformer_apply.4} parent=43 // pred_check
        %p333 = pneg %p144
      $region46: #{transformer_apply.4} parent=43 // pred_check_branch
        %335 = sbr.rel (%p333) target = $region48
      $region47: #{transformer_apply.4} parent=43 // pred_region
        %s336 = smul.u32 2, %s22
        %p337 = scmp.lt.s32.totalorder %s21, 1
        %s338 = scalar_select %p337, %s21, 1
        %p339 = scmp.lt.s32.totalorder %s336, 1
        %s340 = scalar_select %p339, %s336, 1
        %s341 = smul.addr %s338, 2
        %s342 = sadd.s32 %s340, %s341
        %s343 = smul.addr %s342, 4
        %s344 = scalar_lea.vmem %s4, %s343
      $region48: #{transformer_apply.4} parent=43 // pred_fallthru
        _
    $region44: #{transformer_apply.4} parent=5 // pred_fallthru
      _
  $region6: #{transformer_apply.4} parent=0 // loop_footer
    %s14 = sadd.s32 1, %s10
  $region7: #{transformer_apply.4} parent=0 // loop_footer_branch
    %9 = sbr.rel target = $region3
  $region8: #{transformer_apply.4} parent=0 // loop_exit
    _

// kernel: transformer_apply.5
$region0: #{transformer_apply.5}
  #allocation0 [shape = 'u32[]', space=smem, size = 0x4, offset = 0x4, fixed_abs, tag = 'smem constant byte address 0x4 - core index']
  #allocation1 [shape = 'u32[72,128]{1,0:T(1,128)}', space=vmem, size = 0x9000, scoped, tag = 'internal scratch']
  %s0 = inlined_call_operand.vmem [shape: f32[2,16,16], index: 0, kind: input, shape index: {}]
  %s1 = inlined_call_operand.vmem [shape: bf16[2,16,32], index: 1, kind: input, shape index: {}]
  %s2 = inlined_call_operand.vmem [shape: bf16[2,16,32], index: 2, kind: input, shape index: {}]
  %s3 = inlined_call_operand.vmem [shape: f32[2,16,3], index: 3, kind: input, shape index: {}]
  %s4 = inlined_call_operand.vmem [shape: bf16[2,16,8,32], index: 4, kind: input, shape index: {}]
  %s5 = inlined_call_operand.vmem [shape: f32[2,16,8,3], index: 5, kind: input, shape index: {}]
  %s6 = inlined_call_operand.vmem [shape: bf16[3,16], index: 6, kind: input, shape index: {}]
  %s7 = inlined_call_operand.vmem [shape: bf16[16,32], index: 7, kind: input, shape index: {}]
  %s8 = inlined_call_operand.vmem [shape: bf16[32,128], index: 8, kind: input, shape index: {}]
  %s9 = inlined_call_operand.vmem [shape: bf16[128,32], index: 9, kind: input, shape index: {}]
  %s10 = inlined_call_operand.vmem [shape: bf16[32,16], index: 10, kind: input, shape index: {}]
  %s11 = inlined_call_operand.vmem [shape: f32[1,640], index: 11, kind: input, shape index: {}]
  %s12 = inlined_call_operand.vmem [shape: f32[2,16,16], index: 12, kind: output, shape index: {}]
  %s13 = sld [smem:[#allocation0]]
  $region81: #{transformer_apply.5} parent=0
    _
  %s15 = ssub.s32 1, %s13
  %s16 = scalar_select 0, %s15, %s13
  loop: start=0, step=1, limit=4
  $region2: #{transformer_apply.5} parent=0 // loop_pre_header
    _
  $region3: #{transformer_apply.5} parent=0 // loop_header
    %s18 = sphi 0, %s22
    %p19 = scmp.ge.s32.totalorder %s18, 4
    %s25 = sphi 0, %s37
    %s26 = sphi 0, %s33
    %s27 = sphi 0, %s25
    %s28 = sphi 0, %s26
    %s29 = sphi 0, %s27
    %s30 = sphi 0, %s28
    %s42 = sphi 0, %s44
    %s45 = sphi 0, %s42
    %s46 = sphi 0, %s45
    %s62 = sphi 0, %s46
    %s70 = sphi 0, %s72
    %s73 = sphi 0, %s70
    %s74 = sphi 0, %s73
    %s90 = sphi 0, %s74
    %s98 = sphi 0, %s100
    %s101 = sphi 0, %s98
    %s102 = sphi 0, %s101
    %s118 = sphi 0, %s102
    %s126 = sphi 0, %s128
    %s129 = sphi 0, %s126
    %s130 = sphi 0, %s129
    %s146 = sphi 0, %s130
    %s154 = sphi 0, %s156
    %s157 = sphi 0, %s154
    %s158 = sphi 0, %s157
    %s174 = sphi 0, %s158
    %s182 = sphi 0, %s184
    %s185 = sphi 0, %s182
    %s186 = sphi 0, %s185
    %s202 = sphi 0, %s186
    %s206 = sphi 0, %s206
    %s208 = sphi 0, %s206
    %s209 = sphi 0, %s208
    %s223 = sphi 0, %s209
    %s227 = sphi 0, %s227
    %s229 = sphi 0, %s227
    %s230 = sphi 0, %s229
    %s244 = sphi 0, %s230
    %s248 = sphi 0, %s248
    %s250 = sphi 0, %s248
    %s251 = sphi 0, %s250
    %s265 = sphi 0, %s251
    %s269 = sphi 0, %s269
    %s271 = sphi 0, %s269
    %s272 = sphi 0, %s271
    %s286 = sphi 0, %s272
    %s290 = sphi 0, %s290
    %s292 = sphi 0, %s290
    %s293 = sphi 0, %s292
    %s307 = sphi 0, %s293
    %s311 = sphi 0, %s311
    %s313 = sphi 0, %s311
    %s314 = sphi 0, %s313
    %s328 = sphi 0, %s314
    %s336 = sphi 0, %s338
    %s339 = sphi 0, %s336
    %s340 = sphi 0, %s339
    %s356 = sphi 0, %s340
  $region4: #{transformer_apply.5} parent=0 // loop_header_branch
    %21 = sbr.rel (%p19) target = $region8
  $region5: #{transformer_apply.5} parent=0 // loop_body
    %s23 = ssub.s32 %s18, 1
    %s24 = ssub.s32 %s18, 2
    %s31 = sadd.s32 1, %s26
    %p32 = scmp.ge.s32.totalorder %s31, 1
    %s33 = scalar_select %p32, 0, %s31
    %s34 = sadd.s32 1, %s25
    %s35 = scalar_select %p32, %s34, %s25
    %p36 = scmp.ge.s32.totalorder %s35, 2
    %s37 = scalar_select %p36, 0, %s35
    %s38 = ssub.s32 %s25, %s37
    %s39 = ssub.s32 %s26, %s33
    %s40 = sor.u32 %s38, %s39
    %p41 = scmp.eq.s32.totalorder %s40, 0
    %s43 = sadd.s32 %s42, 1
    %s44 = scalar_select %p41, %s42, %s43
    %p47 = pneg %p41
    %p48 = scmp.eq.s32.totalorder %s18, 1
    %p49 = por %p47, %p48
    %p50 = scmp.ne.s32.totalorder %s42, %s45
    %p51 = scmp.eq.s32.totalorder %s18, 0
    %p52 = por %p50, %p51
    %p53 = scmp.ne.s32.totalorder %s42, %s45
    %p54 = scmp.eq.s32.totalorder %s23, 1
    %p55 = por %p53, %p54
    %p56 = scmp.ne.s32.totalorder %s45, %s46
    %p57 = scmp.eq.s32.totalorder %s23, 0
    %p58 = por %p56, %p57
    %p59 = scmp.ne.s32.totalorder %s45, %s46
    %p60 = scmp.eq.s32.totalorder %s24, 1
    %p61 = por %p59, %p60
    %p63 = scmp.ne.s32.totalorder %s46, %s62
    %p64 = scmp.eq.s32.totalorder %s24, 0
    %p65 = por %p63, %p64
    %s66 = ssub.s32 %s25, %s37
    %s67 = ssub.s32 %s26, %s33
    %s68 = sor.u32 %s66, %s67
    %p69 = scmp.eq.s32.totalorder %s68, 0
    %s71 = sadd.s32 %s70, 1
    %s72 = scalar_select %p69, %s70, %s71
    %p75 = pneg %p69
    %p76 = scmp.eq.s32.totalorder %s18, 1
    %p77 = por %p75, %p76
    %p78 = scmp.ne.s32.totalorder %s70, %s73
    %p79 = scmp.eq.s32.totalorder %s18, 0
    %p80 = por %p78, %p79
    %p81 = scmp.ne.s32.totalorder %s70, %s73
    %p82 = scmp.eq.s32.totalorder %s23, 1
    %p83 = por %p81, %p82
    %p84 = scmp.ne.s32.totalorder %s73, %s74
    %p85 = scmp.eq.s32.totalorder %s23, 0
    %p86 = por %p84, %p85
    %p87 = scmp.ne.s32.totalorder %s73, %s74
    %p88 = scmp.eq.s32.totalorder %s24, 1
    %p89 = por %p87, %p88
    %p91 = scmp.ne.s32.totalorder %s74, %s90
    %p92 = scmp.eq.s32.totalorder %s24, 0
    %p93 = por %p91, %p92
    %s94 = ssub.s32 %s25, %s37
    %s95 = ssub.s32 %s26, %s33
    %s96 = sor.u32 %s94, %s95
    %p97 = scmp.eq.s32.totalorder %s96, 0
    %s99 = sadd.s32 %s98, 1
    %s100 = scalar_select %p97, %s98, %s99
    %p103 = pneg %p97
    %p104 = scmp.eq.s32.totalorder %s18, 1
    %p105 = por %p103, %p104
    %p106 = scmp.ne.s32.totalorder %s98, %s101
    %p107 = scmp.eq.s32.totalorder %s18, 0
    %p108 = por %p106, %p107
    %p109 = scmp.ne.s32.totalorder %s98, %s101
    %p110 = scmp.eq.s32.totalorder %s23, 1
    %p111 = por %p109, %p110
    %p112 = scmp.ne.s32.totalorder %s101, %s102
    %p113 = scmp.eq.s32.totalorder %s23, 0
    %p114 = por %p112, %p113
    %p115 = scmp.ne.s32.totalorder %s101, %s102
    %p116 = scmp.eq.s32.totalorder %s24, 1
    %p117 = por %p115, %p116
    %p119 = scmp.ne.s32.totalorder %s102, %s118
    %p120 = scmp.eq.s32.totalorder %s24, 0
    %p121 = por %p119, %p120
    %s122 = ssub.s32 %s25, %s37
    %s123 = ssub.s32 %s26, %s33
    %s124 = sor.u32 %s122, %s123
    %p125 = scmp.eq.s32.totalorder %s124, 0
    %s127 = sadd.s32 %s126, 1
    %s128 = scalar_select %p125, %s126, %s127
    %p131 = pneg %p125
    %p132 = scmp.eq.s32.totalorder %s18, 1
    %p133 = por %p131, %p132
    %p134 = scmp.ne.s32.totalorder %s126, %s129
    %p135 = scmp.eq.s32.totalorder %s18, 0
    %p136 = por %p134, %p135
    %p137 = scmp.ne.s32.totalorder %s126, %s129
    %p138 = scmp.eq.s32.totalorder %s23, 1
    %p139 = por %p137, %p138
    %p140 = scmp.ne.s32.totalorder %s129, %s130
    %p141 = scmp.eq.s32.totalorder %s23, 0
    %p142 = por %p140, %p141
    %p143 = scmp.ne.s32.totalorder %s129, %s130
    %p144 = scmp.eq.s32.totalorder %s24, 1
    %p145 = por %p143, %p144
    %p147 = scmp.ne.s32.totalorder %s130, %s146
    %p148 = scmp.eq.s32.totalorder %s24, 0
    %p149 = por %p147, %p148
    %s150 = ssub.s32 %s25, %s37
    %s151 = ssub.s32 %s26, %s33
    %s152 = sor.u32 %s150, %s151
    %p153 = scmp.eq.s32.totalorder %s152, 0
    %s155 = sadd.s32 %s154, 1
    %s156 = scalar_select %p153, %s154, %s155
    %p159 = pneg %p153
    %p160 = scmp.eq.s32.totalorder %s18, 1
    %p161 = por %p159, %p160
    %p162 = scmp.ne.s32.totalorder %s154, %s157
    %p163 = scmp.eq.s32.totalorder %s18, 0
    %p164 = por %p162, %p163
    %p165 = scmp.ne.s32.totalorder %s154, %s157
    %p166 = scmp.eq.s32.totalorder %s23, 1
    %p167 = por %p165, %p166
    %p168 = scmp.ne.s32.totalorder %s157, %s158
    %p169 = scmp.eq.s32.totalorder %s23, 0
    %p170 = por %p168, %p169
    %p171 = scmp.ne.s32.totalorder %s157, %s158
    %p172 = scmp.eq.s32.totalorder %s24, 1
    %p173 = por %p171, %p172
    %p175 = scmp.ne.s32.totalorder %s158, %s174
    %p176 = scmp.eq.s32.totalorder %s24, 0
    %p177 = por %p175, %p176
    %s178 = ssub.s32 %s25, %s37
    %s179 = ssub.s32 %s26, %s33
    %s180 = sor.u32 %s178, %s179
    %p181 = scmp.eq.s32.totalorder %s180, 0
    %s183 = sadd.s32 %s182, 1
    %s184 = scalar_select %p181, %s182, %s183
    %p187 = pneg %p181
    %p188 = scmp.eq.s32.totalorder %s18, 1
    %p189 = por %p187, %p188
    %p190 = scmp.ne.s32.totalorder %s182, %s185
    %p191 = scmp.eq.s32.totalorder %s18, 0
    %p192 = por %p190, %p191
    %p193 = scmp.ne.s32.totalorder %s182, %s185
    %p194 = scmp.eq.s32.totalorder %s23, 1
    %p195 = por %p193, %p194
    %p196 = scmp.ne.s32.totalorder %s185, %s186
    %p197 = scmp.eq.s32.totalorder %s23, 0
    %p198 = por %p196, %p197
    %p199 = scmp.ne.s32.totalorder %s185, %s186
    %p200 = scmp.eq.s32.totalorder %s24, 1
    %p201 = por %p199, %p200
    %p203 = scmp.ne.s32.totalorder %s186, %s202
    %p204 = scmp.eq.s32.totalorder %s24, 0
    %p205 = por %p203, %p204
    %s207 = sadd.s32 %s206, 1
    %p210 = scmp.eq.s32.totalorder %s18, 1
    %p211 = scmp.ne.s32.totalorder %s206, %s208
    %p212 = scmp.eq.s32.totalorder %s18, 0
    %p213 = por %p211, %p212
    %p214 = scmp.ne.s32.totalorder %s206, %s208
    %p215 = scmp.eq.s32.totalorder %s23, 1
    %p216 = por %p214, %p215
    %p217 = scmp.ne.s32.totalorder %s208, %s209
    %p218 = scmp.eq.s32.totalorder %s23, 0
    %p219 = por %p217, %p218
    %p220 = scmp.ne.s32.totalorder %s208, %s209
    %p221 = scmp.eq.s32.totalorder %s24, 1
    %p222 = por %p220, %p221
    %p224 = scmp.ne.s32.totalorder %s209, %s223
    %p225 = scmp.eq.s32.totalorder %s24, 0
    %p226 = por %p224, %p225
    %s228 = sadd.s32 %s227, 1
    %p231 = scmp.eq.s32.totalorder %s18, 1
    %p232 = scmp.ne.s32.totalorder %s227, %s229
    %p233 = scmp.eq.s32.totalorder %s18, 0
    %p234 = por %p232, %p233
    %p235 = scmp.ne.s32.totalorder %s227, %s229
    %p236 = scmp.eq.s32.totalorder %s23, 1
    %p237 = por %p235, %p236
    %p238 = scmp.ne.s32.totalorder %s229, %s230
    %p239 = scmp.eq.s32.totalorder %s23, 0
    %p240 = por %p238, %p239
    %p241 = scmp.ne.s32.totalorder %s229, %s230
    %p242 = scmp.eq.s32.totalorder %s24, 1
    %p243 = por %p241, %p242
    %p245 = scmp.ne.s32.totalorder %s230, %s244
    %p246 = scmp.eq.s32.totalorder %s24, 0
    %p247 = por %p245, %p246
    %s249 = sadd.s32 %s248, 1
    %p252 = scmp.eq.s32.totalorder %s18, 1
    %p253 = scmp.ne.s32.totalorder %s248, %s250
    %p254 = scmp.eq.s32.totalorder %s18, 0
    %p255 = por %p253, %p254
    %p256 = scmp.ne.s32.totalorder %s248, %s250
    %p257 = scmp.eq.s32.totalorder %s23, 1
    %p258 = por %p256, %p257
    %p259 = scmp.ne.s32.totalorder %s250, %s251
    %p260 = scmp.eq.s32.totalorder %s23, 0
    %p261 = por %p259, %p260
    %p262 = scmp.ne.s32.totalorder %s250, %s251
    %p263 = scmp.eq.s32.totalorder %s24, 1
    %p264 = por %p262, %p263
    %p266 = scmp.ne.s32.totalorder %s251, %s265
    %p267 = scmp.eq.s32.totalorder %s24, 0
    %p268 = por %p266, %p267
    %s270 = sadd.s32 %s269, 1
    %p273 = scmp.eq.s32.totalorder %s18, 1
    %p274 = scmp.ne.s32.totalorder %s269, %s271
    %p275 = scmp.eq.s32.totalorder %s18, 0
    %p276 = por %p274, %p275
    %p277 = scmp.ne.s32.totalorder %s269, %s271
    %p278 = scmp.eq.s32.totalorder %s23, 1
    %p279 = por %p277, %p278
    %p280 = scmp.ne.s32.totalorder %s271, %s272
    %p281 = scmp.eq.s32.totalorder %s23, 0
    %p282 = por %p280, %p281
    %p283 = scmp.ne.s32.totalorder %s271, %s272
    %p284 = scmp.eq.s32.totalorder %s24, 1
    %p285 = por %p283, %p284
    %p287 = scmp.ne.s32.totalorder %s272, %s286
    %p288 = scmp.eq.s32.totalorder %s24, 0
    %p289 = por %p287, %p288
    %s291 = sadd.s32 %s290, 1
    %p294 = scmp.eq.s32.totalorder %s18, 1
    %p295 = scmp.ne.s32.totalorder %s290, %s292
    %p296 = scmp.eq.s32.totalorder %s18, 0
    %p297 = por %p295, %p296
    %p298 = scmp.ne.s32.totalorder %s290, %s292
    %p299 = scmp.eq.s32.totalorder %s23, 1
    %p300 = por %p298, %p299
    %p301 = scmp.ne.s32.totalorder %s292, %s293
    %p302 = scmp.eq.s32.totalorder %s23, 0
    %p303 = por %p301, %p302
    %p304 = scmp.ne.s32.totalorder %s292, %s293
    %p305 = scmp.eq.s32.totalorder %s24, 1
    %p306 = por %p304, %p305
    %p308 = scmp.ne.s32.totalorder %s293, %s307
    %p309 = scmp.eq.s32.totalorder %s24, 0
    %p310 = por %p308, %p309
    %s312 = sadd.s32 %s311, 1
    %p315 = scmp.eq.s32.totalorder %s18, 1
    %p316 = scmp.ne.s32.totalorder %s311, %s313
    %p317 = scmp.eq.s32.totalorder %s18, 0
    %p318 = por %p316, %p317
    %p319 = scmp.ne.s32.totalorder %s311, %s313
    %p320 = scmp.eq.s32.totalorder %s23, 1
    %p321 = por %p319, %p320
    %p322 = scmp.ne.s32.totalorder %s313, %s314
    %p323 = scmp.eq.s32.totalorder %s23, 0
    %p324 = por %p322, %p323
    %p325 = scmp.ne.s32.totalorder %s313, %s314
    %p326 = scmp.eq.s32.totalorder %s24, 1
    %p327 = por %p325, %p326
    %p329 = scmp.ne.s32.totalorder %s314, %s328
    %p330 = scmp.eq.s32.totalorder %s24, 0
    %p331 = por %p329, %p330
    %s332 = ssub.s32 %s25, %s37
    %s333 = ssub.s32 %s26, %s33
    %s334 = sor.u32 %s332, %s333
    %p335 = scmp.eq.s32.totalorder %s334, 0
    %s337 = sadd.s32 %s336, 1
    %s338 = scalar_select %p335, %s336, %s337
    %p341 = pneg %p335
    %p342 = scmp.eq.s32.totalorder %s18, 1
    %p343 = por %p341, %p342
    %p344 = scmp.ne.s32.totalorder %s336, %s339
    %p345 = scmp.eq.s32.totalorder %s18, 0
    %p346 = por %p344, %p345
    %p347 = scmp.ne.s32.totalorder %s336, %s339
    %p348 = scmp.eq.s32.totalorder %s23, 1
    %p349 = por %p347, %p348
    %p350 = scmp.ne.s32.totalorder %s339, %s340
    %p351 = scmp.eq.s32.totalorder %s23, 0
    %p352 = por %p350, %p351
    %p353 = scmp.ne.s32.totalorder %s339, %s340
    %p354 = scmp.eq.s32.totalorder %s24, 1
    %p355 = por %p353, %p354
    %p357 = scmp.ne.s32.totalorder %s340, %s356
    %p358 = scmp.eq.s32.totalorder %s24, 0
    %p359 = por %p357, %p358
    %p360 = scmp.le.s32.totalorder 1, %s18
    %p361 = scmp.lt.s32.totalorder %s18, 3
    %p362 = pnand %p360, %p361
    %p363 = pneg %p362
    // Predicated region
    $region9: #{transformer_apply.5} parent=5 // pred_check
      _
    $region10: #{transformer_apply.5} parent=5 // pred_check_branch
      %365 = sbr.rel (%p362) target = $region12
    $region11: #{transformer_apply.5} parent=5 // pred_region
      %s366 = ssub.s32 %s18, 1
      // Predicated region
      $region13: #{transformer_apply.5} parent=11 // pred_check
        %p367 = pneg %p219
      $region14: #{transformer_apply.5} parent=11 // pred_check_branch
        %369 = sbr.rel (%p367) target = $region16
      $region15: #{transformer_apply.5} parent=11 // pred_region
        _
      $region16: #{transformer_apply.5} parent=11 // pred_fallthru
        _
      // Predicated region
      $region17: #{transformer_apply.5} parent=11 // pred_check
        %p370 = pneg %p240
      $region18: #{transformer_apply.5} parent=11 // pred_check_branch
        %372 = sbr.rel (%p370) target = $region20
      $region19: #{transformer_apply.5} parent=11 // pred_region
        _
      $region20: #{transformer_apply.5} parent=11 // pred_fallthru
        _
      // Predicated region
      $region21: #{transformer_apply.5} parent=11 // pred_check
        %p373 = pneg %p261
      $region22: #{transformer_apply.5} parent=11 // pred_check_branch
        %375 = sbr.rel (%p373) target = $region24
      $region23: #{transformer_apply.5} parent=11 // pred_region
        _
      $region24: #{transformer_apply.5} parent=11 // pred_fallthru
        _
      // Predicated region
      $region25: #{transformer_apply.5} parent=11 // pred_check
        %p376 = pneg %p282
      $region26: #{transformer_apply.5} parent=11 // pred_check_branch
        %378 = sbr.rel (%p376) target = $region28
      $region27: #{transformer_apply.5} parent=11 // pred_region
        _
      $region28: #{transformer_apply.5} parent=11 // pred_fallthru
        _
      // Predicated region
      $region29: #{transformer_apply.5} parent=11 // pred_check
        %p379 = pneg %p303
      $region30: #{transformer_apply.5} parent=11 // pred_check_branch
        %381 = sbr.rel (%p379) target = $region32
      $region31: #{transformer_apply.5} parent=11 // pred_region
        _
      $region32: #{transformer_apply.5} parent=11 // pred_fallthru
        _
      // Predicated region
      $region33: #{transformer_apply.5} parent=11 // pred_check
        %p382 = pneg %p324
      $region34: #{transformer_apply.5} parent=11 // pred_check_branch
        %384 = sbr.rel (%p382) target = $region36
      $region35: #{transformer_apply.5} parent=11 // pred_region
        _
      $region36: #{transformer_apply.5} parent=11 // pred_fallthru
        _
    $region12: #{transformer_apply.5} parent=5 // pred_fallthru
      _
    %p385 = scmp.lt.s32.totalorder %s18, 2
    // Predicated region
    $region37: #{transformer_apply.5} parent=5 // pred_check
      %p386 = pneg %p385
    $region38: #{transformer_apply.5} parent=5 // pred_check_branch
      %388 = sbr.rel (%p386) target = $region40
    $region39: #{transformer_apply.5} parent=5 // pred_region
      // Predicated region
      $region41: #{transformer_apply.5} parent=39 // pred_check
        %p389 = pneg %p52
      $region42: #{transformer_apply.5} parent=39 // pred_check_branch
        %391 = sbr.rel (%p389) target = $region44
      $region43: #{transformer_apply.5} parent=39 // pred_region
        %s392 = smul.u32 2, %s26
        %p393 = scmp.lt.s32.totalorder %s25, 1
        %s394 = scalar_select %p393, %s25, 1
        %p395 = scmp.lt.s32.totalorder %s392, 1
        %s396 = scalar_select %p395, %s392, 1
        %s397 = smul.addr %s394, 2
        %s398 = sadd.s32 %s396, %s397
        %s399 = smul.addr %s398, 8
        %s400 = scalar_lea.vmem %s0, %s399
        %s401 = smul.u32 2, %s26
      $region44: #{transformer_apply.5} parent=39 // pred_fallthru
        _
      // Predicated region
      $region45: #{transformer_apply.5} parent=39 // pred_check
        %p402 = pneg %p80
      $region46: #{transformer_apply.5} parent=39 // pred_check_branch
        %404 = sbr.rel (%p402) target = $region48
      $region47: #{transformer_apply.5} parent=39 // pred_region
        %s405 = smul.u32 2, %s26
        %p406 = scmp.lt.s32.totalorder %s25, 1
        %s407 = scalar_select %p406, %s25, 1
        %p408 = scmp.lt.s32.totalorder %s405, 1
        %s409 = scalar_select %p408, %s405, 1
        %s410 = smul.addr %s407, 2
        %s411 = sadd.s32 %s409, %s410
        %s412 = smul.addr %s411, 4
        %s413 = scalar_lea.vmem %s1, %s412
        %s414 = smul.u32 2, %s26
      $region48: #{transformer_apply.5} parent=39 // pred_fallthru
        _
      // Predicated region
      $region49: #{transformer_apply.5} parent=39 // pred_check
        %p415 = pneg %p108
      $region50: #{transformer_apply.5} parent=39 // pred_check_branch
        %417 = sbr.rel (%p415) target = $region52
      $region51: #{transformer_apply.5} parent=39 // pred_region
        %s418 = smul.u32 2, %s26
        %p419 = scmp.lt.s32.totalorder %s25, 1
        %s420 = scalar_select %p419, %s25, 1
        %p421 = scmp.lt.s32.totalorder %s418, 1
        %s422 = scalar_select %p421, %s418, 1
        %s423 = smul.addr %s420, 2
        %s424 = sadd.s32 %s422, %s423
        %s425 = smul.addr %s424, 4
        %s426 = scalar_lea.vmem %s2, %s425
        %s427 = smul.u32 2, %s26
      $region52: #{transformer_apply.5} parent=39 // pred_fallthru
        _
      // Predicated region
      $region53: #{transformer_apply.5} parent=39 // pred_check
        %p428 = pneg %p136
      $region54: #{transformer_apply.5} parent=39 // pred_check_branch
        %430 = sbr.rel (%p428) target = $region56
      $region55: #{transformer_apply.5} parent=39 // pred_region
        %s431 = smul.u32 2, %s26
        %p432 = scmp.lt.s32.totalorder %s25, 1
        %s433 = scalar_select %p432, %s25, 1
        %p434 = scmp.lt.s32.totalorder %s431, 1
        %s435 = scalar_select %p434, %s431, 1
        %s436 = smul.addr %s433, 2
        %s437 = sadd.s32 %s435, %s436
        %s438 = smul.addr %s437, 8
        %s439 = scalar_lea.vmem %s3, %s438
        %s440 = smul.u32 2, %s26
      $region56: #{transformer_apply.5} parent=39 // pred_fallthru
        _
      // Predicated region
      $region57: #{transformer_apply.5} parent=39 // pred_check
        %p441 = pneg %p164
      $region58: #{transformer_apply.5} parent=39 // pred_check_branch
        %443 = sbr.rel (%p441) target = $region60
      $region59: #{transformer_apply.5} parent=39 // pred_region
        %s444 = smul.u32 16, %s26
        %p445 = scmp.lt.s32.totalorder %s25, 1
        %s446 = scalar_select %p445, %s25, 1
        %p447 = scmp.lt.s32.totalorder %s444, 15
        %s448 = scalar_select %p447, %s444, 15
        %s449 = smul.addr %s446, 16
        %s450 = sadd.s32 %s448, %s449
        %s451 = smul.addr %s450, 4
        %s452 = scalar_lea.vmem %s4, %s451
        %s453 = smul.u32 16, %s26
      $region60: #{transformer_apply.5} parent=39 // pred_fallthru
        _
      // Predicated region
      $region61: #{transformer_apply.5} parent=39 // pred_check
        %p454 = pneg %p192
      $region62: #{transformer_apply.5} parent=39 // pred_check_branch
        %456 = sbr.rel (%p454) target = $region64
      $region63: #{transformer_apply.5} parent=39 // pred_region
        %s457 = smul.u32 16, %s26
        %p458 = scmp.lt.s32.totalorder %s25, 1
        %s459 = scalar_select %p458, %s25, 1
        %p460 = scmp.lt.s32.totalorder %s457, 15
        %s461 = scalar_select %p460, %s457, 15
        %s462 = smul.addr %s459, 16
        %s463 = sadd.s32 %s461, %s462
        %s464 = smul.addr %s463, 8
        %s465 = scalar_lea.vmem %s5, %s464
        %s466 = smul.u32 16, %s26
      $region64: #{transformer_apply.5} parent=39 // pred_fallthru
        _
    $region40: #{transformer_apply.5} parent=5 // pred_fallthru
      _
    %p467 = scmp.le.s32.totalorder 1, %s18
    %p468 = scmp.lt.s32.totalorder %s18, 3
    %p469 = pnand %p467, %p468
    %p470 = pneg %p469
    // Predicated region
    $region65: #{transformer_apply.5} parent=5 // pred_check
      _
    $region66: #{transformer_apply.5} parent=5 // pred_check_branch
      %472 = sbr.rel (%p469) target = $region68
    $region67: #{transformer_apply.5} parent=5 // pred_region
      %s473 = ssub.s32 %s18, 1
      %s474 = smul.u32 2, %s28
      %p475 = scmp.lt.s32.totalorder %s27, 1
      %s476 = scalar_select %p475, %s27, 1
      %p477 = scmp.lt.s32.totalorder %s474, 1
      %s478 = scalar_select %p477, %s474, 1
      %s479 = smul.addr %s476, 2
      %s480 = sadd.s32 %s478, %s479
      %s481 = smul.addr %s480, 8
      %s482 = scalar_lea.vmem %s0, %s481
      %p483 = pneg %p58
      %p484 = pneg %p55
      %s485 = smul.u32 2, %s28
      %p486 = scmp.lt.s32.totalorder %s27, 1
      %s487 = scalar_select %p486, %s27, 1
      %p488 = scmp.lt.s32.totalorder %s485, 1
      %s489 = scalar_select %p488, %s485, 1
      %s490 = smul.addr %s487, 2
      %s491 = sadd.s32 %s489, %s490
      %s492 = smul.addr %s491, 4
      %s493 = scalar_lea.vmem %s1, %s492
      %p494 = pneg %p86
      %p495 = pneg %p83
      %s496 = smul.u32 2, %s28
      %p497 = scmp.lt.s32.totalorder %s27, 1
      %s498 = scalar_select %p497, %s27, 1
      %p499 = scmp.lt.s32.totalorder %s496, 1
      %s500 = scalar_select %p499, %s496, 1
      %s501 = smul.addr %s498, 2
      %s502 = sadd.s32 %s500, %s501
      %s503 = smul.addr %s502, 4
      %s504 = scalar_lea.vmem %s2, %s503
      %p505 = pneg %p114
      %p506 = pneg %p111
      %s507 = smul.u32 2, %s28
      %p508 = scmp.lt.s32.totalorder %s27, 1
      %s509 = scalar_select %p508, %s27, 1
      %p510 = scmp.lt.s32.totalorder %s507, 1
      %s511 = scalar_select %p510, %s507, 1
      %s512 = smul.addr %s509, 2
      %s513 = sadd.s32 %s511, %s512
      %s514 = smul.addr %s513, 8
      %s515 = scalar_lea.vmem %s3, %s514
      %p516 = pneg %p142
      %p517 = pneg %p139
      %s518 = smul.u32 16, %s28
      %p519 = scmp.lt.s32.totalorder %s27, 1
      %s520 = scalar_select %p519, %s27, 1
      %p521 = scmp.lt.s32.totalorder %s518, 15
      %s522 = scalar_select %p521, %s518, 15
      %s523 = smul.addr %s520, 16
      %s524 = sadd.s32 %s522, %s523
      %s525 = smul.addr %s524, 4
      %s526 = scalar_lea.vmem %s4, %s525
      %p527 = pneg %p170
      %p528 = pneg %p167
      %s529 = smul.u32 16, %s28
      %p530 = scmp.lt.s32.totalorder %s27, 1
      %s531 = scalar_select %p530, %s27, 1
      %p532 = scmp.lt.s32.totalorder %s529, 15
      %s533 = scalar_select %p532, %s529, 15
      %s534 = smul.addr %s531, 16
      %s535 = sadd.s32 %s533, %s534
      %s536 = smul.addr %s535, 8
      %s537 = scalar_lea.vmem %s5, %s536
      %p538 = pneg %p198
      %p539 = pneg %p195
      %p540 = pneg %p219
      %p541 = pneg %p216
      %p542 = pneg %p240
      %p543 = pneg %p237
      %p544 = pneg %p261
      %p545 = pneg %p258
      %p546 = pneg %p282
      %p547 = pneg %p279
      %p548 = pneg %p303
      %p549 = pneg %p300
      %p550 = pneg %p324
      %p551 = pneg %p321
      %p552 = pneg %p352
      %p553 = pneg %p349
      %s554 = smul.u32 2, %s28
      %p555 = scmp.lt.s32.totalorder %s27, 1
      %s556 = scalar_select %p555, %s27, 1
      %p557 = scmp.lt.s32.totalorder %s554, 1
      %s558 = scalar_select %p557, %s554, 1
      %s559 = smul.addr %s556, 2
      %s560 = sadd.s32 %s558, %s559
      %s561 = smul.addr %s560, 8
      %s562 = scalar_lea.vmem %s12, %s561
      %s563 = smul.u32 2, %s28
      %p564 = scmp.lt.s32.totalorder %s27, 1
      %s565 = scalar_select %p564, %s27, 1
      %p566 = scmp.lt.s32.totalorder %s563, 1
      %s567 = scalar_select %p566, %s563, 1
      %s568 = smul.addr %s565, 2
      %s569 = sadd.s32 %s567, %s568
      %s570 = smul.addr %s569, 8
      %s571 = scalar_lea.vmem %s0, %s570
      %s572 = smul.u32 2, %s28
      %s573 = smul.u32 2, %s28
      %p574 = scmp.lt.s32.totalorder %s27, 1
      %s575 = scalar_select %p574, %s27, 1
      %p576 = scmp.lt.s32.totalorder %s573, 1
      %s577 = scalar_select %p576, %s573, 1
      %s578 = smul.addr %s575, 2
      %s579 = sadd.s32 %s577, %s578
      %s580 = smul.addr %s579, 4
      %s581 = scalar_lea.vmem %s1, %s580
      %s582 = smul.u32 2, %s28
      %s583 = smul.u32 2, %s28
      %p584 = scmp.lt.s32.totalorder %s27, 1
      %s585 = scalar_select %p584, %s27, 1
      %p586 = scmp.lt.s32.totalorder %s583, 1
      %s587 = scalar_select %p586, %s583, 1
      %s588 = smul.addr %s585, 2
      %s589 = sadd.s32 %s587, %s588
      %s590 = smul.addr %s589, 4
      %s591 = scalar_lea.vmem %s2, %s590
      %s592 = smul.u32 2, %s28
      %s593 = smul.u32 2, %s28
      %p594 = scmp.lt.s32.totalorder %s27, 1
      %s595 = scalar_select %p594, %s27, 1
      %p596 = scmp.lt.s32.totalorder %s593, 1
      %s597 = scalar_select %p596, %s593, 1
      %s598 = smul.addr %s595, 2
      %s599 = sadd.s32 %s597, %s598
      %s600 = smul.addr %s599, 8
      %s601 = scalar_lea.vmem %s3, %s600
      %s602 = smul.u32 2, %s28
      %s603 = smul.u32 16, %s28
      %p604 = scmp.lt.s32.totalorder %s27, 1
      %s605 = scalar_select %p604, %s27, 1
      %p606 = scmp.lt.s32.totalorder %s603, 15
      %s607 = scalar_select %p606, %s603, 15
      %s608 = smul.addr %s605, 16
      %s609 = sadd.s32 %s607, %s608
      %s610 = smul.addr %s609, 4
      %s611 = scalar_lea.vmem %s4, %s610
      %s612 = smul.u32 16, %s28
      %s613 = smul.u32 16, %s28
      %p614 = scmp.lt.s32.totalorder %s27, 1
      %s615 = scalar_select %p614, %s27, 1
      %p616 = scmp.lt.s32.totalorder %s613, 15
      %s617 = scalar_select %p616, %s613, 15
      %s618 = smul.addr %s615, 16
      %s619 = sadd.s32 %s617, %s618
      %s620 = smul.addr %s619, 8
      %s621 = scalar_lea.vmem %s5, %s620
      %s622 = smul.u32 16, %s28
      %s623 = smul.u32 2, %s28
      %p624 = scmp.lt.s32.totalorder %s27, 1
      %s625 = scalar_select %p624, %s27, 1
      %p626 = scmp.lt.s32.totalorder %s623, 1
      %s627 = scalar_select %p626, %s623, 1
      %s628 = smul.addr %s625, 2
      %s629 = sadd.s32 %s627, %s628
      %s630 = smul.addr %s629, 8
      %s631 = scalar_lea.vmem %s12, %s630
      %s632 = smul.u32 2, %s28
      %v634 = vld [vmem:[%s571] sm:$0xff]
      %v635 = vld [vmem:[%s571 + $0x8] sm:$0xff]
      %v636 = vld [vmem:[%s581] sm:$0xf]
      %v637 = vld [vmem:[%s581 + $0x4] sm:$0xf]
      %v638 = vunpack.c.l.bf16 %v636
      %v639 = vunpack.c.l.bf16 %v637
      %v640 = vld [vmem:[%s591] sm:$0xf]
      %v641 = vld [vmem:[%s591 + $0x4] sm:$0xf]
      %v642 = vunpack.c.l.bf16 %v640
      %v643 = vunpack.c.l.bf16 %v641
      %v644 = vld [vmem:[%s601] sm:$0xff]
      %v645 = vld [vmem:[%s601 + $0x8] sm:$0xff]
      %v646 = vld [vmem:[%s611] sm:$0xf]
      %v647 = vld [vmem:[%s611 + $0x4] sm:$0xf]
      %v648 = vld [vmem:[%s611 + $0x8] sm:$0xf]
      %v649 = vld [vmem:[%s611 + $0xc] sm:$0xf]
      %v650 = vld [vmem:[%s611 + $0x10] sm:$0xf]
      %v651 = vld [vmem:[%s611 + $0x14] sm:$0xf]
      %v652 = vld [vmem:[%s611 + $0x18] sm:$0xf]
      %v653 = vld [vmem:[%s611 + $0x1c] sm:$0xf]
      %v654 = vld [vmem:[%s611 + $0x20] sm:$0xf]
      %v655 = vld [vmem:[%s611 + $0x24] sm:$0xf]
      %v656 = vld [vmem:[%s611 + $0x28] sm:$0xf]
      %v657 = vld [vmem:[%s611 + $0x2c] sm:$0xf]
      %v658 = vld [vmem:[%s611 + $0x30] sm:$0xf]
      %v659 = vld [vmem:[%s611 + $0x34] sm:$0xf]
      %v660 = vld [vmem:[%s611 + $0x38] sm:$0xf]
      %v661 = vld [vmem:[%s611 + $0x3c] sm:$0xf]
      %v662 = vunpack.c.l.bf16 %v646
      %v663 = vunpack.c.l.bf16 %v647
      %v664 = vunpack.c.l.bf16 %v648
      %v665 = vunpack.c.l.bf16 %v649
      %v666 = vunpack.c.l.bf16 %v650
      %v667 = vunpack.c.l.bf16 %v651
      %v668 = vunpack.c.l.bf16 %v652
      %v669 = vunpack.c.l.bf16 %v653
      %v670 = vunpack.c.l.bf16 %v654
      %v671 = vunpack.c.l.bf16 %v655
      %v672 = vunpack.c.l.bf16 %v656
      %v673 = vunpack.c.l.bf16 %v657
      %v674 = vunpack.c.l.bf16 %v658
      %v675 = vunpack.c.l.bf16 %v659
      %v676 = vunpack.c.l.bf16 %v660
      %v677 = vunpack.c.l.bf16 %v661
      %v678 = vld [vmem:[%s621] sm:$0xff]
      %v679 = vld [vmem:[%s621 + $0x8] sm:$0xff]
      %v680 = vld [vmem:[%s621 + $0x10] sm:$0xff]
      %v681 = vld [vmem:[%s621 + $0x18] sm:$0xff]
      %v682 = vld [vmem:[%s621 + $0x20] sm:$0xff]
      %v683 = vld [vmem:[%s621 + $0x28] sm:$0xff]
      %v684 = vld [vmem:[%s621 + $0x30] sm:$0xff]
      %v685 = vld [vmem:[%s621 + $0x38] sm:$0xff]
      %v686 = vld [vmem:[%s621 + $0x40] sm:$0xff]
      %v687 = vld [vmem:[%s621 + $0x48] sm:$0xff]
      %v688 = vld [vmem:[%s621 + $0x50] sm:$0xff]
      %v689 = vld [vmem:[%s621 + $0x58] sm:$0xff]
      %v690 = vld [vmem:[%s621 + $0x60] sm:$0xff]
      %v691 = vld [vmem:[%s621 + $0x68] sm:$0xff]
      %v692 = vld [vmem:[%s621 + $0x70] sm:$0xff]
      %v693 = vld [vmem:[%s621 + $0x78] sm:$0xff]
      %v696 = vrot.slane %v638, 1
      %v697 = vrot.slane %v638, 2
      %v698 = vrot.slane %v638, 3
      %v699 = vrot.slane %v638, 4
      %v700 = vrot.slane %v638, 5
      %v701 = vrot.slane %v638, 6
      %v702 = vrot.slane %v638, 7
      %v703 = vrot.slane %v639, 1
      %v704 = vrot.slane %v639, 2
      %v705 = vrot.slane %v639, 3
      %v706 = vrot.slane %v639, 4
      %v707 = vrot.slane %v639, 5
      %v708 = vrot.slane %v639, 6
      %v709 = vrot.slane %v639, 7
      %v710 = vperm.slane %v638, 0
      %v711 = vperm.slane %v696, 0
      %v712 = vperm.slane %v697, 0
      %v713 = vperm.slane %v698, 0
      %v714 = vperm.slane %v699, 0
      %v715 = vperm.slane %v700, 0
      %v716 = vperm.slane %v701, 0
      %v717 = vperm.slane %v702, 0
      %v718 = vperm.slane %v639, 0
      %v719 = vperm.slane %v703, 0
      %v720 = vperm.slane %v704, 0
      %v721 = vperm.slane %v705, 0
      %v722 = vperm.slane %v706, 0
      %v723 = vperm.slane %v707, 0
      %v724 = vperm.slane %v708, 0
      %v725 = vperm.slane %v709, 0
      %v742 = vsub.f32 %v710, %v662
      %v743 = vsub.f32 %v711, %v663
      %v744 = vsub.f32 %v712, %v664
      %v745 = vsub.f32 %v713, %v665
      %v746 = vsub.f32 %v714, %v666
      %v747 = vsub.f32 %v715, %v667
      %v748 = vsub.f32 %v716, %v668
      %v749 = vsub.f32 %v717, %v669
      %v750 = vsub.f32 %v718, %v670
      %v751 = vsub.f32 %v719, %v671
      %v752 = vsub.f32 %v720, %v672
      %v753 = vsub.f32 %v721, %v673
      %v754 = vsub.f32 %v722, %v674
      %v755 = vsub.f32 %v723, %v675
      %v756 = vsub.f32 %v724, %v676
      %v757 = vsub.f32 %v725, %v677
      %v760 = vrot.slane %v644, 1
      %v761 = vrot.slane %v644, 2
      %v762 = vrot.slane %v644, 3
      %v763 = vrot.slane %v644, 4
      %v764 = vrot.slane %v644, 5
      %v765 = vrot.slane %v644, 6
      %v766 = vrot.slane %v644, 7
      %v767 = vrot.slane %v645, 1
      %v768 = vrot.slane %v645, 2
      %v769 = vrot.slane %v645, 3
      %v770 = vrot.slane %v645, 4
      %v771 = vrot.slane %v645, 5
      %v772 = vrot.slane %v645, 6
      %v773 = vrot.slane %v645, 7
      %v774 = vperm.slane %v644, 0
      %v775 = vperm.slane %v760, 0
      %v776 = vperm.slane %v761, 0
      %v777 = vperm.slane %v762, 0
      %v778 = vperm.slane %v763, 0
      %v779 = vperm.slane %v764, 0
      %v780 = vperm.slane %v765, 0
      %v781 = vperm.slane %v766, 0
      %v782 = vperm.slane %v645, 0
      %v783 = vperm.slane %v767, 0
      %v784 = vperm.slane %v768, 0
      %v785 = vperm.slane %v769, 0
      %v786 = vperm.slane %v770, 0
      %v787 = vperm.slane %v771, 0
      %v788 = vperm.slane %v772, 0
      %v789 = vperm.slane %v773, 0
      %v806 = vsub.f32 %v774, %v678
      %v807 = vsub.f32 %v775, %v679
      %v808 = vsub.f32 %v776, %v680
      %v809 = vsub.f32 %v777, %v681
      %v810 = vsub.f32 %v778, %v682
      %v811 = vsub.f32 %v779, %v683
      %v812 = vsub.f32 %v780, %v684
      %v813 = vsub.f32 %v781, %v685
      %v814 = vsub.f32 %v782, %v686
      %v815 = vsub.f32 %v783, %v687
      %v816 = vsub.f32 %v784, %v688
      %v817 = vsub.f32 %v785, %v689
      %v818 = vsub.f32 %v786, %v690
      %v819 = vsub.f32 %v787, %v691
      %v820 = vsub.f32 %v788, %v692
      %v821 = vsub.f32 %v789, %v693
      %v822 = vpack.c.bf16 %v807, %v806
      %v823 = vpack.c.bf16 %v809, %v808
      %v824 = vpack.c.bf16 %v811, %v810
      %v825 = vpack.c.bf16 %v813, %v812
      %v826 = vpack.c.bf16 %v815, %v814
      %v827 = vpack.c.bf16 %v817, %v816
      %v828 = vpack.c.bf16 %v819, %v818
      %v829 = vpack.c.bf16 %v821, %v820
      %v830 = vld [vmem:[%s6] sm:$0x3]
      %v831 = vld [vmem:[%s11] sm:$0x1]
      %v833 = vperm.slane %v831, 0
      %vm835 = vcmask 23552
      %v837 = vsel %vm835, %v822, 0
      %v840 = vsel %vm835, %v823, 0
      %v843 = vsel %vm835, %v824, 0
      %v846 = vsel %vm835, %v825, 0
      %v849 = vsel %vm835, %v826, 0
      %v852 = vsel %vm835, %v827, 0
      %v855 = vsel %vm835, %v828, 0
      %v858 = vsel %vm835, %v829, 0
      %vm860 = vcmask 1040384
      %vm861 = vcmask 1041408
      %v862 = vsel %vm860, 4294967295, 65535
      %v863 = vsel %vm861, %v862, 0
      %v865 = vand.u32 %v830, %v863
      %867 = vmatpush.bf16.msra.mxu0 0
      %868 = vmatpush.bf16.msra.mxu0 0
      %869 = vmatpush.bf16.msra.mxu0 0
      %870 = vmatpush.bf16.msra.mxu0 0
      %871 = vmatpush.bf16.msra.mxu0 0
      %872 = vmatpush.bf16.msra.mxu0 0
      %873 = vmatpush.bf16.msra.mxu0 0
      %874 = vmatpush.bf16.msra.mxu0 %v865
      %875 = vmatmul.bf16.gmra.mxu0 %v837
      %v876 = vpop.f32.mrf.mxu0
      %v877 = vadd.f32 %v833, %v876
      %v878 = vpop.f32.mrf.mxu0
      %v879 = vadd.f32 %v833, %v878
      %880 = vmatmul.bf16.gmra.mxu0 %v840
      %v881 = vpop.f32.mrf.mxu0
      %v882 = vadd.f32 %v833, %v881
      %v883 = vpop.f32.mrf.mxu0
      %v884 = vadd.f32 %v833, %v883
      %885 = vmatmul.bf16.gmra.mxu0 %v843
      %v886 = vpop.f32.mrf.mxu0
      %v887 = vadd.f32 %v833, %v886
      %v888 = vpop.f32.mrf.mxu0
      %v889 = vadd.f32 %v833, %v888
      %890 = vmatmul.bf16.gmra.mxu0 %v846
      %v891 = vpop.f32.mrf.mxu0
      %v892 = vadd.f32 %v833, %v891
      %v893 = vpop.f32.mrf.mxu0
      %v894 = vadd.f32 %v833, %v893
      %895 = vmatmul.bf16.gmra.mxu0 %v849
      %v896 = vpop.f32.mrf.mxu0
      %v897 = vadd.f32 %v833, %v896
      %v898 = vpop.f32.mrf.mxu0
      %v899 = vadd.f32 %v833, %v898
      %900 = vmatmul.bf16.gmra.mxu0 %v852
      %v901 = vpop.f32.mrf.mxu0
      %v902 = vadd.f32 %v833, %v901
      %v903 = vpop.f32.mrf.mxu0
      %v904 = vadd.f32 %v833, %v903
      %905 = vmatmul.bf16.gmra.mxu0 %v855
      %v906 = vpop.f32.mrf.mxu0
      %v907 = vadd.f32 %v833, %v906
      %v908 = vpop.f32.mrf.mxu0
      %v909 = vadd.f32 %v833, %v908
      %910 = vmatmul.bf16.gmra.mxu0 %v858
      %v911 = vpop.f32.mrf.mxu0
      %v912 = vadd.f32 %v833, %v911
      %v913 = vpop.f32.mrf.mxu0
      %v914 = vadd.f32 %v833, %v913
      %915 = vdwg.mxu0
      %v916 = vmax.f32 %v877, 0.0
      %v917 = vmax.f32 %v879, 0.0
      %v918 = vmax.f32 %v882, 0.0
      %v919 = vmax.f32 %v884, 0.0
      %v920 = vmax.f32 %v887, 0.0
      %v921 = vmax.f32 %v889, 0.0
      %v922 = vmax.f32 %v892, 0.0
      %v923 = vmax.f32 %v894, 0.0
      %v924 = vmax.f32 %v897, 0.0
      %v925 = vmax.f32 %v899, 0.0
      %v926 = vmax.f32 %v902, 0.0
      %v927 = vmax.f32 %v904, 0.0
      %v928 = vmax.f32 %v907, 0.0
      %v929 = vmax.f32 %v909, 0.0
      %v930 = vmax.f32 %v912, 0.0
      %v931 = vmax.f32 %v914, 0.0
      %v932 = vpack.c.bf16 %v917, %v916
      %v933 = vpack.c.bf16 %v919, %v918
      %v934 = vpack.c.bf16 %v921, %v920
      %v935 = vpack.c.bf16 %v923, %v922
      %v936 = vpack.c.bf16 %v925, %v924
      %v937 = vpack.c.bf16 %v927, %v926
      %v938 = vpack.c.bf16 %v929, %v928
      %v939 = vpack.c.bf16 %v931, %v930
      %v940 = vld [vmem:[%s7] sm:$0xf]
      %v941 = vld [vmem:[%s7 + $0x4] sm:$0xf]
      %v942 = vld [vmem:[%s11 + $0x1] sm:$0x1]
      %v944 = vperm.slane %v942, 0
      %v948 = vunpack.c.l.b16 %v940
      %v949 = vunpack.c.l.b16 %v941
      %v950 = vpack.c.b16 %v949, %v948
      %vm952 = vcmask 130048
      %v954 = vsel %vm952, %v932, 0
      %v957 = vsel %vm952, %v933, 0
      %v960 = vsel %vm952, %v934, 0
      %v963 = vsel %vm952, %v935, 0
      %v966 = vsel %vm952, %v936, 0
      %v969 = vsel %vm952, %v937, 0
      %v972 = vsel %vm952, %v938, 0
      %v975 = vsel %vm952, %v939, 0
      %977 = vmatpush.bf16.msra.mxu0 0
      %978 = vmatpush.bf16.msra.mxu0 0
      %979 = vmatpush.bf16.msra.mxu0 0
      %980 = vmatpush.bf16.msra.mxu0 0
      %981 = vmatpush.bf16.msra.mxu0 0
      %982 = vmatpush.bf16.msra.mxu0 0
      %983 = vmatpush.bf16.msra.mxu0 0
      %984 = vmatpush.bf16.msra.mxu0 %v950
      %985 = vmatmul.bf16.gmra.mxu0 %v954
      %v986 = vpop.f32.mrf.mxu0
      %v987 = vadd.f32 %v944, %v986
      %v988 = vpop.f32.mrf.mxu0
      %v989 = vadd.f32 %v944, %v988
      %990 = vmatmul.bf16.gmra.mxu0 %v957
      %v991 = vpop.f32.mrf.mxu0
      %v992 = vadd.f32 %v944, %v991
      %v993 = vpop.f32.mrf.mxu0
      %v994 = vadd.f32 %v944, %v993
      %995 = vmatmul.bf16.gmra.mxu0 %v960
      %v996 = vpop.f32.mrf.mxu0
      %v997 = vadd.f32 %v944, %v996
      %v998 = vpop.f32.mrf.mxu0
      %v999 = vadd.f32 %v944, %v998
      %1000 = vmatmul.bf16.gmra.mxu0 %v963
      %v1001 = vpop.f32.mrf.mxu0
      %v1002 = vadd.f32 %v944, %v1001
      %v1003 = vpop.f32.mrf.mxu0
      %v1004 = vadd.f32 %v944, %v1003
      %1005 = vmatmul.bf16.gmra.mxu0 %v966
      %v1006 = vpop.f32.mrf.mxu0
      %v1007 = vadd.f32 %v944, %v1006
      %v1008 = vpop.f32.mrf.mxu0
      %v1009 = vadd.f32 %v944, %v1008
      %1010 = vmatmul.bf16.gmra.mxu0 %v969
      %v1011 = vpop.f32.mrf.mxu0
      %v1012 = vadd.f32 %v944, %v1011
      %v1013 = vpop.f32.mrf.mxu0
      %v1014 = vadd.f32 %v944, %v1013
      %1015 = vmatmul.bf16.gmra.mxu0 %v972
      %v1016 = vpop.f32.mrf.mxu0
      %v1017 = vadd.f32 %v944, %v1016
      %v1018 = vpop.f32.mrf.mxu0
      %v1019 = vadd.f32 %v944, %v1018
      %1020 = vmatmul.bf16.gmra.mxu0 %v975
      %v1021 = vpop.f32.mrf.mxu0
      %v1022 = vadd.f32 %v944, %v1021
      %v1023 = vpop.f32.mrf.mxu0
      %v1024 = vadd.f32 %v944, %v1023
      %1025 = vdwg.mxu0
      %v1026 = vadd.f32 %v742, %v987
      %v1027 = vadd.f32 %v743, %v989
      %v1028 = vadd.f32 %v744, %v992
      %v1029 = vadd.f32 %v745, %v994
      %v1030 = vadd.f32 %v746, %v997
      %v1031 = vadd.f32 %v747, %v999
      %v1032 = vadd.f32 %v748, %v1002
      %v1033 = vadd.f32 %v749, %v1004
      %v1034 = vadd.f32 %v750, %v1007
      %v1035 = vadd.f32 %v751, %v1009
      %v1036 = vadd.f32 %v752, %v1012
      %v1037 = vadd.f32 %v753, %v1014
      %v1038 = vadd.f32 %v754, %v1017
      %v1039 = vadd.f32 %v755, %v1019
      %v1040 = vadd.f32 %v756, %v1022
      %v1041 = vadd.f32 %v757, %v1024
      %v1042 = vpack.c.bf16 %v1027, %v1026
      %v1043 = vpack.c.bf16 %v1029, %v1028
      %v1044 = vpack.c.bf16 %v1031, %v1030
      %v1045 = vpack.c.bf16 %v1033, %v1032
      %v1046 = vpack.c.bf16 %v1035, %v1034
      %v1047 = vpack.c.bf16 %v1037, %v1036
      %v1048 = vpack.c.bf16 %v1039, %v1038
      %v1049 = vpack.c.bf16 %v1041, %v1040
      %v1050 = vld [vmem:[%s8] sm:$0xf]
      %v1051 = vld [vmem:[%s8 + $0x4] sm:$0xf]
      %v1052 = vld [vmem:[%s8 + $0x8] sm:$0xf]
      %v1053 = vld [vmem:[%s8 + $0xc] sm:$0xf]
      %v1054 = vld [vmem:[%s11 + $0x2] sm:$0x1]
      %v1056 = vperm.slane %v1054, 0
      %v1062 = vunpack.c.l.b16 %v1050
      %v1063 = vunpack.c.l.b16 %v1051
      %v1064 = vunpack.c.l.b16 %v1052
      %v1065 = vunpack.c.l.b16 %v1053
      %v1066 = vpack.c.b16 %v1063, %v1062
      %v1067 = vpack.c.b16 %v1065, %v1064
      %vm1070 = vcmask 261120
      %v1072 = vsel %vm1070, %v1042, 0
      %v1075 = vsel %vm1070, %v1043, 0
      %v1078 = vsel %vm1070, %v1044, 0
      %v1081 = vsel %vm1070, %v1045, 0
      %v1084 = vsel %vm1070, %v1046, 0
      %v1087 = vsel %vm1070, %v1047, 0
      %v1090 = vsel %vm1070, %v1048, 0
      %v1093 = vsel %vm1070, %v1049, 0
      %1095 = vmatpush.bf16.msra.mxu0 0
      %1096 = vmatpush.bf16.msra.mxu0 0
      %1097 = vmatpush.bf16.msra.mxu0 0
      %1098 = vmatpush.bf16.msra.mxu0 0
      %1099 = vmatpush.bf16.msra.mxu0 0
      %1100 = vmatpush.bf16.msra.mxu0 0
      %1101 = vmatpush.bf16.msra.mxu0 %v1067
      %1102 = vmatpush.bf16.msra.mxu0 %v1066
      %1103 = vmatmul.bf16.gmra.mxu0 %v1072
      %v1104 = vpop.f32.mrf.mxu0
      %v1105 = vadd.f32 %v1056, %v1104
      %v1106 = vpop.f32.mrf.mxu0
      %v1107 = vadd.f32 %v1056, %v1106
      %1108 = vmatmul.bf16.gmra.mxu0 %v1075
      %v1109 = vpop.f32.mrf.mxu0
      %v1110 = vadd.f32 %v1056, %v1109
      %v1111 = vpop.f32.mrf.mxu0
      %v1112 = vadd.f32 %v1056, %v1111
      %1113 = vmatmul.bf16.gmra.mxu0 %v1078
      %v1114 = vpop.f32.mrf.mxu0
      %v1115 = vadd.f32 %v1056, %v1114
      %v1116 = vpop.f32.mrf.mxu0
      %v1117 = vadd.f32 %v1056, %v1116
      %1118 = vmatmul.bf16.gmra.mxu0 %v1081
      %v1119 = vpop.f32.mrf.mxu0
      %v1120 = vadd.f32 %v1056, %v1119
      %v1121 = vpop.f32.mrf.mxu0
      %v1122 = vadd.f32 %v1056, %v1121
      %1123 = vmatmul.bf16.gmra.mxu0 %v1084
      %v1124 = vpop.f32.mrf.mxu0
      %v1125 = vadd.f32 %v1056, %v1124
      %v1126 = vpop.f32.mrf.mxu0
      %v1127 = vadd.f32 %v1056, %v1126
      %1128 = vmatmul.bf16.gmra.mxu0 %v1087
      %v1129 = vpop.f32.mrf.mxu0
      %v1130 = vadd.f32 %v1056, %v1129
      %v1131 = vpop.f32.mrf.mxu0
      %v1132 = vadd.f32 %v1056, %v1131
      %1133 = vmatmul.bf16.gmra.mxu0 %v1090
      %v1134 = vpop.f32.mrf.mxu0
      %v1135 = vadd.f32 %v1056, %v1134
      %v1136 = vpop.f32.mrf.mxu0
      %v1137 = vadd.f32 %v1056, %v1136
      %1138 = vmatmul.bf16.gmra.mxu0 %v1093
      %v1139 = vpop.f32.mrf.mxu0
      %v1140 = vadd.f32 %v1056, %v1139
      %v1141 = vpop.f32.mrf.mxu0
      %v1142 = vadd.f32 %v1056, %v1141
      %1143 = vdwg.mxu0
      %v1144 = vmax.f32 %v1105, 0.0
      %v1145 = vmax.f32 %v1107, 0.0
      %v1146 = vmax.f32 %v1110, 0.0
      %v1147 = vmax.f32 %v1112, 0.0
      %v1148 = vmax.f32 %v1115, 0.0
      %v1149 = vmax.f32 %v1117, 0.0
      %v1150 = vmax.f32 %v1120, 0.0
      %v1151 = vmax.f32 %v1122, 0.0
      %v1152 = vmax.f32 %v1125, 0.0
      %v1153 = vmax.f32 %v1127, 0.0
      %v1154 = vmax.f32 %v1130, 0.0
      %v1155 = vmax.f32 %v1132, 0.0
      %v1156 = vmax.f32 %v1135, 0.0
      %v1157 = vmax.f32 %v1137, 0.0
      %v1158 = vmax.f32 %v1140, 0.0
      %v1159 = vmax.f32 %v1142, 0.0
      %v1160 = vpack.c.bf16 %v1145, %v1144
      %v1161 = vpack.c.bf16 %v1147, %v1146
      %v1162 = vpack.c.bf16 %v1149, %v1148
      %v1163 = vpack.c.bf16 %v1151, %v1150
      %v1164 = vpack.c.bf16 %v1153, %v1152
      %v1165 = vpack.c.bf16 %v1155, %v1154
      %v1166 = vpack.c.bf16 %v1157, %v1156
      %v1167 = vpack.c.bf16 %v1159, %v1158
      %v1168 = vld [vmem:[%s9] sm:$0xf]
      %v1169 = vld [vmem:[%s9 + $0x4] sm:$0xf]
      %v1170 = vld [vmem:[%s9 + $0x8] sm:$0xf]
      %v1171 = vld [vmem:[%s9 + $0xc] sm:$0xf]
      %v1172 = vld [vmem:[%s9 + $0x10] sm:$0xf]
      %v1173 = vld [vmem:[%s9 + $0x14] sm:$0xf]
      %v1174 = vld [vmem:[%s9 + $0x18] sm:$0xf]
      %v1175 = vld [vmem:[%s9 + $0x1c] sm:$0xf]
      %v1176 = vld [vmem:[%s9 + $0x20] sm:$0xf]
      %v1177 = vld [vmem:[%s9 + $0x24] sm:$0xf]
      %v1178 = vld [vmem:[%s9 + $0x28] sm:$0xf]
      %v1179 = vld [vmem:[%s9 + $0x2c] sm:$0xf]
      %v1180 = vld [vmem:[%s9 + $0x30] sm:$0xf]
      %v1181 = vld [vmem:[%s9 + $0x34] sm:$0xf]
      %v1182 = vld [vmem:[%s9 + $0x38] sm:$0xf]
      %v1183 = vld [vmem:[%s9 + $0x3c] sm:$0xf]
      %v1184 = vld [vmem:[%s11 + $0x3] sm:$0x1]
      %v1186 = vperm.slane %v1184, 0
      %v1204 = vunpack.c.l.b16 %v1168
      %v1205 = vunpack.c.l.b16 %v1169
      %v1206 = vunpack.c.l.b16 %v1170
      %v1207 = vunpack.c.l.b16 %v1171
      %v1208 = vunpack.c.l.b16 %v1172
      %v1209 = vunpack.c.l.b16 %v1173
      %v1210 = vunpack.c.l.b16 %v1174
      %v1211 = vunpack.c.l.b16 %v1175
      %v1212 = vunpack.c.l.b16 %v1176
      %v1213 = vunpack.c.l.b16 %v1177
      %v1214 = vunpack.c.l.b16 %v1178
      %v1215 = vunpack.c.l.b16 %v1179
      %v1216 = vunpack.c.l.b16 %v1180
      %v1217 = vunpack.c.l.b16 %v1181
      %v1218 = vunpack.c.l.b16 %v1182
      %v1219 = vunpack.c.l.b16 %v1183
      %v1220 = vpack.c.b16 %v1205, %v1204
      %v1221 = vpack.c.b16 %v1207, %v1206
      %v1222 = vpack.c.b16 %v1209, %v1208
      %v1223 = vpack.c.b16 %v1211, %v1210
      %v1224 = vpack.c.b16 %v1213, %v1212
      %v1225 = vpack.c.b16 %v1215, %v1214
      %v1226 = vpack.c.b16 %v1217, %v1216
      %v1227 = vpack.c.b16 %v1219, %v1218
      %1236 = vmatpush.bf16.msra.mxu0 %v1227
      %1237 = vmatpush.bf16.msra.mxu0 %v1226
      %1238 = vmatpush.bf16.msra.mxu0 %v1225
      %1239 = vmatpush.bf16.msra.mxu0 %v1224
      %1240 = vmatpush.bf16.msra.mxu0 %v1223
      %1241 = vmatpush.bf16.msra.mxu0 %v1222
      %1242 = vmatpush.bf16.msra.mxu0 %v1221
      %1243 = vmatpush.bf16.msra.mxu0 %v1220
      %1244 = vmatmul.bf16.gmra.mxu0 %v1160
      %v1245 = vpop.f32.mrf.mxu0
      %v1246 = vadd.f32 %v1186, %v1245
      %v1247 = vpop.f32.mrf.mxu0
      %v1248 = vadd.f32 %v1186, %v1247
      %1249 = vmatmul.bf16.gmra.mxu0 %v1161
      %v1250 = vpop.f32.mrf.mxu0
      %v1251 = vadd.f32 %v1186, %v1250
      %v1252 = vpop.f32.mrf.mxu0
      %v1253 = vadd.f32 %v1186, %v1252
      %1254 = vmatmul.bf16.gmra.mxu0 %v1162
      %v1255 = vpop.f32.mrf.mxu0
      %v1256 = vadd.f32 %v1186, %v1255
      %v1257 = vpop.f32.mrf.mxu0
      %v1258 = vadd.f32 %v1186, %v1257
      %1259 = vmatmul.bf16.gmra.mxu0 %v1163
      %v1260 = vpop.f32.mrf.mxu0
      %v1261 = vadd.f32 %v1186, %v1260
      %v1262 = vpop.f32.mrf.mxu0
      %v1263 = vadd.f32 %v1186, %v1262
      %1264 = vmatmul.bf16.gmra.mxu0 %v1164
      %v1265 = vpop.f32.mrf.mxu0
      %v1266 = vadd.f32 %v1186, %v1265
      %v1267 = vpop.f32.mrf.mxu0
      %v1268 = vadd.f32 %v1186, %v1267
      %1269 = vmatmul.bf16.gmra.mxu0 %v1165
      %v1270 = vpop.f32.mrf.mxu0
      %v1271 = vadd.f32 %v1186, %v1270
      %v1272 = vpop.f32.mrf.mxu0
      %v1273 = vadd.f32 %v1186, %v1272
      %1274 = vmatmul.bf16.gmra.mxu0 %v1166
      %v1275 = vpop.f32.mrf.mxu0
      %v1276 = vadd.f32 %v1186, %v1275
      %v1277 = vpop.f32.mrf.mxu0
      %v1278 = vadd.f32 %v1186, %v1277
      %1279 = vmatmul.bf16.gmra.mxu0 %v1167
      %v1280 = vpop.f32.mrf.mxu0
      %v1281 = vadd.f32 %v1186, %v1280
      %v1282 = vpop.f32.mrf.mxu0
      %v1283 = vadd.f32 %v1186, %v1282
      %1284 = vdwg.mxu0
      %v1285 = vsel %vm1070, %v1246, -inf
      %v1286 = vrot.slane %v1285, 4
      %v1287 = vmax.f32 %v1285, %v1286
      %v1288 = vrot.slane %v1287, 2
      %v1289 = vmax.f32 %v1287, %v1288
      %v1290 = vrot.slane %v1289, 1
      %v1291 = vmax.f32 %v1289, %v1290
      %v1292 = vsel %vm1070, %v1248, -inf
      %v1293 = vrot.slane %v1292, 4
      %v1294 = vmax.f32 %v1292, %v1293
      %v1295 = vrot.slane %v1294, 2
      %v1296 = vmax.f32 %v1294, %v1295
      %v1297 = vrot.slane %v1296, 1
      %v1298 = vmax.f32 %v1296, %v1297
      %v1299 = vsel %vm1070, %v1251, -inf
      %v1300 = vrot.slane %v1299, 4
      %v1301 = vmax.f32 %v1299, %v1300
      %v1302 = vrot.slane %v1301, 2
      %v1303 = vmax.f32 %v1301, %v1302
      %v1304 = vrot.slane %v1303, 1
      %v1305 = vmax.f32 %v1303, %v1304
      %v1306 = vsel %vm1070, %v1253, -inf
      %v1307 = vrot.slane %v1306, 4
      %v1308 = vmax.f32 %v1306, %v1307
      %v1309 = vrot.slane %v1308, 2
      %v1310 = vmax.f32 %v1308, %v1309
      %v1311 = vrot.slane %v1310, 1
      %v1312 = vmax.f32 %v1310, %v1311
      %v1313 = vsel %vm1070, %v1256, -inf
      %v1314 = vrot.slane %v1313, 4
      %v1315 = vmax.f32 %v1313, %v1314
      %v1316 = vrot.slane %v1315, 2
      %v1317 = vmax.f32 %v1315, %v1316
      %v1318 = vrot.slane %v1317, 1
      %v1319 = vmax.f32 %v1317, %v1318
      %v1320 = vsel %vm1070, %v1258, -inf
      %v1321 = vrot.slane %v1320, 4
      %v1322 = vmax.f32 %v1320, %v1321
      %v1323 = vrot.slane %v1322, 2
      %v1324 = vmax.f32 %v1322, %v1323
      %v1325 = vrot.slane %v1324, 1
      %v1326 = vmax.f32 %v1324, %v1325
      %v1327 = vsel %vm1070, %v1261, -inf
      %v1328 = vrot.slane %v1327, 4
      %v1329 = vmax.f32 %v1327, %v1328
      %v1330 = vrot.slane %v1329, 2
      %v1331 = vmax.f32 %v1329, %v1330
      %v1332 = vrot.slane %v1331, 1
      %v1333 = vmax.f32 %v1331, %v1332
      %v1334 = vsel %vm1070, %v1263, -inf
      %v1335 = vrot.slane %v1334, 4
      %v1336 = vmax.f32 %v1334, %v1335
      %v1337 = vrot.slane %v1336, 2
      %v1338 = vmax.f32 %v1336, %v1337
      %v1339 = vrot.slane %v1338, 1
      %v1340 = vmax.f32 %v1338, %v1339
      %v1341 = vsel %vm1070, %v1266, -inf
      %v1342 = vrot.slane %v1341, 4
      %v1343 = vmax.f32 %v1341, %v1342
      %v1344 = vrot.slane %v1343, 2
      %v1345 = vmax.f32 %v1343, %v1344
      %v1346 = vrot.slane %v1345, 1
      %v1347 = vmax.f32 %v1345, %v1346
      %v1348 = vsel %vm1070, %v1268, -inf
      %v1349 = vrot.slane %v1348, 4
      %v1350 = vmax.f32 %v1348, %v1349
      %v1351 = vrot.slane %v1350, 2
      %v1352 = vmax.f32 %v1350, %v1351
      %v1353 = vrot.slane %v1352, 1
      %v1354 = vmax.f32 %v1352, %v1353
      %v1355 = vsel %vm1070, %v1271, -inf
      %v1356 = vrot.slane %v1355, 4
      %v1357 = vmax.f32 %v1355, %v1356
      %v1358 = vrot.slane %v1357, 2
      %v1359 = vmax.f32 %v1357, %v1358
      %v1360 = vrot.slane %v1359, 1
      %v1361 = vmax.f32 %v1359, %v1360
      %v1362 = vsel %vm1070, %v1273, -inf
      %v1363 = vrot.slane %v1362, 4
      %v1364 = vmax.f32 %v1362, %v1363
      %v1365 = vrot.slane %v1364, 2
      %v1366 = vmax.f32 %v1364, %v1365
      %v1367 = vrot.slane %v1366, 1
      %v1368 = vmax.f32 %v1366, %v1367
      %v1369 = vsel %vm1070, %v1276, -inf
      %v1370 = vrot.slane %v1369, 4
      %v1371 = vmax.f32 %v1369, %v1370
      %v1372 = vrot.slane %v1371, 2
      %v1373 = vmax.f32 %v1371, %v1372
      %v1374 = vrot.slane %v1373, 1
      %v1375 = vmax.f32 %v1373, %v1374
      %v1376 = vsel %vm1070, %v1278, -inf
      %v1377 = vrot.slane %v1376, 4
      %v1378 = vmax.f32 %v1376, %v1377
      %v1379 = vrot.slane %v1378, 2
      %v1380 = vmax.f32 %v1378, %v1379
      %v1381 = vrot.slane %v1380, 1
      %v1382 = vmax.f32 %v1380, %v1381
      %v1383 = vsel %vm1070, %v1281, -inf
      %v1384 = vrot.slane %v1383, 4
      %v1385 = vmax.f32 %v1383, %v1384
      %v1386 = vrot.slane %v1385, 2
      %v1387 = vmax.f32 %v1385, %v1386
      %v1388 = vrot.slane %v1387, 1
      %v1389 = vmax.f32 %v1387, %v1388
      %v1390 = vsel %vm1070, %v1283, -inf
      %v1391 = vrot.slane %v1390, 4
      %v1392 = vmax.f32 %v1390, %v1391
      %v1393 = vrot.slane %v1392, 2
      %v1394 = vmax.f32 %v1392, %v1393
      %v1395 = vrot.slane %v1394, 1
      %v1396 = vmax.f32 %v1394, %v1395
      %v1397 = vsub.f32 %v1246, %v1291
      %v1398 = vsub.f32 %v1248, %v1298
      %v1399 = vsub.f32 %v1251, %v1305
      %v1400 = vsub.f32 %v1253, %v1312
      %v1401 = vsub.f32 %v1256, %v1319
      %v1402 = vsub.f32 %v1258, %v1326
      %v1403 = vsub.f32 %v1261, %v1333
      %v1404 = vsub.f32 %v1263, %v1340
      %v1405 = vsub.f32 %v1266, %v1347
      %v1406 = vsub.f32 %v1268, %v1354
      %v1407 = vsub.f32 %v1271, %v1361
      %v1408 = vsub.f32 %v1273, %v1368
      %v1409 = vsub.f32 %v1276, %v1375
      %v1410 = vsub.f32 %v1278, %v1382
      %v1411 = vsub.f32 %v1281, %v1389
      %v1412 = vsub.f32 %v1283, %v1396
      %v1413 = vmul.f32 %v1397, 1.442695
      %v1414 = vpow.pop %v1413
      %v1415 = vmul.f32 %v1398, 1.442695
      %v1416 = vpow.pop %v1415
      %v1417 = vmul.f32 %v1399, 1.442695
      %v1418 = vpow.pop %v1417
      %v1419 = vmul.f32 %v1400, 1.442695
      %v1420 = vpow.pop %v1419
      %v1421 = vmul.f32 %v1401, 1.442695
      %v1422 = vpow.pop %v1421
      %v1423 = vmul.f32 %v1402, 1.442695
      %v1424 = vpow.pop %v1423
      %v1425 = vmul.f32 %v1403, 1.442695
      %v1426 = vpow.pop %v1425
      %v1427 = vmul.f32 %v1404, 1.442695
      %v1428 = vpow.pop %v1427
      %v1429 = vmul.f32 %v1405, 1.442695
      %v1430 = vpow.pop %v1429
      %v1431 = vmul.f32 %v1406, 1.442695
      %v1432 = vpow.pop %v1431
      %v1433 = vmul.f32 %v1407, 1.442695
      %v1434 = vpow.pop %v1433
      %v1435 = vmul.f32 %v1408, 1.442695
      %v1436 = vpow.pop %v1435
      %v1437 = vmul.f32 %v1409, 1.442695
      %v1438 = vpow.pop %v1437
      %v1439 = vmul.f32 %v1410, 1.442695
      %v1440 = vpow.pop %v1439
      %v1441 = vmul.f32 %v1411, 1.442695
      %v1442 = vpow.pop %v1441
      %v1443 = vmul.f32 %v1412, 1.442695
      %v1444 = vpow.pop %v1443
      %v1445 = vsel %vm1070, %v1414, 0.0
      %v1446 = vrot.slane %v1445, 4
      %v1447 = vadd.f32 %v1445, %v1446
      %v1448 = vrot.slane %v1447, 2
      %v1449 = vadd.f32 %v1447, %v1448
      %v1450 = vrot.slane %v1449, 1
      %v1451 = vadd.f32 %v1449, %v1450
      %v1452 = vsel %vm1070, %v1416, 0.0
      %v1453 = vrot.slane %v1452, 4
      %v1454 = vadd.f32 %v1452, %v1453
      %v1455 = vrot.slane %v1454, 2
      %v1456 = vadd.f32 %v1454, %v1455
      %v1457 = vrot.slane %v1456, 1
      %v1458 = vadd.f32 %v1456, %v1457
      %v1459 = vsel %vm1070, %v1418, 0.0
      %v1460 = vrot.slane %v1459, 4
      %v1461 = vadd.f32 %v1459, %v1460
      %v1462 = vrot.slane %v1461, 2
      %v1463 = vadd.f32 %v1461, %v1462
      %v1464 = vrot.slane %v1463, 1
      %v1465 = vadd.f32 %v1463, %v1464
      %v1466 = vsel %vm1070, %v1420, 0.0
      %v1467 = vrot.slane %v1466, 4
      %v1468 = vadd.f32 %v1466, %v1467
      %v1469 = vrot.slane %v1468, 2
      %v1470 = vadd.f32 %v1468, %v1469
      %v1471 = vrot.slane %v1470, 1
      %v1472 = vadd.f32 %v1470, %v1471
      %v1473 = vsel %vm1070, %v1422, 0.0
      %v1474 = vrot.slane %v1473, 4
      %v1475 = vadd.f32 %v1473, %v1474
      %v1476 = vrot.slane %v1475, 2
      %v1477 = vadd.f32 %v1475, %v1476
      %v1478 = vrot.slane %v1477, 1
      %v1479 = vadd.f32 %v1477, %v1478
      %v1480 = vsel %vm1070, %v1424, 0.0
      %v1481 = vrot.slane %v1480, 4
      %v1482 = vadd.f32 %v1480, %v1481
      %v1483 = vrot.slane %v1482, 2
      %v1484 = vadd.f32 %v1482, %v1483
      %v1485 = vrot.slane %v1484, 1
      %v1486 = vadd.f32 %v1484, %v1485
      %v1487 = vsel %vm1070, %v1426, 0.0
      %v1488 = vrot.slane %v1487, 4
      %v1489 = vadd.f32 %v1487, %v1488
      %v1490 = vrot.slane %v1489, 2
      %v1491 = vadd.f32 %v1489, %v1490
      %v1492 = vrot.slane %v1491, 1
      %v1493 = vadd.f32 %v1491, %v1492
      %v1494 = vsel %vm1070, %v1428, 0.0
      %v1495 = vrot.slane %v1494, 4
      %v1496 = vadd.f32 %v1494, %v1495
      %v1497 = vrot.slane %v1496, 2
      %v1498 = vadd.f32 %v1496, %v1497
      %v1499 = vrot.slane %v1498, 1
      %v1500 = vadd.f32 %v1498, %v1499
      %v1501 = vsel %vm1070, %v1430, 0.0
      %v1502 = vrot.slane %v1501, 4
      %v1503 = vadd.f32 %v1501, %v1502
      %v1504 = vrot.slane %v1503, 2
      %v1505 = vadd.f32 %v1503, %v1504
      %v1506 = vrot.slane %v1505, 1
      %v1507 = vadd.f32 %v1505, %v1506
      %v1508 = vsel %vm1070, %v1432, 0.0
      %v1509 = vrot.slane %v1508, 4
      %v1510 = vadd.f32 %v1508, %v1509
      %v1511 = vrot.slane %v1510, 2
      %v1512 = vadd.f32 %v1510, %v1511
      %v1513 = vrot.slane %v1512, 1
      %v1514 = vadd.f32 %v1512, %v1513
      %v1515 = vsel %vm1070, %v1434, 0.0
      %v1516 = vrot.slane %v1515, 4
      %v1517 = vadd.f32 %v1515, %v1516
      %v1518 = vrot.slane %v1517, 2
      %v1519 = vadd.f32 %v1517, %v1518
      %v1520 = vrot.slane %v1519, 1
      %v1521 = vadd.f32 %v1519, %v1520
      %v1522 = vsel %vm1070, %v1436, 0.0
      %v1523 = vrot.slane %v1522, 4
      %v1524 = vadd.f32 %v1522, %v1523
      %v1525 = vrot.slane %v1524, 2
      %v1526 = vadd.f32 %v1524, %v1525
      %v1527 = vrot.slane %v1526, 1
      %v1528 = vadd.f32 %v1526, %v1527
      %v1529 = vsel %vm1070, %v1438, 0.0
      %v1530 = vrot.slane %v1529, 4
      %v1531 = vadd.f32 %v1529, %v1530
      %v1532 = vrot.slane %v1531, 2
      %v1533 = vadd.f32 %v1531, %v1532
      %v1534 = vrot.slane %v1533, 1
      %v1535 = vadd.f32 %v1533, %v1534
      %v1536 = vsel %vm1070, %v1440, 0.0
      %v1537 = vrot.slane %v1536, 4
      %v1538 = vadd.f32 %v1536, %v1537
      %v1539 = vrot.slane %v1538, 2
      %v1540 = vadd.f32 %v1538, %v1539
      %v1541 = vrot.slane %v1540, 1
      %v1542 = vadd.f32 %v1540, %v1541
      %v1543 = vsel %vm1070, %v1442, 0.0
      %v1544 = vrot.slane %v1543, 4
      %v1545 = vadd.f32 %v1543, %v1544
      %v1546 = vrot.slane %v1545, 2
      %v1547 = vadd.f32 %v1545, %v1546
      %v1548 = vrot.slane %v1547, 1
      %v1549 = vadd.f32 %v1547, %v1548
      %v1550 = vsel %vm1070, %v1444, 0.0
      %v1551 = vrot.slane %v1550, 4
      %v1552 = vadd.f32 %v1550, %v1551
      %v1553 = vrot.slane %v1552, 2
      %v1554 = vadd.f32 %v1552, %v1553
      %v1555 = vrot.slane %v1554, 1
      %v1556 = vadd.f32 %v1554, %v1555
      %v1557 = vrcp.pop %v1451
      %v1558 = vrcp.pop %v1458
      %v1559 = vrcp.pop %v1465
      %v1560 = vrcp.pop %v1472
      %v1561 = vrcp.pop %v1479
      %v1562 = vrcp.pop %v1486
      %v1563 = vrcp.pop %v1493
      %v1564 = vrcp.pop %v1500
      %v1565 = vrcp.pop %v1507
      %v1566 = vrcp.pop %v1514
      %v1567 = vrcp.pop %v1521
      %v1568 = vrcp.pop %v1528
      %v1569 = vrcp.pop %v1535
      %v1570 = vrcp.pop %v1542
      %v1571 = vrcp.pop %v1549
      %v1572 = vrcp.pop %v1556
      %v1573 = vmul.f32 %v1414, %v1557
      %v1574 = vmul.f32 %v1416, %v1558
      %v1575 = vmul.f32 %v1418, %v1559
      %v1576 = vmul.f32 %v1420, %v1560
      %v1577 = vmul.f32 %v1422, %v1561
      %v1578 = vmul.f32 %v1424, %v1562
      %v1579 = vmul.f32 %v1426, %v1563
      %v1580 = vmul.f32 %v1428, %v1564
      %v1581 = vmul.f32 %v1430, %v1565
      %v1582 = vmul.f32 %v1432, %v1566
      %v1583 = vmul.f32 %v1434, %v1567
      %v1584 = vmul.f32 %v1436, %v1568
      %v1585 = vmul.f32 %v1438, %v1569
      %v1586 = vmul.f32 %v1440, %v1570
      %v1587 = vmul.f32 %v1442, %v1571
      %v1588 = vmul.f32 %v1444, %v1572
      %v1591 = vrot.slane %v642, 1
      %v1592 = vrot.slane %v642, 2
      %v1593 = vrot.slane %v642, 3
      %v1594 = vrot.slane %v642, 4
      %v1595 = vrot.slane %v642, 5
      %v1596 = vrot.slane %v642, 6
      %v1597 = vrot.slane %v642, 7
      %v1598 = vrot.slane %v643, 1
      %v1599 = vrot.slane %v643, 2
      %v1600 = vrot.slane %v643, 3
      %v1601 = vrot.slane %v643, 4
      %v1602 = vrot.slane %v643, 5
      %v1603 = vrot.slane %v643, 6
      %v1604 = vrot.slane %v643, 7
      %v1605 = vperm.slane %v642, 0
      %v1606 = vperm.slane %v1591, 0
      %v1607 = vperm.slane %v1592, 0
      %v1608 = vperm.slane %v1593, 0
      %v1609 = vperm.slane %v1594, 0
      %v1610 = vperm.slane %v1595, 0
      %v1611 = vperm.slane %v1596, 0
      %v1612 = vperm.slane %v1597, 0
      %v1613 = vperm.slane %v643, 0
      %v1614 = vperm.slane %v1598, 0
      %v1615 = vperm.slane %v1599, 0
      %v1616 = vperm.slane %v1600, 0
      %v1617 = vperm.slane %v1601, 0
      %v1618 = vperm.slane %v1602, 0
      %v1619 = vperm.slane %v1603, 0
      %v1620 = vperm.slane %v1604, 0
      %v1637 = vadd.f32 %v1605, %v987
      %v1638 = vadd.f32 %v1606, %v989
      %v1639 = vadd.f32 %v1607, %v992
      %v1640 = vadd.f32 %v1608, %v994
      %v1641 = vadd.f32 %v1609, %v997
      %v1642 = vadd.f32 %v1610, %v999
      %v1643 = vadd.f32 %v1611, %v1002
      %v1644 = vadd.f32 %v1612, %v1004
      %v1645 = vadd.f32 %v1613, %v1007
      %v1646 = vadd.f32 %v1614, %v1009
      %v1647 = vadd.f32 %v1615, %v1012
      %v1648 = vadd.f32 %v1616, %v1014
      %v1649 = vadd.f32 %v1617, %v1017
      %v1650 = vadd.f32 %v1618, %v1019
      %v1651 = vadd.f32 %v1619, %v1022
      %v1652 = vadd.f32 %v1620, %v1024
      %v1653 = vmul.f32 %v1573, %v1637
      %v1654 = vmul.f32 %v1574, %v1638
      %v1655 = vmul.f32 %v1575, %v1639
      %v1656 = vmul.f32 %v1576, %v1640
      %v1657 = vmul.f32 %v1577, %v1641
      %v1658 = vmul.f32 %v1578, %v1642
      %v1659 = vmul.f32 %v1579, %v1643
      %v1660 = vmul.f32 %v1580, %v1644
      %v1661 = vmul.f32 %v1581, %v1645
      %v1662 = vmul.f32 %v1582, %v1646
      %v1663 = vmul.f32 %v1583, %v1647
      %v1664 = vmul.f32 %v1584, %v1648
      %v1665 = vmul.f32 %v1585, %v1649
      %v1666 = vmul.f32 %v1586, %v1650
      %v1667 = vmul.f32 %v1587, %v1651
      %v1668 = vmul.f32 %v1588, %v1652
      %v1669 = vsel %vm1070, %v1653, 0.0
      %v1670 = vrot.slane %v1669, 4
      %v1671 = vadd.f32 %v1669, %v1670
      %v1672 = vrot.slane %v1671, 2
      %v1673 = vadd.f32 %v1671, %v1672
      %v1674 = vrot.slane %v1673, 1
      %v1675 = vadd.f32 %v1673, %v1674
      %v1676 = vsel %vm1070, %v1654, 0.0
      %v1677 = vrot.slane %v1676, 4
      %v1678 = vadd.f32 %v1676, %v1677
      %v1679 = vrot.slane %v1678, 2
      %v1680 = vadd.f32 %v1678, %v1679
      %v1681 = vrot.slane %v1680, 1
      %v1682 = vadd.f32 %v1680, %v1681
      %v1683 = vsel %vm1070, %v1655, 0.0
      %v1684 = vrot.slane %v1683, 4
      %v1685 = vadd.f32 %v1683, %v1684
      %v1686 = vrot.slane %v1685, 2
      %v1687 = vadd.f32 %v1685, %v1686
      %v1688 = vrot.slane %v1687, 1
      %v1689 = vadd.f32 %v1687, %v1688
      %v1690 = vsel %vm1070, %v1656, 0.0
      %v1691 = vrot.slane %v1690, 4
      %v1692 = vadd.f32 %v1690, %v1691
      %v1693 = vrot.slane %v1692, 2
      %v1694 = vadd.f32 %v1692, %v1693
      %v1695 = vrot.slane %v1694, 1
      %v1696 = vadd.f32 %v1694, %v1695
      %v1697 = vsel %vm1070, %v1657, 0.0
      %v1698 = vrot.slane %v1697, 4
      %v1699 = vadd.f32 %v1697, %v1698
      %v1700 = vrot.slane %v1699, 2
      %v1701 = vadd.f32 %v1699, %v1700
      %v1702 = vrot.slane %v1701, 1
      %v1703 = vadd.f32 %v1701, %v1702
      %v1704 = vsel %vm1070, %v1658, 0.0
      %v1705 = vrot.slane %v1704, 4
      %v1706 = vadd.f32 %v1704, %v1705
      %v1707 = vrot.slane %v1706, 2
      %v1708 = vadd.f32 %v1706, %v1707
      %v1709 = vrot.slane %v1708, 1
      %v1710 = vadd.f32 %v1708, %v1709
      %v1711 = vsel %vm1070, %v1659, 0.0
      %v1712 = vrot.slane %v1711, 4
      %v1713 = vadd.f32 %v1711, %v1712
      %v1714 = vrot.slane %v1713, 2
      %v1715 = vadd.f32 %v1713, %v1714
      %v1716 = vrot.slane %v1715, 1
      %v1717 = vadd.f32 %v1715, %v1716
      %v1718 = vsel %vm1070, %v1660, 0.0
      %v1719 = vrot.slane %v1718, 4
      %v1720 = vadd.f32 %v1718, %v1719
      %v1721 = vrot.slane %v1720, 2
      %v1722 = vadd.f32 %v1720, %v1721
      %v1723 = vrot.slane %v1722, 1
      %v1724 = vadd.f32 %v1722, %v1723
      %v1725 = vsel %vm1070, %v1661, 0.0
      %v1726 = vrot.slane %v1725, 4
      %v1727 = vadd.f32 %v1725, %v1726
      %v1728 = vrot.slane %v1727, 2
      %v1729 = vadd.f32 %v1727, %v1728
      %v1730 = vrot.slane %v1729, 1
      %v1731 = vadd.f32 %v1729, %v1730
      %v1732 = vsel %vm1070, %v1662, 0.0
      %v1733 = vrot.slane %v1732, 4
      %v1734 = vadd.f32 %v1732, %v1733
      %v1735 = vrot.slane %v1734, 2
      %v1736 = vadd.f32 %v1734, %v1735
      %v1737 = vrot.slane %v1736, 1
      %v1738 = vadd.f32 %v1736, %v1737
      %v1739 = vsel %vm1070, %v1663, 0.0
      %v1740 = vrot.slane %v1739, 4
      %v1741 = vadd.f32 %v1739, %v1740
      %v1742 = vrot.slane %v1741, 2
      %v1743 = vadd.f32 %v1741, %v1742
      %v1744 = vrot.slane %v1743, 1
      %v1745 = vadd.f32 %v1743, %v1744
      %v1746 = vsel %vm1070, %v1664, 0.0
      %v1747 = vrot.slane %v1746, 4
      %v1748 = vadd.f32 %v1746, %v1747
      %v1749 = vrot.slane %v1748, 2
      %v1750 = vadd.f32 %v1748, %v1749
      %v1751 = vrot.slane %v1750, 1
      %v1752 = vadd.f32 %v1750, %v1751
      %v1753 = vsel %vm1070, %v1665, 0.0
      %v1754 = vrot.slane %v1753, 4
      %v1755 = vadd.f32 %v1753, %v1754
      %v1756 = vrot.slane %v1755, 2
      %v1757 = vadd.f32 %v1755, %v1756
      %v1758 = vrot.slane %v1757, 1
      %v1759 = vadd.f32 %v1757, %v1758
      %v1760 = vsel %vm1070, %v1666, 0.0
      %v1761 = vrot.slane %v1760, 4
      %v1762 = vadd.f32 %v1760, %v1761
      %v1763 = vrot.slane %v1762, 2
      %v1764 = vadd.f32 %v1762, %v1763
      %v1765 = vrot.slane %v1764, 1
      %v1766 = vadd.f32 %v1764, %v1765
      %v1767 = vsel %vm1070, %v1667, 0.0
      %v1768 = vrot.slane %v1767, 4
      %v1769 = vadd.f32 %v1767, %v1768
      %v1770 = vrot.slane %v1769, 2
      %v1771 = vadd.f32 %v1769, %v1770
      %v1772 = vrot.slane %v1771, 1
      %v1773 = vadd.f32 %v1771, %v1772
      %v1774 = vsel %vm1070, %v1668, 0.0
      %v1775 = vrot.slane %v1774, 4
      %v1776 = vadd.f32 %v1774, %v1775
      %v1777 = vrot.slane %v1776, 2
      %v1778 = vadd.f32 %v1776, %v1777
      %v1779 = vrot.slane %v1778, 1
      %v1780 = vadd.f32 %v1778, %v1779
      %v1781 = vpack.c.bf16 %v1675, %v1675
      %v1782 = vpack.c.bf16 %v1682, %v1682
      %v1783 = vpack.c.bf16 %v1689, %v1689
      %v1784 = vpack.c.bf16 %v1696, %v1696
      %v1785 = vpack.c.bf16 %v1703, %v1703
      %v1786 = vpack.c.bf16 %v1710, %v1710
      %v1787 = vpack.c.bf16 %v1717, %v1717
      %v1788 = vpack.c.bf16 %v1724, %v1724
      %v1789 = vpack.c.bf16 %v1731, %v1731
      %v1790 = vpack.c.bf16 %v1738, %v1738
      %v1791 = vpack.c.bf16 %v1745, %v1745
      %v1792 = vpack.c.bf16 %v1752, %v1752
      %v1793 = vpack.c.bf16 %v1759, %v1759
      %v1794 = vpack.c.bf16 %v1766, %v1766
      %v1795 = vpack.c.bf16 %v1773, %v1773
      %v1796 = vpack.c.bf16 %v1780, %v1780
      %v1797 = vld [vmem:[%s10] sm:$0xf]
      %v1798 = vld [vmem:[%s10 + $0x4] sm:$0xf]
      %v1799 = vld [vmem:[%s10 + $0x8] sm:$0xf]
      %v1800 = vld [vmem:[%s10 + $0xc] sm:$0xf]
      %v1801 = vld [vmem:[%s11 + $0x4] sm:$0x1]
      %v1803 = vperm.slane %v1801, 0
      %v1821 = vunpack.c.l.b16 %v1781
      %v1822 = vunpack.c.l.b16 %v1782
      %v1823 = vunpack.c.l.b16 %v1783
      %v1824 = vunpack.c.l.b16 %v1784
      %v1825 = vunpack.c.l.b16 %v1785
      %v1826 = vunpack.c.l.b16 %v1786
      %v1827 = vunpack.c.l.b16 %v1787
      %v1828 = vunpack.c.l.b16 %v1788
      %v1829 = vunpack.c.l.b16 %v1789
      %v1830 = vunpack.c.l.b16 %v1790
      %v1831 = vunpack.c.l.b16 %v1791
      %v1832 = vunpack.c.l.b16 %v1792
      %v1833 = vunpack.c.l.b16 %v1793
      %v1834 = vunpack.c.l.b16 %v1794
      %v1835 = vunpack.c.l.b16 %v1795
      %v1836 = vunpack.c.l.b16 %v1796
      %vm1837 = vcmask 1041409
      %v1838 = vsel %vm1837, %v1822, %v1821
      %vm1839 = vcmask 1042434
      %v1840 = vsel %vm1839, %v1823, %v1838
      %vm1841 = vcmask 1043459
      %v1842 = vsel %vm1841, %v1824, %v1840
      %vm1843 = vcmask 1044484
      %v1844 = vsel %vm1843, %v1825, %v1842
      %vm1845 = vcmask 1045509
      %v1846 = vsel %vm1845, %v1826, %v1844
      %vm1847 = vcmask 1046534
      %v1848 = vsel %vm1847, %v1827, %v1846
      %vm1849 = vcmask 1047559
      %v1850 = vsel %vm1849, %v1828, %v1848
      %v1851 = vsel %vm1837, %v1830, %v1829
      %v1852 = vsel %vm1839, %v1831, %v1851
      %v1853 = vsel %vm1841, %v1832, %v1852
      %v1854 = vsel %vm1843, %v1833, %v1853
      %v1855 = vsel %vm1845, %v1834, %v1854
      %v1856 = vsel %vm1847, %v1835, %v1855
      %v1857 = vsel %vm1849, %v1836, %v1856
      %v1858 = vpack.c.b16 %v1857, %v1850
      %v1863 = vunpack.c.l.b16 %v1797
      %v1864 = vunpack.c.l.b16 %v1798
      %v1865 = vunpack.c.l.b16 %v1799
      %v1866 = vunpack.c.l.b16 %v1800
      %v1867 = vpack.c.b16 %v1864, %v1863
      %v1868 = vpack.c.b16 %v1866, %v1865
      %v1872 = vsel %vm1070, %v1858, 0
      %1874 = vmatpush.bf16.msra.mxu0 0
      %1875 = vmatpush.bf16.msra.mxu0 0
      %1876 = vmatpush.bf16.msra.mxu0 0
      %1877 = vmatpush.bf16.msra.mxu0 0
      %1878 = vmatpush.bf16.msra.mxu0 0
      %1879 = vmatpush.bf16.msra.mxu0 0
      %1880 = vmatpush.bf16.msra.mxu0 %v1868
      %1881 = vmatpush.bf16.msra.mxu0 %v1867
      %1882 = vmatmul.bf16.gmra.mxu0 %v1872
      %v1883 = vpop.f32.mrf.mxu0
      %v1884 = vadd.f32 %v1803, %v1883
      %v1885 = vpop.f32.mrf.mxu0
      %v1886 = vadd.f32 %v1803, %v1885
      %1887 = vdwg.mxu0
      %v1888 = vadd.f32 %v1884, %v634
      %v1889 = vadd.f32 %v1886, %v635
      %1890 = vst.msk [vmem:[%s631] sm:$0xff] %vm952, %v1888
      %1891 = vst.msk [vmem:[%s631 + $0x8] sm:$0xff] %vm952, %v1889
      %s1892 = smul.u32 2, %s28
      %p1893 = scmp.lt.s32.totalorder %s27, 1
      %s1894 = scalar_select %p1893, %s27, 1
      %p1895 = scmp.lt.s32.totalorder %s1892, 1
      %s1896 = scalar_select %p1895, %s1892, 1
      %s1897 = smul.addr %s1894, 2
      %s1898 = sadd.s32 %s1896, %s1897
      %s1899 = smul.addr %s1898, 8
      %s1900 = scalar_lea.vmem %s12, %s1899
      // Predicated region
      $region69: #{transformer_apply.5} parent=67 // pred_check
        %p1901 = pneg %p349
      $region70: #{transformer_apply.5} parent=67 // pred_check_branch
        %1903 = sbr.rel (%p1901) target = $region72
      $region71: #{transformer_apply.5} parent=67 // pred_region
        %s1904 = smul.u32 2, %s28
      $region72: #{transformer_apply.5} parent=67 // pred_fallthru
        _
    $region68: #{transformer_apply.5} parent=5 // pred_fallthru
      _
    %p1905 = scmp.le.s32.totalorder 2, %s18
    // Predicated region
    $region73: #{transformer_apply.5} parent=5 // pred_check
      %p1906 = pneg %p1905
    $region74: #{transformer_apply.5} parent=5 // pred_check_branch
      %1908 = sbr.rel (%p1906) target = $region76
    $region75: #{transformer_apply.5} parent=5 // pred_region
      %s1909 = ssub.s32 %s18, 2
      // Predicated region
      $region77: #{transformer_apply.5} parent=75 // pred_check
        %p1910 = pneg %p355
      $region78: #{transformer_apply.5} parent=75 // pred_check_branch
        %1912 = sbr.rel (%p1910) target = $region80
      $region79: #{transformer_apply.5} parent=75 // pred_region
        %s1913 = smul.u32 2, %s30
        %p1914 = scmp.lt.s32.totalorder %s29, 1
        %s1915 = scalar_select %p1914, %s29, 1
        %p1916 = scmp.lt.s32.totalorder %s1913, 1
        %s1917 = scalar_select %p1916, %s1913, 1
        %s1918 = smul.addr %s1915, 2
        %s1919 = sadd.s32 %s1917, %s1918
        %s1920 = smul.addr %s1919, 8
        %s1921 = scalar_lea.vmem %s12, %s1920
      $region80: #{transformer_apply.5} parent=75 // pred_fallthru
        _
    $region76: #{transformer_apply.5} parent=5 // pred_fallthru
      _
  $region6: #{transformer_apply.5} parent=0 // loop_footer
    %s22 = sadd.s32 1, %s18
  $region7: #{transformer_apply.5} parent=0 // loop_footer_branch
    %17 = sbr.rel target = $region3
  $region8: #{transformer_apply.5} parent=0 // loop_exit
    _

</llo_original>
